<compile_context>
chip_gen: v6e
topology: v6e:2x2x1
jax: 0.10.0
libtpu: 0.0.40
codegen_flags: <defaults>
</compile_context>

<pallas_src>
import math
import functools

import jax
import jax.numpy as jnp
from jax import lax
from jax.experimental import pallas as pl
from jax.experimental.pallas import tpu as pltpu


def _layer_norm(x, gamma, beta, eps=1e-5):
    mean = jnp.mean(x, axis=-1, keepdims=True)
    var = jnp.mean((x - mean) ** 2, axis=-1, keepdims=True)
    return (x - mean) * jax.lax.rsqrt(var + eps) * gamma + beta


def encoder_layer_kernel(
    # per-(batch, query-tile) inputs
    xq_ref,        # (1, TQ, D) f32    query rows (also the residual input)
    xkv_ref,       # (1, L,  D) mm     full sequence (feeds K/V projections)
    rel_ref,       # (1, TQ, L) int8   relation id, or -1 where masked
    # small relation-embedding tables
    relk_t_ref,    # (d_k, num_rel) mm    (MXU)
    relv_ref,      # (num_rel, d_k) f32   (VPU rank-1 updates)
    # dense weights / norms (weights in matmul_dtype, biases & norms in f32)
    wq_ref, bq_ref, wk_ref, bk_ref, wv_ref, bv_ref, wo_ref, bo_ref,
    ln1_g_ref, ln1_b_ref,
    w1_ref, b1_ref, w2_ref, b2_ref,
    ln2_g_ref, ln2_b_ref,
    # output
    out_ref,
    # persistent VMEM scratch: K / V for the whole sequence (one batch row)
    k_scr, v_scr,
    *, num_heads, d_k, num_rel, approx_recip):
    f32 = jnp.float32
    mm = wq_ref.dtype                       # matmul operand dtype (bf16 or f32)

    # ---- K/V projections: once per batch row (query-tile axis is arbitrary) --
    @pl.when(pl.program_id(1) == 0)
    def _():
        xkv = xkv_ref[0]                                       # (L, D), mm
        k_scr[...] = (jnp.dot(xkv, wk_ref[...], preferred_element_type=f32)
                      + bk_ref[...]).astype(k_scr.dtype)
        v_scr[...] = (jnp.dot(xkv, wv_ref[...], preferred_element_type=f32)
                      + bv_ref[...]).astype(v_scr.dtype)

    xq = xq_ref[0].astype(f32)                                 # (TQ, D)
    tq, d_model = xq.shape

    # relation ids + mask from the single int8 stream
    relm = rel_ref[0].astype(jnp.int32)                        # (TQ, L)
    bias = jnp.where(relm < 0, jnp.float32(-1e9), jnp.float32(0.0))
    rel_eq = [relm == r for r in range(num_rel)]               # bool masks

    # Q projection; fold 1/sqrt(d_k) into q (covers q·k and q·rel_k terms)
    q = jnp.dot(xq.astype(mm), wq_ref[...], preferred_element_type=f32) + bq_ref[...]
    q = q * jnp.float32(1.0 / math.sqrt(d_k))

    relv = relv_ref[...].astype(f32)                           # (num_rel, d_k)

    use_single_out_proj = (d_k % 128 == 0)
    if use_single_out_proj:
        o_heads = []
    else:
        attn = jnp.zeros((tq, d_model), f32)

    # static python loop over heads (num_heads is a compile-time constant)
    for h in range(num_heads):
        sl = slice(h * d_k, (h + 1) * d_k)
        qh = q[:, sl].astype(mm)                               # (TQ, d_k)
        kh = k_scr[:, sl]                                      # (L,  d_k) mm
        vh = v_scr[:, sl]                                      # (L,  d_k) mm

        # q kᵀ without an explicit transpose (contract last dims on the MXU)
        s = lax.dot_general(qh, kh, (((1,), (1,)), ((), ())),
                            preferred_element_type=f32)        # (TQ, L)

        # relation-aware score term: qr[i, r] = q_h[i] . rel_k_emb[r]
        qr = jnp.dot(qh, relk_t_ref[...], preferred_element_type=f32)  # (TQ, num_rel)
        s_rel = qr[:, 0:1]                                     # default: relation 0
        for r in range(1, num_rel):
            s_rel = jnp.where(rel_eq[r], qr[:, r:r + 1], s_rel)
        s = s + s_rel + bias

        # masked softmax with deferred normalization (f32 math)
        s = s - jnp.max(s, axis=-1, keepdims=True)
        e = jnp.exp(s)
        denom = jnp.sum(e, axis=-1, keepdims=True)

        # unnormalized e feeds the value matmul and the relation buckets
        o = jnp.dot(e.astype(mm), vh, preferred_element_type=f32)      # (TQ, d_k)
        for r in range(num_rel):                               # rank-1 VPU updates
            br = jnp.sum(jnp.where(rel_eq[r], e, 0.0), axis=-1, keepdims=True)
            o = o + br * relv[r:r + 1, :]
        o = o * pl.reciprocal(denom, approx=approx_recip)      # normalize (TQ,d_k)

        if use_single_out_proj:
            o_heads.append(o)
        else:
            # small-d_k path: accumulate straight into the output projection
            attn = attn + jnp.dot(o.astype(mm), wo_ref[sl, :],
                                  preferred_element_type=f32)

    if use_single_out_proj:
        # single D-deep contraction: full MXU cadence for the output projection
        attn = jnp.dot(jnp.concatenate(o_heads, axis=-1).astype(mm),
                       wo_ref[...], preferred_element_type=f32)
    attn = attn + bo_ref[...]

    # sublayer[0]: norm(dropout(attn) + x)   (dropout == identity in eval)
    x1 = _layer_norm(attn + xq, ln1_g_ref[...], ln1_b_ref[...])

    # feed forward: w2(relu(w1(x)))
    hdn = jnp.maximum(
        jnp.dot(x1.astype(mm), w1_ref[...], preferred_element_type=f32) + b1_ref[...],
        0.0)
    ff = jnp.dot(hdn.astype(mm), w2_ref[...], preferred_element_type=f32) + b2_ref[...]

    # sublayer[1]: norm(dropout(ff) + x1)
    out = _layer_norm(ff + x1, ln2_g_ref[...], ln2_b_ref[...])
    out_ref[0] = out.astype(out_ref.dtype)


def make_encoder_layer_params(key, d_model, num_heads, d_ff, num_relation_kinds):
    d_k = d_model // num_heads
    keys = jax.random.split(key, 8)

    def lin(k, fan_in, fan_out):
        kw, kb = jax.random.split(k)
        bound = 1.0 / math.sqrt(fan_in)
        w = jax.random.uniform(kw, (fan_in, fan_out), jnp.float32, -bound, bound)
        b = jax.random.uniform(kb, (1, fan_out), jnp.float32, -bound, bound)
        return w, b

    wq, bq = lin(keys[0], d_model, d_model)
    wk, bk = lin(keys[1], d_model, d_model)
    wv, bv = lin(keys[2], d_model, d_model)
    wo, bo = lin(keys[3], d_model, d_model)
    w1, b1 = lin(keys[4], d_model, d_ff)
    w2, b2 = lin(keys[5], d_ff, d_model)
    params = dict(
        wq=wq, bq=bq, wk=wk, bk=bk, wv=wv, bv=bv, wo=wo, bo=bo,
        ln1_g=jnp.ones((1, d_model), jnp.float32),
        ln1_b=jnp.zeros((1, d_model), jnp.float32),
        w1=w1, b1=b1, w2=w2, b2=b2,
        ln2_g=jnp.ones((1, d_model), jnp.float32),
        ln2_b=jnp.zeros((1, d_model), jnp.float32),
        rel_k_emb=jax.random.normal(keys[6], (num_relation_kinds, d_k), jnp.float32),
        rel_v_emb=jax.random.normal(keys[7], (num_relation_kinds, d_k), jnp.float32),
    )
    return params


def _const_spec(shape):
    nd = len(shape)
    return pl.BlockSpec(tuple(shape), lambda b, q, _nd=nd: (0,) * _nd)


def _pick_vmem_limit_bytes():
    # Generation-aware scoped-VMEM limit: ~80% of physical, capped at 100 MiB
    # (safe on v5e/v6e 128 MiB and v7x 64 MiB); conservative fallback.
    try:
        cap = int(pltpu.get_tpu_info().vmem_capacity_bytes)
        return min(int(cap * 0.80), 100 * 1024 * 1024)
    except Exception:
        return 56 * 1024 * 1024


def encoder_layer_forward(x, relation, mask, params, num_heads, *,
                          matmul_dtype=jnp.bfloat16, tq=None):
    B, L, D = x.shape
    d_k = D // num_heads
    num_rel = params["rel_k_emb"].shape[0]
    d_ff = params["w1"].shape[1]
    assert num_rel < 128, "relation ids + mask sentinel are packed into int8"

    # query-tile size: full L for small sequences, 128-row tiles otherwise
    if tq is None:
        tq = 128 if (L % 128 == 0) else L
    assert L % tq == 0
    n_qt = L // tq

    # relation id + mask merged into ONE int8 stream: id, or -1 where masked
    relm = jnp.where(mask == 0, -1, relation).astype(jnp.int8)

    # keys/values operand only ever feeds matmul_dtype MXU matmuls
    x_kv = x.astype(matmul_dtype)

    # tiny relation-embedding tables go straight into the kernel
    rel_k_t = params["rel_k_emb"].T.astype(matmul_dtype)      # (d_k, num_rel) MXU
    rel_v = params["rel_v_emb"].astype(jnp.float32)           # (num_rel, d_k) VPU

    weight_list = [
        rel_k_t, rel_v,
        params["wq"].astype(matmul_dtype), params["bq"],
        params["wk"].astype(matmul_dtype), params["bk"],
        params["wv"].astype(matmul_dtype), params["bv"],
        params["wo"].astype(matmul_dtype), params["bo"],
        params["ln1_g"], params["ln1_b"],
        params["w1"].astype(matmul_dtype), params["b1"],
        params["w2"].astype(matmul_dtype), params["b2"],
        params["ln2_g"], params["ln2_b"],
    ]

    in_specs = [
        pl.BlockSpec((1, tq, D), lambda b, q: (b, q, 0)),   # x (query rows, f32)
        pl.BlockSpec((1, L, D), lambda b, q: (b, 0, 0)),    # x (keys/values, mm)
        pl.BlockSpec((1, tq, L), lambda b, q: (b, q, 0)),   # int8 relation+mask
    ] + [_const_spec(w.shape) for w in weight_list]

    out_spec = pl.BlockSpec((1, tq, D), lambda b, q: (b, q, 0))

    # advisory cost estimate (K/V counted once per batch row)
    flops = (
        2 * B * L * D * D               # Q projection
        + 2 * B * L * D * D * 2         # K, V projections (once per batch row)
        + 2 * B * num_heads * L * L * d_k * 2        # q·kᵀ and e·v
        + 2 * B * num_heads * L * d_k * num_rel      # q·rel_kᵀ
        + 2 * B * L * D * D             # output projection
        + 2 * B * L * D * d_ff * 2      # FFN
    )
    transcendentals = B * num_heads * L * L          # exp in softmax
    bytes_accessed = (
        x.nbytes + x_kv.nbytes + relm.nbytes
        + sum(int(w.nbytes) for w in weight_list)
        + B * L * D * x.dtype.itemsize               # output
    )

    approx_recip = jnp.dtype(matmul_dtype) != jnp.dtype(jnp.float32)

    kernel = functools.partial(encoder_layer_kernel,
                               num_heads=num_heads, d_k=d_k, num_rel=num_rel,
                               approx_recip=bool(approx_recip))

    return pl.pallas_call(
        kernel,
        out_shape=jax.ShapeDtypeStruct((B, L, D), x.dtype),
        grid_spec=pltpu.PrefetchScalarGridSpec(
            num_scalar_prefetch=0,
            grid=(B, n_qt),
            in_specs=in_specs,
            out_specs=out_spec,
            scratch_shapes=[pltpu.VMEM((L, D), matmul_dtype),   # K (per batch)
                            pltpu.VMEM((L, D), matmul_dtype)],  # V (per batch)
        ),
        compiler_params=pltpu.CompilerParams(
            # query-tile axis must be 'arbitrary' so the K/V scratch legally
            # persists across q-steps; batch stays 'parallel' for megacore.
            dimension_semantics=("parallel", "arbitrary"),
            vmem_limit_bytes=_pick_vmem_limit_bytes()),
        cost_estimate=pl.CostEstimate(
            flops=int(flops),
            transcendentals=int(transcendentals),
            bytes_accessed=int(bytes_accessed)),
    )(x, x_kv, relm, *weight_list)


def encoder_layer_reference(x, relation, mask, params, num_heads):
    """Pure-JAX reference matching the PyTorch forward (eval mode)."""
    hp = jax.lax.Precision.HIGHEST
    B, L, D = x.shape
    d_k = D // num_heads
    rel_k = params["rel_k_emb"][relation]          # (B, L, L, d_k)
    rel_v = params["rel_v_emb"][relation]

    def linear(t, w, b):
        return jnp.dot(t, w, precision=hp) + b[0]

    q = linear(x, params["wq"], params["bq"]).reshape(B, L, num_heads, d_k).transpose(0, 2, 1, 3)
    k = linear(x, params["wk"], params["bk"]).reshape(B, L, num_heads, d_k).transpose(0, 2, 1, 3)
    v = linear(x, params["wv"], params["bv"]).reshape(B, L, num_heads, d_k).transpose(0, 2, 1, 3)

    s = jnp.einsum("bhid,bhjd->bhij", q, k, precision=hp)
    s = s + jnp.einsum("bhid,bijd->bhij", q, rel_k, precision=hp)
    s = s / math.sqrt(d_k)
    s = jnp.where(mask[:, None] == 0, -1e9, s)
    p = jax.nn.softmax(s, axis=-1)
    o = jnp.einsum("bhij,bhjd->bhid", p, v, precision=hp)
    o = o + jnp.einsum("bhij,bijd->bhid", p, rel_v, precision=hp)
    o = o.transpose(0, 2, 1, 3).reshape(B, L, D)
    attn = linear(o, params["wo"], params["bo"])

    x1 = _layer_norm(attn + x, params["ln1_g"][0], params["ln1_b"][0])
    hdn = jnp.maximum(linear(x1, params["w1"], params["b1"]), 0.0)
    ff = linear(hdn, params["w2"], params["b2"])
    return _layer_norm(ff + x1, params["ln2_g"][0], params["ln2_b"][0])


def _run_case(key, B, L, D, H, DFF, NREL, *, check_bf16):
    kx, kr, km, kp = jax.random.split(key, 4)
    x = jax.random.normal(kx, (B, L, D), dtype=jnp.float32)
    relation = jax.random.randint(kr, (B, L, L), 0, NREL, dtype=jnp.int32)
    mask = (jax.random.uniform(km, (B, L, L)) > 0.2).astype(jnp.int32)
    # keep at least the diagonal visible so no row is fully masked
    mask = jnp.maximum(mask, jnp.eye(L, dtype=jnp.int32)[None])

    params = make_encoder_layer_params(kp, D, H, DFF, NREL)
    ref = encoder_layer_reference(x, relation, mask, params, H)

    # 1) f32-operand path (exact reciprocal): tight correctness check.
    out_f32 = encoder_layer_forward(x, relation, mask, params, H,
                                    matmul_dtype=jnp.float32)
    out_f32 = jax.block_until_ready(out_f32)
    assert out_f32.shape == (B, L, D)
    assert bool(jnp.all(jnp.isfinite(out_f32)))
    if not jnp.allclose(out_f32, ref, atol=3e-3, rtol=3e-3):
        err = float(jnp.max(jnp.abs(out_f32 - ref)))
        raise AssertionError(f"f32-path mismatch (L={L}), max abs err {err}")

    # 2) default bf16 MXU-operand path (perf config): looser check.
    if check_bf16:
        out_bf = encoder_layer_forward(x, relation, mask, params, H)
        out_bf = jax.block_until_ready(out_bf)
        assert out_bf.shape == (B, L, D)
        assert bool(jnp.all(jnp.isfinite(out_bf)))
        if not jnp.allclose(out_bf, ref, atol=6e-2, rtol=6e-2):
            err = float(jnp.max(jnp.abs(out_bf - ref)))
            raise AssertionError(f"bf16-path mismatch (L={L}), max abs err {err}")


if __name__ == "__main__":
    key0 = jax.random.PRNGKey(0)
    # small shape (single query tile)
    _run_case(key0, 2, 8, 32, 4, 64, 5, check_bf16=True)
    # tiled shape: exercises the persistent-K/V scratch across query tiles
    _run_case(jax.random.fold_in(key0, 1), 1, 256, 32, 4, 64, 5, check_bf16=False)
    print("KERNEL_OK")
</pallas_src>

<mosaic_0001>
module attributes {stable_mosaic.version = 11 : i64} {
  func.func @encoder_layer_kernel(%arg0: i32, %arg1: i32, %arg2: memref<1x8x32xf32, #tpu.memory_space<vmem>>, %arg3: memref<1x8x32xf32, #tpu.memory_space<vmem>>, %arg4: memref<1x8x8xi8, #tpu.memory_space<vmem>>, %arg5: memref<8x5xf32, #tpu.memory_space<vmem>>, %arg6: memref<5x8xf32, #tpu.memory_space<vmem>>, %arg7: memref<32x32xf32, #tpu.memory_space<vmem>>, %arg8: memref<1x32xf32, #tpu.memory_space<vmem>>, %arg9: memref<32x32xf32, #tpu.memory_space<vmem>>, %arg10: memref<1x32xf32, #tpu.memory_space<vmem>>, %arg11: memref<32x32xf32, #tpu.memory_space<vmem>>, %arg12: memref<1x32xf32, #tpu.memory_space<vmem>>, %arg13: memref<32x32xf32, #tpu.memory_space<vmem>>, %arg14: memref<1x32xf32, #tpu.memory_space<vmem>>, %arg15: memref<1x32xf32, #tpu.memory_space<vmem>>, %arg16: memref<1x32xf32, #tpu.memory_space<vmem>>, %arg17: memref<32x64xf32, #tpu.memory_space<vmem>>, %arg18: memref<1x64xf32, #tpu.memory_space<vmem>>, %arg19: memref<64x32xf32, #tpu.memory_space<vmem>>, %arg20: memref<1x32xf32, #tpu.memory_space<vmem>>, %arg21: memref<1x32xf32, #tpu.memory_space<vmem>>, %arg22: memref<1x32xf32, #tpu.memory_space<vmem>>, %arg23: memref<1x8x32xf32, #tpu.memory_space<vmem>>, %arg24: memref<8x32xf32, #tpu.memory_space<vmem>>, %arg25: memref<8x32xf32, #tpu.memory_space<vmem>>) attributes {dimension_semantics = [#tpu.dimension_semantics<parallel>, #tpu.dimension_semantics<arbitrary>], iteration_bounds = array<i64: 2, 1>, scalar_prefetch = 0 : i64, scratch_operands = 2 : i64, tpu.core_type = #tpu.core_type<tc>, window_params = [{transform_indices = @transform_0, window_bounds = array<i64: 1, 8, 32>}, {transform_indices = @transform_1, window_bounds = array<i64: 1, 8, 32>}, {transform_indices = @transform_2, window_bounds = array<i64: 1, 8, 8>}, {pipeline_mode = #tpu.pipeline_mode<synchronous>, transform_indices = @transform_3, window_bounds = array<i64: 8, 5>}, {pipeline_mode = #tpu.pipeline_mode<synchronous>, transform_indices = @transform_4, window_bounds = array<i64: 5, 8>}, {pipeline_mode = #tpu.pipeline_mode<synchronous>, transform_indices = @transform_5, window_bounds = array<i64: 32, 32>}, {pipeline_mode = #tpu.pipeline_mode<synchronous>, transform_indices = @transform_6, window_bounds = array<i64: 1, 32>}, {pipeline_mode = #tpu.pipeline_mode<synchronous>, transform_indices = @transform_7, window_bounds = array<i64: 32, 32>}, {pipeline_mode = #tpu.pipeline_mode<synchronous>, transform_indices = @transform_8, window_bounds = array<i64: 1, 32>}, {pipeline_mode = #tpu.pipeline_mode<synchronous>, transform_indices = @transform_9, window_bounds = array<i64: 32, 32>}, {pipeline_mode = #tpu.pipeline_mode<synchronous>, transform_indices = @transform_10, window_bounds = array<i64: 1, 32>}, {pipeline_mode = #tpu.pipeline_mode<synchronous>, transform_indices = @transform_11, window_bounds = array<i64: 32, 32>}, {pipeline_mode = #tpu.pipeline_mode<synchronous>, transform_indices = @transform_12, window_bounds = array<i64: 1, 32>}, {pipeline_mode = #tpu.pipeline_mode<synchronous>, transform_indices = @transform_13, window_bounds = array<i64: 1, 32>}, {pipeline_mode = #tpu.pipeline_mode<synchronous>, transform_indices = @transform_14, window_bounds = array<i64: 1, 32>}, {pipeline_mode = #tpu.pipeline_mode<synchronous>, transform_indices = @transform_15, window_bounds = array<i64: 32, 64>}, {pipeline_mode = #tpu.pipeline_mode<synchronous>, transform_indices = @transform_16, window_bounds = array<i64: 1, 64>}, {pipeline_mode = #tpu.pipeline_mode<synchronous>, transform_indices = @transform_17, window_bounds = array<i64: 64, 32>}, {pipeline_mode = #tpu.pipeline_mode<synchronous>, transform_indices = @transform_18, window_bounds = array<i64: 1, 32>}, {pipeline_mode = #tpu.pipeline_mode<synchronous>, transform_indices = @transform_19, window_bounds = array<i64: 1, 32>}, {pipeline_mode = #tpu.pipeline_mode<synchronous>, transform_indices = @transform_20, window_bounds = array<i64: 1, 32>}, {transform_indices = @transform_21, window_bounds = array<i64: 1, 8, 32>}]} {
    %c0_i32 = arith.constant 0 : i32
    %0 = arith.cmpi eq, %arg1, %c0_i32 : i32
    %1 = arith.extui %0 : i1 to i32
    %c0_i32_0 = arith.constant 0 : i32
    %2 = arith.cmpi ne, %1, %c0_i32_0 : i32
    scf.if %2 {
      %c0_145 = arith.constant 0 : index
      %c0_146 = arith.constant 0 : index
      %c0_147 = arith.constant 0 : index
      %444 = vector.load %arg3[%c0_145, %c0_146, %c0_147] : memref<1x8x32xf32, #tpu.memory_space<vmem>>, vector<1x8x32xf32>
      %445 = vector.shape_cast %444 : vector<1x8x32xf32> to vector<8x32xf32>
      %c0_148 = arith.constant 0 : index
      %c0_149 = arith.constant 0 : index
      %446 = vector.load %arg9[%c0_148, %c0_149] : memref<32x32xf32, #tpu.memory_space<vmem>>, vector<32x32xf32>
      %cst_150 = arith.constant dense<0.000000e+00> : vector<8x32xf32>
      %447 = tpu.matmul %445, %446, %cst_150 {dimension_numbers = #tpu.dot_dimension_numbers<[1], [0], [0], [1], [0, 0, 1, 1], [], []>} : vector<8x32xf32>, vector<32x32xf32>, vector<8x32xf32> -> vector<8x32xf32>
      %c0_151 = arith.constant 0 : index
      %c0_152 = arith.constant 0 : index
      %448 = vector.load %arg10[%c0_151, %c0_152] : memref<1x32xf32, #tpu.memory_space<vmem>>, vector<1x32xf32>
      %449 = vector.broadcast %448 : vector<1x32xf32> to vector<8x32xf32>
      %450 = arith.addf %447, %449 : vector<8x32xf32>
      %c0_153 = arith.constant 0 : index
      %c0_154 = arith.constant 0 : index
      %451 = vector.load %arg24[%c0_153, %c0_154] : memref<8x32xf32, #tpu.memory_space<vmem>>, vector<8x32xf32>
      tpu.vector_store %arg24[%c0_153, %c0_154], %450 {strides = array<i32>} : memref<8x32xf32, #tpu.memory_space<vmem>>, vector<8x32xf32>,
      %c0_155 = arith.constant 0 : index
      %c0_156 = arith.constant 0 : index
      %452 = vector.load %arg11[%c0_155, %c0_156] : memref<32x32xf32, #tpu.memory_space<vmem>>, vector<32x32xf32>
      %cst_157 = arith.constant dense<0.000000e+00> : vector<8x32xf32>
      %453 = tpu.matmul %445, %452, %cst_157 {dimension_numbers = #tpu.dot_dimension_numbers<[1], [0], [0], [1], [0, 0, 1, 1], [], []>} : vector<8x32xf32>, vector<32x32xf32>, vector<8x32xf32> -> vector<8x32xf32>
      %c0_158 = arith.constant 0 : index
      %c0_159 = arith.constant 0 : index
      %454 = vector.load %arg12[%c0_158, %c0_159] : memref<1x32xf32, #tpu.memory_space<vmem>>, vector<1x32xf32>
      %455 = vector.broadcast %454 : vector<1x32xf32> to vector<8x32xf32>
      %456 = arith.addf %453, %455 : vector<8x32xf32>
      %c0_160 = arith.constant 0 : index
      %c0_161 = arith.constant 0 : index
      %457 = vector.load %arg25[%c0_160, %c0_161] : memref<8x32xf32, #tpu.memory_space<vmem>>, vector<8x32xf32>
      tpu.vector_store %arg25[%c0_160, %c0_161], %456 {strides = array<i32>} : memref<8x32xf32, #tpu.memory_space<vmem>>, vector<8x32xf32>,
    } else {
    }
    %c0 = arith.constant 0 : index
    %c0_1 = arith.constant 0 : index
    %c0_2 = arith.constant 0 : index
    %3 = vector.load %arg2[%c0, %c0_1, %c0_2] : memref<1x8x32xf32, #tpu.memory_space<vmem>>, vector<1x8x32xf32>
    %4 = vector.shape_cast %3 : vector<1x8x32xf32> to vector<8x32xf32>
    %c0_3 = arith.constant 0 : index
    %c0_4 = arith.constant 0 : index
    %c0_5 = arith.constant 0 : index
    %5 = vector.load %arg4[%c0_3, %c0_4, %c0_5] : memref<1x8x8xi8, #tpu.memory_space<vmem>>, vector<1x8x8xi8>
    %6 = vector.shape_cast %5 : vector<1x8x8xi8> to vector<8x8xi8>
    %7 = arith.extsi %6 : vector<8x8xi8> to vector<8x8xi32>
    %c0_i32_6 = arith.constant 0 : i32
    %8 = vector.broadcast %c0_i32_6 : i32 to vector<8x8xi32>
    %9 = arith.cmpi slt, %7, %8 : vector<8x8xi32>
    %cst = arith.constant -1.000000e+09 : f32
    %cst_7 = arith.constant 0.000000e+00 : f32
    %10 = vector.broadcast %cst : f32 to vector<8x8xf32>
    %11 = vector.broadcast %cst_7 : f32 to vector<8x8xf32>
    %12 = arith.select %9, %10, %11 : vector<8x8xi1>, vector<8x8xf32>
    %c0_i32_8 = arith.constant 0 : i32
    %13 = vector.broadcast %c0_i32_8 : i32 to vector<8x8xi32>
    %14 = arith.cmpi eq, %7, %13 : vector<8x8xi32>
    %c1_i32 = arith.constant 1 : i32
    %15 = vector.broadcast %c1_i32 : i32 to vector<8x8xi32>
    %16 = arith.cmpi eq, %7, %15 : vector<8x8xi32>
    %c2_i32 = arith.constant 2 : i32
    %17 = vector.broadcast %c2_i32 : i32 to vector<8x8xi32>
    %18 = arith.cmpi eq, %7, %17 : vector<8x8xi32>
    %c3_i32 = arith.constant 3 : i32
    %19 = vector.broadcast %c3_i32 : i32 to vector<8x8xi32>
    %20 = arith.cmpi eq, %7, %19 : vector<8x8xi32>
    %c4_i32 = arith.constant 4 : i32
    %21 = vector.broadcast %c4_i32 : i32 to vector<8x8xi32>
    %22 = arith.cmpi eq, %7, %21 : vector<8x8xi32>
    %c0_9 = arith.constant 0 : index
    %c0_10 = arith.constant 0 : index
    %23 = vector.load %arg7[%c0_9, %c0_10] : memref<32x32xf32, #tpu.memory_space<vmem>>, vector<32x32xf32>
    %cst_11 = arith.constant dense<0.000000e+00> : vector<8x32xf32>
    %24 = tpu.matmul %4, %23, %cst_11 {dimension_numbers = #tpu.dot_dimension_numbers<[1], [0], [0], [1], [0, 0, 1, 1], [], []>} : vector<8x32xf32>, vector<32x32xf32>, vector<8x32xf32> -> vector<8x32xf32>
    %c0_12 = arith.constant 0 : index
    %c0_13 = arith.constant 0 : index
    %25 = vector.load %arg8[%c0_12, %c0_13] : memref<1x32xf32, #tpu.memory_space<vmem>>, vector<1x32xf32>
    %26 = vector.broadcast %25 : vector<1x32xf32> to vector<8x32xf32>
    %27 = arith.addf %24, %26 : vector<8x32xf32>
    %cst_14 = arith.constant 0.353553385 : f32
    %28 = vector.broadcast %cst_14 : f32 to vector<8x32xf32>
    %29 = arith.mulf %27, %28 : vector<8x32xf32>
    %c0_15 = arith.constant 0 : index
    %c0_16 = arith.constant 0 : index
    %30 = vector.load %arg6[%c0_15, %c0_16] : memref<5x8xf32, #tpu.memory_space<vmem>>, vector<5x8xf32>
    %cst_17 = arith.constant 0.000000e+00 : f32
    %31 = vector.broadcast %cst_17 : f32 to vector<8x32xf32>
    %32 = vector.extract_strided_slice %29 {offsets = [0, 0], sizes = [8, 8], strides = [1, 1]} : vector<8x32xf32> to vector<8x8xf32>
    %c0_18 = arith.constant 0 : index
    %c0_19 = arith.constant 0 : index
    %33 = vector.load %arg24[%c0_18, %c0_19] : memref<8x32xf32, #tpu.memory_space<vmem>>, vector<8x8xf32>
    %c0_20 = arith.constant 0 : index
    %c0_21 = arith.constant 0 : index
    %34 = vector.load %arg25[%c0_20, %c0_21] : memref<8x32xf32, #tpu.memory_space<vmem>>, vector<8x8xf32>
    %cst_22 = arith.constant dense<0.000000e+00> : vector<8x8xf32>
    %35 = tpu.matmul %32, %33, %cst_22 {dimension_numbers = #tpu.dot_dimension_numbers<[1], [1], [0], [0], [0, 0, 1, 0], [], []>} : vector<8x8xf32>, vector<8x8xf32>, vector<8x8xf32> -> vector<8x8xf32>
    %c0_23 = arith.constant 0 : index
    %c0_24 = arith.constant 0 : index
    %36 = vector.load %arg5[%c0_23, %c0_24] : memref<8x5xf32, #tpu.memory_space<vmem>>, vector<8x5xf32>
    %cst_25 = arith.constant dense<0.000000e+00> : vector<8x5xf32>
    %37 = tpu.matmul %32, %36, %cst_25 {dimension_numbers = #tpu.dot_dimension_numbers<[1], [0], [0], [1], [0, 0, 1, 1], [], []>} : vector<8x8xf32>, vector<8x5xf32>, vector<8x5xf32> -> vector<8x5xf32>
    %38 = vector.extract_strided_slice %37 {offsets = [0, 0], sizes = [8, 1], strides = [1, 1]} : vector<8x5xf32> to vector<8x1xf32>
    %39 = vector.extract_strided_slice %37 {offsets = [0, 1], sizes = [8, 1], strides = [1, 1]} : vector<8x5xf32> to vector<8x1xf32>
    %40 = vector.shape_cast %39 : vector<8x1xf32> to vector<8x1xf32>
    %41 = vector.broadcast %40 : vector<8x1xf32> to vector<8x8xf32>
    %42 = vector.shape_cast %38 : vector<8x1xf32> to vector<8x1xf32>
    %43 = vector.broadcast %42 : vector<8x1xf32> to vector<8x8xf32>
    %44 = arith.select %16, %41, %43 : vector<8x8xi1>, vector<8x8xf32>
    %45 = vector.extract_strided_slice %37 {offsets = [0, 2], sizes = [8, 1], strides = [1, 1]} : vector<8x5xf32> to vector<8x1xf32>
    %46 = vector.shape_cast %45 : vector<8x1xf32> to vector<8x1xf32>
    %47 = vector.broadcast %46 : vector<8x1xf32> to vector<8x8xf32>
    %48 = arith.select %18, %47, %44 : vector<8x8xi1>, vector<8x8xf32>
    %49 = vector.extract_strided_slice %37 {offsets = [0, 3], sizes = [8, 1], strides = [1, 1]} : vector<8x5xf32> to vector<8x1xf32>
    %50 = vector.shape_cast %49 : vector<8x1xf32> to vector<8x1xf32>
    %51 = vector.broadcast %50 : vector<8x1xf32> to vector<8x8xf32>
    %52 = arith.select %20, %51, %48 : vector<8x8xi1>, vector<8x8xf32>
    %53 = vector.extract_strided_slice %37 {offsets = [0, 4], sizes = [8, 1], strides = [1, 1]} : vector<8x5xf32> to vector<8x1xf32>
    %54 = vector.shape_cast %53 : vector<8x1xf32> to vector<8x1xf32>
    %55 = vector.broadcast %54 : vector<8x1xf32> to vector<8x8xf32>
    %56 = arith.select %22, %55, %52 : vector<8x8xi1>, vector<8x8xf32>
    %57 = arith.addf %35, %56 : vector<8x8xf32>
    %58 = arith.addf %57, %12 : vector<8x8xf32>
    %cst_26 = arith.constant dense<0xFF800000> : vector<8xf32>
    %59 = vector.multi_reduction <maximumf>, %58, %cst_26 [1] : vector<8x8xf32> to vector<8xf32>
    %60 = vector.shape_cast %59 : vector<8xf32> to vector<8x1xf32>
    %61 = vector.broadcast %60 : vector<8x1xf32> to vector<8x8xf32>
    %62 = arith.subf %58, %61 : vector<8x8xf32>
    %63 = math.exp %62 : vector<8x8xf32>
    %cst_27 = arith.constant dense<0.000000e+00> : vector<8xf32>
    %64 = vector.multi_reduction <add>, %63, %cst_27 [1] : vector<8x8xf32> to vector<8xf32>
    %65 = vector.shape_cast %64 : vector<8xf32> to vector<8x1xf32>
    %cst_28 = arith.constant dense<0.000000e+00> : vector<8x8xf32>
    %66 = tpu.matmul %63, %34, %cst_28 {dimension_numbers = #tpu.dot_dimension_numbers<[1], [0], [0], [1], [0, 0, 1, 1], [], []>} : vector<8x8xf32>, vector<8x8xf32>, vector<8x8xf32> -> vector<8x8xf32>
    %cst_29 = arith.constant 0.000000e+00 : f32
    %67 = vector.broadcast %cst_29 : f32 to vector<8x8xf32>
    %68 = arith.select %14, %63, %67 : vector<8x8xi1>, vector<8x8xf32>
    %cst_30 = arith.constant dense<0.000000e+00> : vector<8xf32>
    %69 = vector.multi_reduction <add>, %68, %cst_30 [1] : vector<8x8xf32> to vector<8xf32>
    %70 = vector.shape_cast %69 : vector<8xf32> to vector<8x1xf32>
    %71 = vector.extract_strided_slice %30 {offsets = [0, 0], sizes = [1, 8], strides = [1, 1]} : vector<5x8xf32> to vector<1x8xf32>
    %72 = vector.broadcast %70 : vector<8x1xf32> to vector<8x8xf32>
    %73 = vector.broadcast %71 : vector<1x8xf32> to vector<8x8xf32>
    %74 = arith.mulf %72, %73 : vector<8x8xf32>
    %75 = arith.addf %66, %74 : vector<8x8xf32>
    %cst_31 = arith.constant 0.000000e+00 : f32
    %76 = vector.broadcast %cst_31 : f32 to vector<8x8xf32>
    %77 = arith.select %16, %63, %76 : vector<8x8xi1>, vector<8x8xf32>
    %cst_32 = arith.constant dense<0.000000e+00> : vector<8xf32>
    %78 = vector.multi_reduction <add>, %77, %cst_32 [1] : vector<8x8xf32> to vector<8xf32>
    %79 = vector.shape_cast %78 : vector<8xf32> to vector<8x1xf32>
    %80 = vector.extract_strided_slice %30 {offsets = [1, 0], sizes = [1, 8], strides = [1, 1]} : vector<5x8xf32> to vector<1x8xf32>
    %81 = vector.broadcast %79 : vector<8x1xf32> to vector<8x8xf32>
    %82 = vector.broadcast %80 : vector<1x8xf32> to vector<8x8xf32>
    %83 = arith.mulf %81, %82 : vector<8x8xf32>
    %84 = arith.addf %75, %83 : vector<8x8xf32>
    %cst_33 = arith.constant 0.000000e+00 : f32
    %85 = vector.broadcast %cst_33 : f32 to vector<8x8xf32>
    %86 = arith.select %18, %63, %85 : vector<8x8xi1>, vector<8x8xf32>
    %cst_34 = arith.constant dense<0.000000e+00> : vector<8xf32>
    %87 = vector.multi_reduction <add>, %86, %cst_34 [1] : vector<8x8xf32> to vector<8xf32>
    %88 = vector.shape_cast %87 : vector<8xf32> to vector<8x1xf32>
    %89 = vector.extract_strided_slice %30 {offsets = [2, 0], sizes = [1, 8], strides = [1, 1]} : vector<5x8xf32> to vector<1x8xf32>
    %90 = vector.broadcast %88 : vector<8x1xf32> to vector<8x8xf32>
    %91 = vector.broadcast %89 : vector<1x8xf32> to vector<8x8xf32>
    %92 = arith.mulf %90, %91 : vector<8x8xf32>
    %93 = arith.addf %84, %92 : vector<8x8xf32>
    %cst_35 = arith.constant 0.000000e+00 : f32
    %94 = vector.broadcast %cst_35 : f32 to vector<8x8xf32>
    %95 = arith.select %20, %63, %94 : vector<8x8xi1>, vector<8x8xf32>
    %cst_36 = arith.constant dense<0.000000e+00> : vector<8xf32>
    %96 = vector.multi_reduction <add>, %95, %cst_36 [1] : vector<8x8xf32> to vector<8xf32>
    %97 = vector.shape_cast %96 : vector<8xf32> to vector<8x1xf32>
    %98 = vector.extract_strided_slice %30 {offsets = [3, 0], sizes = [1, 8], strides = [1, 1]} : vector<5x8xf32> to vector<1x8xf32>
    %99 = vector.broadcast %97 : vector<8x1xf32> to vector<8x8xf32>
    %100 = vector.broadcast %98 : vector<1x8xf32> to vector<8x8xf32>
    %101 = arith.mulf %99, %100 : vector<8x8xf32>
    %102 = arith.addf %93, %101 : vector<8x8xf32>
    %cst_37 = arith.constant 0.000000e+00 : f32
    %103 = vector.broadcast %cst_37 : f32 to vector<8x8xf32>
    %104 = arith.select %22, %63, %103 : vector<8x8xi1>, vector<8x8xf32>
    %cst_38 = arith.constant dense<0.000000e+00> : vector<8xf32>
    %105 = vector.multi_reduction <add>, %104, %cst_38 [1] : vector<8x8xf32> to vector<8xf32>
    %106 = vector.shape_cast %105 : vector<8xf32> to vector<8x1xf32>
    %107 = vector.extract_strided_slice %30 {offsets = [4, 0], sizes = [1, 8], strides = [1, 1]} : vector<5x8xf32> to vector<1x8xf32>
    %108 = vector.broadcast %106 : vector<8x1xf32> to vector<8x8xf32>
    %109 = vector.broadcast %107 : vector<1x8xf32> to vector<8x8xf32>
    %110 = arith.mulf %108, %109 : vector<8x8xf32>
    %111 = arith.addf %102, %110 : vector<8x8xf32>
    %112 = tpu.reciprocal %65 : vector<8x1xf32> -> vector<8x1xf32>
    %113 = vector.broadcast %112 : vector<8x1xf32> to vector<8x8xf32>
    %114 = arith.mulf %111, %113 : vector<8x8xf32>
    %c0_39 = arith.constant 0 : index
    %c0_40 = arith.constant 0 : index
    %115 = vector.load %arg13[%c0_39, %c0_40] : memref<32x32xf32, #tpu.memory_space<vmem>>, vector<8x32xf32>
    %cst_41 = arith.constant dense<0.000000e+00> : vector<8x32xf32>
    %116 = tpu.matmul %114, %115, %cst_41 {dimension_numbers = #tpu.dot_dimension_numbers<[1], [0], [0], [1], [0, 0, 1, 1], [], []>} : vector<8x8xf32>, vector<8x32xf32>, vector<8x32xf32> -> vector<8x32xf32>
    %117 = arith.addf %31, %116 : vector<8x32xf32>
    %118 = vector.extract_strided_slice %29 {offsets = [0, 8], sizes = [8, 8], strides = [1, 1]} : vector<8x32xf32> to vector<8x8xf32>
    %c0_42 = arith.constant 0 : index
    %c8 = arith.constant 8 : index
    %119 = vector.load %arg24[%c0_42, %c8] : memref<8x32xf32, #tpu.memory_space<vmem>>, vector<8x8xf32>
    %c0_43 = arith.constant 0 : index
    %c8_44 = arith.constant 8 : index
    %120 = vector.load %arg25[%c0_43, %c8_44] : memref<8x32xf32, #tpu.memory_space<vmem>>, vector<8x8xf32>
    %cst_45 = arith.constant dense<0.000000e+00> : vector<8x8xf32>
    %121 = tpu.matmul %118, %119, %cst_45 {dimension_numbers = #tpu.dot_dimension_numbers<[1], [1], [0], [0], [0, 0, 1, 0], [], []>} : vector<8x8xf32>, vector<8x8xf32>, vector<8x8xf32> -> vector<8x8xf32>
    %c0_46 = arith.constant 0 : index
    %c0_47 = arith.constant 0 : index
    %122 = vector.load %arg5[%c0_46, %c0_47] : memref<8x5xf32, #tpu.memory_space<vmem>>, vector<8x5xf32>
    %cst_48 = arith.constant dense<0.000000e+00> : vector<8x5xf32>
    %123 = tpu.matmul %118, %122, %cst_48 {dimension_numbers = #tpu.dot_dimension_numbers<[1], [0], [0], [1], [0, 0, 1, 1], [], []>} : vector<8x8xf32>, vector<8x5xf32>, vector<8x5xf32> -> vector<8x5xf32>
    %124 = vector.extract_strided_slice %123 {offsets = [0, 0], sizes = [8, 1], strides = [1, 1]} : vector<8x5xf32> to vector<8x1xf32>
    %125 = vector.extract_strided_slice %123 {offsets = [0, 1], sizes = [8, 1], strides = [1, 1]} : vector<8x5xf32> to vector<8x1xf32>
    %126 = vector.shape_cast %125 : vector<8x1xf32> to vector<8x1xf32>
    %127 = vector.broadcast %126 : vector<8x1xf32> to vector<8x8xf32>
    %128 = vector.shape_cast %124 : vector<8x1xf32> to vector<8x1xf32>
    %129 = vector.broadcast %128 : vector<8x1xf32> to vector<8x8xf32>
    %130 = arith.select %16, %127, %129 : vector<8x8xi1>, vector<8x8xf32>
    %131 = vector.extract_strided_slice %123 {offsets = [0, 2], sizes = [8, 1], strides = [1, 1]} : vector<8x5xf32> to vector<8x1xf32>
    %132 = vector.shape_cast %131 : vector<8x1xf32> to vector<8x1xf32>
    %133 = vector.broadcast %132 : vector<8x1xf32> to vector<8x8xf32>
    %134 = arith.select %18, %133, %130 : vector<8x8xi1>, vector<8x8xf32>
    %135 = vector.extract_strided_slice %123 {offsets = [0, 3], sizes = [8, 1], strides = [1, 1]} : vector<8x5xf32> to vector<8x1xf32>
    %136 = vector.shape_cast %135 : vector<8x1xf32> to vector<8x1xf32>
    %137 = vector.broadcast %136 : vector<8x1xf32> to vector<8x8xf32>
    %138 = arith.select %20, %137, %134 : vector<8x8xi1>, vector<8x8xf32>
    %139 = vector.extract_strided_slice %123 {offsets = [0, 4], sizes = [8, 1], strides = [1, 1]} : vector<8x5xf32> to vector<8x1xf32>
    %140 = vector.shape_cast %139 : vector<8x1xf32> to vector<8x1xf32>
    %141 = vector.broadcast %140 : vector<8x1xf32> to vector<8x8xf32>
    %142 = arith.select %22, %141, %138 : vector<8x8xi1>, vector<8x8xf32>
    %143 = arith.addf %121, %142 : vector<8x8xf32>
    %144 = arith.addf %143, %12 : vector<8x8xf32>
    %cst_49 = arith.constant dense<0xFF800000> : vector<8xf32>
    %145 = vector.multi_reduction <maximumf>, %144, %cst_49 [1] : vector<8x8xf32> to vector<8xf32>
    %146 = vector.shape_cast %145 : vector<8xf32> to vector<8x1xf32>
    %147 = vector.broadcast %146 : vector<8x1xf32> to vector<8x8xf32>
    %148 = arith.subf %144, %147 : vector<8x8xf32>
    %149 = math.exp %148 : vector<8x8xf32>
    %cst_50 = arith.constant dense<0.000000e+00> : vector<8xf32>
    %150 = vector.multi_reduction <add>, %149, %cst_50 [1] : vector<8x8xf32> to vector<8xf32>
    %151 = vector.shape_cast %150 : vector<8xf32> to vector<8x1xf32>
    %cst_51 = arith.constant dense<0.000000e+00> : vector<8x8xf32>
    %152 = tpu.matmul %149, %120, %cst_51 {dimension_numbers = #tpu.dot_dimension_numbers<[1], [0], [0], [1], [0, 0, 1, 1], [], []>} : vector<8x8xf32>, vector<8x8xf32>, vector<8x8xf32> -> vector<8x8xf32>
    %cst_52 = arith.constant 0.000000e+00 : f32
    %153 = vector.broadcast %cst_52 : f32 to vector<8x8xf32>
    %154 = arith.select %14, %149, %153 : vector<8x8xi1>, vector<8x8xf32>
    %cst_53 = arith.constant dense<0.000000e+00> : vector<8xf32>
    %155 = vector.multi_reduction <add>, %154, %cst_53 [1] : vector<8x8xf32> to vector<8xf32>
    %156 = vector.shape_cast %155 : vector<8xf32> to vector<8x1xf32>
    %157 = vector.extract_strided_slice %30 {offsets = [0, 0], sizes = [1, 8], strides = [1, 1]} : vector<5x8xf32> to vector<1x8xf32>
    %158 = vector.broadcast %156 : vector<8x1xf32> to vector<8x8xf32>
    %159 = vector.broadcast %157 : vector<1x8xf32> to vector<8x8xf32>
    %160 = arith.mulf %158, %159 : vector<8x8xf32>
    %161 = arith.addf %152, %160 : vector<8x8xf32>
    %cst_54 = arith.constant 0.000000e+00 : f32
    %162 = vector.broadcast %cst_54 : f32 to vector<8x8xf32>
    %163 = arith.select %16, %149, %162 : vector<8x8xi1>, vector<8x8xf32>
    %cst_55 = arith.constant dense<0.000000e+00> : vector<8xf32>
    %164 = vector.multi_reduction <add>, %163, %cst_55 [1] : vector<8x8xf32> to vector<8xf32>
    %165 = vector.shape_cast %164 : vector<8xf32> to vector<8x1xf32>
    %166 = vector.extract_strided_slice %30 {offsets = [1, 0], sizes = [1, 8], strides = [1, 1]} : vector<5x8xf32> to vector<1x8xf32>
    %167 = vector.broadcast %165 : vector<8x1xf32> to vector<8x8xf32>
    %168 = vector.broadcast %166 : vector<1x8xf32> to vector<8x8xf32>
    %169 = arith.mulf %167, %168 : vector<8x8xf32>
    %170 = arith.addf %161, %169 : vector<8x8xf32>
    %cst_56 = arith.constant 0.000000e+00 : f32
    %171 = vector.broadcast %cst_56 : f32 to vector<8x8xf32>
    %172 = arith.select %18, %149, %171 : vector<8x8xi1>, vector<8x8xf32>
    %cst_57 = arith.constant dense<0.000000e+00> : vector<8xf32>
    %173 = vector.multi_reduction <add>, %172, %cst_57 [1] : vector<8x8xf32> to vector<8xf32>
    %174 = vector.shape_cast %173 : vector<8xf32> to vector<8x1xf32>
    %175 = vector.extract_strided_slice %30 {offsets = [2, 0], sizes = [1, 8], strides = [1, 1]} : vector<5x8xf32> to vector<1x8xf32>
    %176 = vector.broadcast %174 : vector<8x1xf32> to vector<8x8xf32>
    %177 = vector.broadcast %175 : vector<1x8xf32> to vector<8x8xf32>
    %178 = arith.mulf %176, %177 : vector<8x8xf32>
    %179 = arith.addf %170, %178 : vector<8x8xf32>
    %cst_58 = arith.constant 0.000000e+00 : f32
    %180 = vector.broadcast %cst_58 : f32 to vector<8x8xf32>
    %181 = arith.select %20, %149, %180 : vector<8x8xi1>, vector<8x8xf32>
    %cst_59 = arith.constant dense<0.000000e+00> : vector<8xf32>
    %182 = vector.multi_reduction <add>, %181, %cst_59 [1] : vector<8x8xf32> to vector<8xf32>
    %183 = vector.shape_cast %182 : vector<8xf32> to vector<8x1xf32>
    %184 = vector.extract_strided_slice %30 {offsets = [3, 0], sizes = [1, 8], strides = [1, 1]} : vector<5x8xf32> to vector<1x8xf32>
    %185 = vector.broadcast %183 : vector<8x1xf32> to vector<8x8xf32>
    %186 = vector.broadcast %184 : vector<1x8xf32> to vector<8x8xf32>
    %187 = arith.mulf %185, %186 : vector<8x8xf32>
    %188 = arith.addf %179, %187 : vector<8x8xf32>
    %cst_60 = arith.constant 0.000000e+00 : f32
    %189 = vector.broadcast %cst_60 : f32 to vector<8x8xf32>
    %190 = arith.select %22, %149, %189 : vector<8x8xi1>, vector<8x8xf32>
    %cst_61 = arith.constant dense<0.000000e+00> : vector<8xf32>
    %191 = vector.multi_reduction <add>, %190, %cst_61 [1] : vector<8x8xf32> to vector<8xf32>
    %192 = vector.shape_cast %191 : vector<8xf32> to vector<8x1xf32>
    %193 = vector.extract_strided_slice %30 {offsets = [4, 0], sizes = [1, 8], strides = [1, 1]} : vector<5x8xf32> to vector<1x8xf32>
    %194 = vector.broadcast %192 : vector<8x1xf32> to vector<8x8xf32>
    %195 = vector.broadcast %193 : vector<1x8xf32> to vector<8x8xf32>
    %196 = arith.mulf %194, %195 : vector<8x8xf32>
    %197 = arith.addf %188, %196 : vector<8x8xf32>
    %198 = tpu.reciprocal %151 : vector<8x1xf32> -> vector<8x1xf32>
    %199 = vector.broadcast %198 : vector<8x1xf32> to vector<8x8xf32>
    %200 = arith.mulf %197, %199 : vector<8x8xf32>
    %c8_62 = arith.constant 8 : index
    %c0_63 = arith.constant 0 : index
    %201 = vector.load %arg13[%c8_62, %c0_63] : memref<32x32xf32, #tpu.memory_space<vmem>>, vector<8x32xf32>
    %cst_64 = arith.constant dense<0.000000e+00> : vector<8x32xf32>
    %202 = tpu.matmul %200, %201, %cst_64 {dimension_numbers = #tpu.dot_dimension_numbers<[1], [0], [0], [1], [0, 0, 1, 1], [], []>} : vector<8x8xf32>, vector<8x32xf32>, vector<8x32xf32> -> vector<8x32xf32>
    %203 = arith.addf %117, %202 : vector<8x32xf32>
    %204 = vector.extract_strided_slice %29 {offsets = [0, 16], sizes = [8, 8], strides = [1, 1]} : vector<8x32xf32> to vector<8x8xf32>
    %c0_65 = arith.constant 0 : index
    %c16 = arith.constant 16 : index
    %205 = vector.load %arg24[%c0_65, %c16] : memref<8x32xf32, #tpu.memory_space<vmem>>, vector<8x8xf32>
    %c0_66 = arith.constant 0 : index
    %c16_67 = arith.constant 16 : index
    %206 = vector.load %arg25[%c0_66, %c16_67] : memref<8x32xf32, #tpu.memory_space<vmem>>, vector<8x8xf32>
    %cst_68 = arith.constant dense<0.000000e+00> : vector<8x8xf32>
    %207 = tpu.matmul %204, %205, %cst_68 {dimension_numbers = #tpu.dot_dimension_numbers<[1], [1], [0], [0], [0, 0, 1, 0], [], []>} : vector<8x8xf32>, vector<8x8xf32>, vector<8x8xf32> -> vector<8x8xf32>
    %c0_69 = arith.constant 0 : index
    %c0_70 = arith.constant 0 : index
    %208 = vector.load %arg5[%c0_69, %c0_70] : memref<8x5xf32, #tpu.memory_space<vmem>>, vector<8x5xf32>
    %cst_71 = arith.constant dense<0.000000e+00> : vector<8x5xf32>
    %209 = tpu.matmul %204, %208, %cst_71 {dimension_numbers = #tpu.dot_dimension_numbers<[1], [0], [0], [1], [0, 0, 1, 1], [], []>} : vector<8x8xf32>, vector<8x5xf32>, vector<8x5xf32> -> vector<8x5xf32>
    %210 = vector.extract_strided_slice %209 {offsets = [0, 0], sizes = [8, 1], strides = [1, 1]} : vector<8x5xf32> to vector<8x1xf32>
    %211 = vector.extract_strided_slice %209 {offsets = [0, 1], sizes = [8, 1], strides = [1, 1]} : vector<8x5xf32> to vector<8x1xf32>
    %212 = vector.shape_cast %211 : vector<8x1xf32> to vector<8x1xf32>
    %213 = vector.broadcast %212 : vector<8x1xf32> to vector<8x8xf32>
    %214 = vector.shape_cast %210 : vector<8x1xf32> to vector<8x1xf32>
    %215 = vector.broadcast %214 : vector<8x1xf32> to vector<8x8xf32>
    %216 = arith.select %16, %213, %215 : vector<8x8xi1>, vector<8x8xf32>
    %217 = vector.extract_strided_slice %209 {offsets = [0, 2], sizes = [8, 1], strides = [1, 1]} : vector<8x5xf32> to vector<8x1xf32>
    %218 = vector.shape_cast %217 : vector<8x1xf32> to vector<8x1xf32>
    %219 = vector.broadcast %218 : vector<8x1xf32> to vector<8x8xf32>
    %220 = arith.select %18, %219, %216 : vector<8x8xi1>, vector<8x8xf32>
    %221 = vector.extract_strided_slice %209 {offsets = [0, 3], sizes = [8, 1], strides = [1, 1]} : vector<8x5xf32> to vector<8x1xf32>
    %222 = vector.shape_cast %221 : vector<8x1xf32> to vector<8x1xf32>
    %223 = vector.broadcast %222 : vector<8x1xf32> to vector<8x8xf32>
    %224 = arith.select %20, %223, %220 : vector<8x8xi1>, vector<8x8xf32>
    %225 = vector.extract_strided_slice %209 {offsets = [0, 4], sizes = [8, 1], strides = [1, 1]} : vector<8x5xf32> to vector<8x1xf32>
    %226 = vector.shape_cast %225 : vector<8x1xf32> to vector<8x1xf32>
    %227 = vector.broadcast %226 : vector<8x1xf32> to vector<8x8xf32>
    %228 = arith.select %22, %227, %224 : vector<8x8xi1>, vector<8x8xf32>
    %229 = arith.addf %207, %228 : vector<8x8xf32>
    %230 = arith.addf %229, %12 : vector<8x8xf32>
    %cst_72 = arith.constant dense<0xFF800000> : vector<8xf32>
    %231 = vector.multi_reduction <maximumf>, %230, %cst_72 [1] : vector<8x8xf32> to vector<8xf32>
    %232 = vector.shape_cast %231 : vector<8xf32> to vector<8x1xf32>
    %233 = vector.broadcast %232 : vector<8x1xf32> to vector<8x8xf32>
    %234 = arith.subf %230, %233 : vector<8x8xf32>
    %235 = math.exp %234 : vector<8x8xf32>
    %cst_73 = arith.constant dense<0.000000e+00> : vector<8xf32>
    %236 = vector.multi_reduction <add>, %235, %cst_73 [1] : vector<8x8xf32> to vector<8xf32>
    %237 = vector.shape_cast %236 : vector<8xf32> to vector<8x1xf32>
    %cst_74 = arith.constant dense<0.000000e+00> : vector<8x8xf32>
    %238 = tpu.matmul %235, %206, %cst_74 {dimension_numbers = #tpu.dot_dimension_numbers<[1], [0], [0], [1], [0, 0, 1, 1], [], []>} : vector<8x8xf32>, vector<8x8xf32>, vector<8x8xf32> -> vector<8x8xf32>
    %cst_75 = arith.constant 0.000000e+00 : f32
    %239 = vector.broadcast %cst_75 : f32 to vector<8x8xf32>
    %240 = arith.select %14, %235, %239 : vector<8x8xi1>, vector<8x8xf32>
    %cst_76 = arith.constant dense<0.000000e+00> : vector<8xf32>
    %241 = vector.multi_reduction <add>, %240, %cst_76 [1] : vector<8x8xf32> to vector<8xf32>
    %242 = vector.shape_cast %241 : vector<8xf32> to vector<8x1xf32>
    %243 = vector.extract_strided_slice %30 {offsets = [0, 0], sizes = [1, 8], strides = [1, 1]} : vector<5x8xf32> to vector<1x8xf32>
    %244 = vector.broadcast %242 : vector<8x1xf32> to vector<8x8xf32>
    %245 = vector.broadcast %243 : vector<1x8xf32> to vector<8x8xf32>
    %246 = arith.mulf %244, %245 : vector<8x8xf32>
    %247 = arith.addf %238, %246 : vector<8x8xf32>
    %cst_77 = arith.constant 0.000000e+00 : f32
    %248 = vector.broadcast %cst_77 : f32 to vector<8x8xf32>
    %249 = arith.select %16, %235, %248 : vector<8x8xi1>, vector<8x8xf32>
    %cst_78 = arith.constant dense<0.000000e+00> : vector<8xf32>
    %250 = vector.multi_reduction <add>, %249, %cst_78 [1] : vector<8x8xf32> to vector<8xf32>
    %251 = vector.shape_cast %250 : vector<8xf32> to vector<8x1xf32>
    %252 = vector.extract_strided_slice %30 {offsets = [1, 0], sizes = [1, 8], strides = [1, 1]} : vector<5x8xf32> to vector<1x8xf32>
    %253 = vector.broadcast %251 : vector<8x1xf32> to vector<8x8xf32>
    %254 = vector.broadcast %252 : vector<1x8xf32> to vector<8x8xf32>
    %255 = arith.mulf %253, %254 : vector<8x8xf32>
    %256 = arith.addf %247, %255 : vector<8x8xf32>
    %cst_79 = arith.constant 0.000000e+00 : f32
    %257 = vector.broadcast %cst_79 : f32 to vector<8x8xf32>
    %258 = arith.select %18, %235, %257 : vector<8x8xi1>, vector<8x8xf32>
    %cst_80 = arith.constant dense<0.000000e+00> : vector<8xf32>
    %259 = vector.multi_reduction <add>, %258, %cst_80 [1] : vector<8x8xf32> to vector<8xf32>
    %260 = vector.shape_cast %259 : vector<8xf32> to vector<8x1xf32>
    %261 = vector.extract_strided_slice %30 {offsets = [2, 0], sizes = [1, 8], strides = [1, 1]} : vector<5x8xf32> to vector<1x8xf32>
    %262 = vector.broadcast %260 : vector<8x1xf32> to vector<8x8xf32>
    %263 = vector.broadcast %261 : vector<1x8xf32> to vector<8x8xf32>
    %264 = arith.mulf %262, %263 : vector<8x8xf32>
    %265 = arith.addf %256, %264 : vector<8x8xf32>
    %cst_81 = arith.constant 0.000000e+00 : f32
    %266 = vector.broadcast %cst_81 : f32 to vector<8x8xf32>
    %267 = arith.select %20, %235, %266 : vector<8x8xi1>, vector<8x8xf32>
    %cst_82 = arith.constant dense<0.000000e+00> : vector<8xf32>
    %268 = vector.multi_reduction <add>, %267, %cst_82 [1] : vector<8x8xf32> to vector<8xf32>
    %269 = vector.shape_cast %268 : vector<8xf32> to vector<8x1xf32>
    %270 = vector.extract_strided_slice %30 {offsets = [3, 0], sizes = [1, 8], strides = [1, 1]} : vector<5x8xf32> to vector<1x8xf32>
    %271 = vector.broadcast %269 : vector<8x1xf32> to vector<8x8xf32>
    %272 = vector.broadcast %270 : vector<1x8xf32> to vector<8x8xf32>
    %273 = arith.mulf %271, %272 : vector<8x8xf32>
    %274 = arith.addf %265, %273 : vector<8x8xf32>
    %cst_83 = arith.constant 0.000000e+00 : f32
    %275 = vector.broadcast %cst_83 : f32 to vector<8x8xf32>
    %276 = arith.select %22, %235, %275 : vector<8x8xi1>, vector<8x8xf32>
    %cst_84 = arith.constant dense<0.000000e+00> : vector<8xf32>
    %277 = vector.multi_reduction <add>, %276, %cst_84 [1] : vector<8x8xf32> to vector<8xf32>
    %278 = vector.shape_cast %277 : vector<8xf32> to vector<8x1xf32>
    %279 = vector.extract_strided_slice %30 {offsets = [4, 0], sizes = [1, 8], strides = [1, 1]} : vector<5x8xf32> to vector<1x8xf32>
    %280 = vector.broadcast %278 : vector<8x1xf32> to vector<8x8xf32>
    %281 = vector.broadcast %279 : vector<1x8xf32> to vector<8x8xf32>
    %282 = arith.mulf %280, %281 : vector<8x8xf32>
    %283 = arith.addf %274, %282 : vector<8x8xf32>
    %284 = tpu.reciprocal %237 : vector<8x1xf32> -> vector<8x1xf32>
    %285 = vector.broadcast %284 : vector<8x1xf32> to vector<8x8xf32>
    %286 = arith.mulf %283, %285 : vector<8x8xf32>
    %c16_85 = arith.constant 16 : index
    %c0_86 = arith.constant 0 : index
    %287 = vector.load %arg13[%c16_85, %c0_86] : memref<32x32xf32, #tpu.memory_space<vmem>>, vector<8x32xf32>
    %cst_87 = arith.constant dense<0.000000e+00> : vector<8x32xf32>
    %288 = tpu.matmul %286, %287, %cst_87 {dimension_numbers = #tpu.dot_dimension_numbers<[1], [0], [0], [1], [0, 0, 1, 1], [], []>} : vector<8x8xf32>, vector<8x32xf32>, vector<8x32xf32> -> vector<8x32xf32>
    %289 = arith.addf %203, %288 : vector<8x32xf32>
    %290 = vector.extract_strided_slice %29 {offsets = [0, 24], sizes = [8, 8], strides = [1, 1]} : vector<8x32xf32> to vector<8x8xf32>
    %c0_88 = arith.constant 0 : index
    %c24 = arith.constant 24 : index
    %291 = vector.load %arg24[%c0_88, %c24] : memref<8x32xf32, #tpu.memory_space<vmem>>, vector<8x8xf32>
    %c0_89 = arith.constant 0 : index
    %c24_90 = arith.constant 24 : index
    %292 = vector.load %arg25[%c0_89, %c24_90] : memref<8x32xf32, #tpu.memory_space<vmem>>, vector<8x8xf32>
    %cst_91 = arith.constant dense<0.000000e+00> : vector<8x8xf32>
    %293 = tpu.matmul %290, %291, %cst_91 {dimension_numbers = #tpu.dot_dimension_numbers<[1], [1], [0], [0], [0, 0, 1, 0], [], []>} : vector<8x8xf32>, vector<8x8xf32>, vector<8x8xf32> -> vector<8x8xf32>
    %c0_92 = arith.constant 0 : index
    %c0_93 = arith.constant 0 : index
    %294 = vector.load %arg5[%c0_92, %c0_93] : memref<8x5xf32, #tpu.memory_space<vmem>>, vector<8x5xf32>
    %cst_94 = arith.constant dense<0.000000e+00> : vector<8x5xf32>
    %295 = tpu.matmul %290, %294, %cst_94 {dimension_numbers = #tpu.dot_dimension_numbers<[1], [0], [0], [1], [0, 0, 1, 1], [], []>} : vector<8x8xf32>, vector<8x5xf32>, vector<8x5xf32> -> vector<8x5xf32>
    %296 = vector.extract_strided_slice %295 {offsets = [0, 0], sizes = [8, 1], strides = [1, 1]} : vector<8x5xf32> to vector<8x1xf32>
    %297 = vector.extract_strided_slice %295 {offsets = [0, 1], sizes = [8, 1], strides = [1, 1]} : vector<8x5xf32> to vector<8x1xf32>
    %298 = vector.shape_cast %297 : vector<8x1xf32> to vector<8x1xf32>
    %299 = vector.broadcast %298 : vector<8x1xf32> to vector<8x8xf32>
    %300 = vector.shape_cast %296 : vector<8x1xf32> to vector<8x1xf32>
    %301 = vector.broadcast %300 : vector<8x1xf32> to vector<8x8xf32>
    %302 = arith.select %16, %299, %301 : vector<8x8xi1>, vector<8x8xf32>
    %303 = vector.extract_strided_slice %295 {offsets = [0, 2], sizes = [8, 1], strides = [1, 1]} : vector<8x5xf32> to vector<8x1xf32>
    %304 = vector.shape_cast %303 : vector<8x1xf32> to vector<8x1xf32>
    %305 = vector.broadcast %304 : vector<8x1xf32> to vector<8x8xf32>
    %306 = arith.select %18, %305, %302 : vector<8x8xi1>, vector<8x8xf32>
    %307 = vector.extract_strided_slice %295 {offsets = [0, 3], sizes = [8, 1], strides = [1, 1]} : vector<8x5xf32> to vector<8x1xf32>
    %308 = vector.shape_cast %307 : vector<8x1xf32> to vector<8x1xf32>
    %309 = vector.broadcast %308 : vector<8x1xf32> to vector<8x8xf32>
    %310 = arith.select %20, %309, %306 : vector<8x8xi1>, vector<8x8xf32>
    %311 = vector.extract_strided_slice %295 {offsets = [0, 4], sizes = [8, 1], strides = [1, 1]} : vector<8x5xf32> to vector<8x1xf32>
    %312 = vector.shape_cast %311 : vector<8x1xf32> to vector<8x1xf32>
    %313 = vector.broadcast %312 : vector<8x1xf32> to vector<8x8xf32>
    %314 = arith.select %22, %313, %310 : vector<8x8xi1>, vector<8x8xf32>
    %315 = arith.addf %293, %314 : vector<8x8xf32>
    %316 = arith.addf %315, %12 : vector<8x8xf32>
    %cst_95 = arith.constant dense<0xFF800000> : vector<8xf32>
    %317 = vector.multi_reduction <maximumf>, %316, %cst_95 [1] : vector<8x8xf32> to vector<8xf32>
    %318 = vector.shape_cast %317 : vector<8xf32> to vector<8x1xf32>
    %319 = vector.broadcast %318 : vector<8x1xf32> to vector<8x8xf32>
    %320 = arith.subf %316, %319 : vector<8x8xf32>
    %321 = math.exp %320 : vector<8x8xf32>
    %cst_96 = arith.constant dense<0.000000e+00> : vector<8xf32>
    %322 = vector.multi_reduction <add>, %321, %cst_96 [1] : vector<8x8xf32> to vector<8xf32>
    %323 = vector.shape_cast %322 : vector<8xf32> to vector<8x1xf32>
    %cst_97 = arith.constant dense<0.000000e+00> : vector<8x8xf32>
    %324 = tpu.matmul %321, %292, %cst_97 {dimension_numbers = #tpu.dot_dimension_numbers<[1], [0], [0], [1], [0, 0, 1, 1], [], []>} : vector<8x8xf32>, vector<8x8xf32>, vector<8x8xf32> -> vector<8x8xf32>
    %cst_98 = arith.constant 0.000000e+00 : f32
    %325 = vector.broadcast %cst_98 : f32 to vector<8x8xf32>
    %326 = arith.select %14, %321, %325 : vector<8x8xi1>, vector<8x8xf32>
    %cst_99 = arith.constant dense<0.000000e+00> : vector<8xf32>
    %327 = vector.multi_reduction <add>, %326, %cst_99 [1] : vector<8x8xf32> to vector<8xf32>
    %328 = vector.shape_cast %327 : vector<8xf32> to vector<8x1xf32>
    %329 = vector.extract_strided_slice %30 {offsets = [0, 0], sizes = [1, 8], strides = [1, 1]} : vector<5x8xf32> to vector<1x8xf32>
    %330 = vector.broadcast %328 : vector<8x1xf32> to vector<8x8xf32>
    %331 = vector.broadcast %329 : vector<1x8xf32> to vector<8x8xf32>
    %332 = arith.mulf %330, %331 : vector<8x8xf32>
    %333 = arith.addf %324, %332 : vector<8x8xf32>
    %cst_100 = arith.constant 0.000000e+00 : f32
    %334 = vector.broadcast %cst_100 : f32 to vector<8x8xf32>
    %335 = arith.select %16, %321, %334 : vector<8x8xi1>, vector<8x8xf32>
    %cst_101 = arith.constant dense<0.000000e+00> : vector<8xf32>
    %336 = vector.multi_reduction <add>, %335, %cst_101 [1] : vector<8x8xf32> to vector<8xf32>
    %337 = vector.shape_cast %336 : vector<8xf32> to vector<8x1xf32>
    %338 = vector.extract_strided_slice %30 {offsets = [1, 0], sizes = [1, 8], strides = [1, 1]} : vector<5x8xf32> to vector<1x8xf32>
    %339 = vector.broadcast %337 : vector<8x1xf32> to vector<8x8xf32>
    %340 = vector.broadcast %338 : vector<1x8xf32> to vector<8x8xf32>
    %341 = arith.mulf %339, %340 : vector<8x8xf32>
    %342 = arith.addf %333, %341 : vector<8x8xf32>
    %cst_102 = arith.constant 0.000000e+00 : f32
    %343 = vector.broadcast %cst_102 : f32 to vector<8x8xf32>
    %344 = arith.select %18, %321, %343 : vector<8x8xi1>, vector<8x8xf32>
    %cst_103 = arith.constant dense<0.000000e+00> : vector<8xf32>
    %345 = vector.multi_reduction <add>, %344, %cst_103 [1] : vector<8x8xf32> to vector<8xf32>
    %346 = vector.shape_cast %345 : vector<8xf32> to vector<8x1xf32>
    %347 = vector.extract_strided_slice %30 {offsets = [2, 0], sizes = [1, 8], strides = [1, 1]} : vector<5x8xf32> to vector<1x8xf32>
    %348 = vector.broadcast %346 : vector<8x1xf32> to vector<8x8xf32>
    %349 = vector.broadcast %347 : vector<1x8xf32> to vector<8x8xf32>
    %350 = arith.mulf %348, %349 : vector<8x8xf32>
    %351 = arith.addf %342, %350 : vector<8x8xf32>
    %cst_104 = arith.constant 0.000000e+00 : f32
    %352 = vector.broadcast %cst_104 : f32 to vector<8x8xf32>
    %353 = arith.select %20, %321, %352 : vector<8x8xi1>, vector<8x8xf32>
    %cst_105 = arith.constant dense<0.000000e+00> : vector<8xf32>
    %354 = vector.multi_reduction <add>, %353, %cst_105 [1] : vector<8x8xf32> to vector<8xf32>
    %355 = vector.shape_cast %354 : vector<8xf32> to vector<8x1xf32>
    %356 = vector.extract_strided_slice %30 {offsets = [3, 0], sizes = [1, 8], strides = [1, 1]} : vector<5x8xf32> to vector<1x8xf32>
    %357 = vector.broadcast %355 : vector<8x1xf32> to vector<8x8xf32>
    %358 = vector.broadcast %356 : vector<1x8xf32> to vector<8x8xf32>
    %359 = arith.mulf %357, %358 : vector<8x8xf32>
    %360 = arith.addf %351, %359 : vector<8x8xf32>
    %cst_106 = arith.constant 0.000000e+00 : f32
    %361 = vector.broadcast %cst_106 : f32 to vector<8x8xf32>
    %362 = arith.select %22, %321, %361 : vector<8x8xi1>, vector<8x8xf32>
    %cst_107 = arith.constant dense<0.000000e+00> : vector<8xf32>
    %363 = vector.multi_reduction <add>, %362, %cst_107 [1] : vector<8x8xf32> to vector<8xf32>
    %364 = vector.shape_cast %363 : vector<8xf32> to vector<8x1xf32>
    %365 = vector.extract_strided_slice %30 {offsets = [4, 0], sizes = [1, 8], strides = [1, 1]} : vector<5x8xf32> to vector<1x8xf32>
    %366 = vector.broadcast %364 : vector<8x1xf32> to vector<8x8xf32>
    %367 = vector.broadcast %365 : vector<1x8xf32> to vector<8x8xf32>
    %368 = arith.mulf %366, %367 : vector<8x8xf32>
    %369 = arith.addf %360, %368 : vector<8x8xf32>
    %370 = tpu.reciprocal %323 : vector<8x1xf32> -> vector<8x1xf32>
    %371 = vector.broadcast %370 : vector<8x1xf32> to vector<8x8xf32>
    %372 = arith.mulf %369, %371 : vector<8x8xf32>
    %c24_108 = arith.constant 24 : index
    %c0_109 = arith.constant 0 : index
    %373 = vector.load %arg13[%c24_108, %c0_109] : memref<32x32xf32, #tpu.memory_space<vmem>>, vector<8x32xf32>
    %cst_110 = arith.constant dense<0.000000e+00> : vector<8x32xf32>
    %374 = tpu.matmul %372, %373, %cst_110 {dimension_numbers = #tpu.dot_dimension_numbers<[1], [0], [0], [1], [0, 0, 1, 1], [], []>} : vector<8x8xf32>, vector<8x32xf32>, vector<8x32xf32> -> vector<8x32xf32>
    %375 = arith.addf %289, %374 : vector<8x32xf32>
    %c0_111 = arith.constant 0 : index
    %c0_112 = arith.constant 0 : index
    %376 = vector.load %arg14[%c0_111, %c0_112] : memref<1x32xf32, #tpu.memory_space<vmem>>, vector<1x32xf32>
    %377 = vector.broadcast %376 : vector<1x32xf32> to vector<8x32xf32>
    %378 = arith.addf %375, %377 : vector<8x32xf32>
    %379 = arith.addf %378, %4 : vector<8x32xf32>
    %c0_113 = arith.constant 0 : index
    %c0_114 = arith.constant 0 : index
    %380 = vector.load %arg15[%c0_113, %c0_114] : memref<1x32xf32, #tpu.memory_space<vmem>>, vector<1x32xf32>
    %c0_115 = arith.constant 0 : index
    %c0_116 = arith.constant 0 : index
    %381 = vector.load %arg16[%c0_115, %c0_116] : memref<1x32xf32, #tpu.memory_space<vmem>>, vector<1x32xf32>
    %cst_117 = arith.constant dense<0.000000e+00> : vector<8xf32>
    %382 = vector.multi_reduction <add>, %379, %cst_117 [1] : vector<8x32xf32> to vector<8xf32>
    %383 = vector.shape_cast %382 : vector<8xf32> to vector<8x1xf32>
    %cst_118 = arith.constant 3.200000e+01 : f32
    %384 = vector.broadcast %cst_118 : f32 to vector<8x1xf32>
    %385 = arith.divf %383, %384 : vector<8x1xf32>
    %386 = vector.broadcast %385 : vector<8x1xf32> to vector<8x32xf32>
    %387 = arith.subf %379, %386 : vector<8x32xf32>
    %388 = arith.mulf %387, %387 : vector<8x32xf32>
    %cst_119 = arith.constant dense<0.000000e+00> : vector<8xf32>
    %389 = vector.multi_reduction <add>, %388, %cst_119 [1] : vector<8x32xf32> to vector<8xf32>
    %390 = vector.shape_cast %389 : vector<8xf32> to vector<8x1xf32>
    %cst_120 = arith.constant 3.200000e+01 : f32
    %391 = vector.broadcast %cst_120 : f32 to vector<8x1xf32>
    %392 = arith.divf %390, %391 : vector<8x1xf32>
    %393 = vector.broadcast %385 : vector<8x1xf32> to vector<8x32xf32>
    %394 = arith.subf %379, %393 : vector<8x32xf32>
    %cst_121 = arith.constant 9.99999974E-6 : f32
    %395 = vector.broadcast %cst_121 : f32 to vector<8x1xf32>
    %396 = arith.addf %392, %395 : vector<8x1xf32>
    %397 = math.rsqrt %396 : vector<8x1xf32>
    %398 = vector.broadcast %397 : vector<8x1xf32> to vector<8x32xf32>
    %399 = arith.mulf %394, %398 : vector<8x32xf32>
    %400 = vector.broadcast %380 : vector<1x32xf32> to vector<8x32xf32>
    %401 = arith.mulf %399, %400 : vector<8x32xf32>
    %402 = vector.broadcast %381 : vector<1x32xf32> to vector<8x32xf32>
    %403 = arith.addf %401, %402 : vector<8x32xf32>
    %c0_122 = arith.constant 0 : index
    %c0_123 = arith.constant 0 : index
    %404 = vector.load %arg17[%c0_122, %c0_123] : memref<32x64xf32, #tpu.memory_space<vmem>>, vector<32x64xf32>
    %cst_124 = arith.constant dense<0.000000e+00> : vector<8x64xf32>
    %405 = tpu.matmul %403, %404, %cst_124 {dimension_numbers = #tpu.dot_dimension_numbers<[1], [0], [0], [1], [0, 0, 1, 1], [], []>} : vector<8x32xf32>, vector<32x64xf32>, vector<8x64xf32> -> vector<8x64xf32>
    %c0_125 = arith.constant 0 : index
    %c0_126 = arith.constant 0 : index
    %406 = vector.load %arg18[%c0_125, %c0_126] : memref<1x64xf32, #tpu.memory_space<vmem>>, vector<1x64xf32>
    %407 = vector.broadcast %406 : vector<1x64xf32> to vector<8x64xf32>
    %408 = arith.addf %405, %407 : vector<8x64xf32>
    %cst_127 = arith.constant 0.000000e+00 : f32
    %409 = vector.broadcast %cst_127 : f32 to vector<8x64xf32>
    %410 = arith.maximumf %408, %409 : vector<8x64xf32>
    %c0_128 = arith.constant 0 : index
    %c0_129 = arith.constant 0 : index
    %411 = vector.load %arg19[%c0_128, %c0_129] : memref<64x32xf32, #tpu.memory_space<vmem>>, vector<64x32xf32>
    %cst_130 = arith.constant dense<0.000000e+00> : vector<8x32xf32>
    %412 = tpu.matmul %410, %411, %cst_130 {dimension_numbers = #tpu.dot_dimension_numbers<[1], [0], [0], [1], [0, 0, 1, 1], [], []>} : vector<8x64xf32>, vector<64x32xf32>, vector<8x32xf32> -> vector<8x32xf32>
    %c0_131 = arith.constant 0 : index
    %c0_132 = arith.constant 0 : index
    %413 = vector.load %arg20[%c0_131, %c0_132] : memref<1x32xf32, #tpu.memory_space<vmem>>, vector<1x32xf32>
    %414 = vector.broadcast %413 : vector<1x32xf32> to vector<8x32xf32>
    %415 = arith.addf %412, %414 : vector<8x32xf32>
    %416 = arith.addf %415, %403 : vector<8x32xf32>
    %c0_133 = arith.constant 0 : index
    %c0_134 = arith.constant 0 : index
    %417 = vector.load %arg21[%c0_133, %c0_134] : memref<1x32xf32, #tpu.memory_space<vmem>>, vector<1x32xf32>
    %c0_135 = arith.constant 0 : index
    %c0_136 = arith.constant 0 : index
    %418 = vector.load %arg22[%c0_135, %c0_136] : memref<1x32xf32, #tpu.memory_space<vmem>>, vector<1x32xf32>
    %cst_137 = arith.constant dense<0.000000e+00> : vector<8xf32>
    %419 = vector.multi_reduction <add>, %416, %cst_137 [1] : vector<8x32xf32> to vector<8xf32>
    %420 = vector.shape_cast %419 : vector<8xf32> to vector<8x1xf32>
    %cst_138 = arith.constant 3.200000e+01 : f32
    %421 = vector.broadcast %cst_138 : f32 to vector<8x1xf32>
    %422 = arith.divf %420, %421 : vector<8x1xf32>
    %423 = vector.broadcast %422 : vector<8x1xf32> to vector<8x32xf32>
    %424 = arith.subf %416, %423 : vector<8x32xf32>
    %425 = arith.mulf %424, %424 : vector<8x32xf32>
    %cst_139 = arith.constant dense<0.000000e+00> : vector<8xf32>
    %426 = vector.multi_reduction <add>, %425, %cst_139 [1] : vector<8x32xf32> to vector<8xf32>
    %427 = vector.shape_cast %426 : vector<8xf32> to vector<8x1xf32>
    %cst_140 = arith.constant 3.200000e+01 : f32
    %428 = vector.broadcast %cst_140 : f32 to vector<8x1xf32>
    %429 = arith.divf %427, %428 : vector<8x1xf32>
    %430 = vector.broadcast %422 : vector<8x1xf32> to vector<8x32xf32>
    %431 = arith.subf %416, %430 : vector<8x32xf32>
    %cst_141 = arith.constant 9.99999974E-6 : f32
    %432 = vector.broadcast %cst_141 : f32 to vector<8x1xf32>
    %433 = arith.addf %429, %432 : vector<8x1xf32>
    %434 = math.rsqrt %433 : vector<8x1xf32>
    %435 = vector.broadcast %434 : vector<8x1xf32> to vector<8x32xf32>
    %436 = arith.mulf %431, %435 : vector<8x32xf32>
    %437 = vector.broadcast %417 : vector<1x32xf32> to vector<8x32xf32>
    %438 = arith.mulf %436, %437 : vector<8x32xf32>
    %439 = vector.broadcast %418 : vector<1x32xf32> to vector<8x32xf32>
    %440 = arith.addf %438, %439 : vector<8x32xf32>
    %c0_142 = arith.constant 0 : index
    %c0_143 = arith.constant 0 : index
    %c0_144 = arith.constant 0 : index
    %441 = vector.load %arg23[%c0_142, %c0_143, %c0_144] : memref<1x8x32xf32, #tpu.memory_space<vmem>>, vector<1x8x32xf32>
    %442 = vector.shape_cast %441 : vector<1x8x32xf32> to vector<8x32xf32>
    %443 = vector.shape_cast %440 : vector<8x32xf32> to vector<1x8x32xf32>
    tpu.vector_store %arg23[%c0_142, %c0_143, %c0_144], %443 {strides = array<i32>} : memref<1x8x32xf32, #tpu.memory_space<vmem>>, vector<1x8x32xf32>,
    return
  }
  func.func @transform_0(%arg0: i32, %arg1: i32) -> (i32, i32, i32) {
    %c0_i32 = arith.constant 0 : i32
    %c0_i32_0 = arith.constant 0 : i32
    return %arg0, %arg1, %c0_i32 : i32, i32, i32
  }
  func.func @transform_1(%arg0: i32, %arg1: i32) -> (i32, i32, i32) {
    %c0_i32 = arith.constant 0 : i32
    %c0_i32_0 = arith.constant 0 : i32
    %c0_i32_1 = arith.constant 0 : i32
    return %arg0, %c0_i32, %c0_i32_0 : i32, i32, i32
  }
  func.func @transform_2(%arg0: i32, %arg1: i32) -> (i32, i32, i32) {
    %c0_i32 = arith.constant 0 : i32
    %c0_i32_0 = arith.constant 0 : i32
    return %arg0, %arg1, %c0_i32 : i32, i32, i32
  }
  func.func @transform_3(%arg0: i32, %arg1: i32) -> (i32, i32) {
    %c0_i32 = arith.constant 0 : i32
    %c0_i32_0 = arith.constant 0 : i32
    %c0_i32_1 = arith.constant 0 : i32
    return %c0_i32, %c0_i32_0 : i32, i32
  }
  func.func @transform_4(%arg0: i32, %arg1: i32) -> (i32, i32) {
    %c0_i32 = arith.constant 0 : i32
    %c0_i32_0 = arith.constant 0 : i32
    %c0_i32_1 = arith.constant 0 : i32
    return %c0_i32, %c0_i32_0 : i32, i32
  }
  func.func @transform_5(%arg0: i32, %arg1: i32) -> (i32, i32) {
    %c0_i32 = arith.constant 0 : i32
    %c0_i32_0 = arith.constant 0 : i32
    %c0_i32_1 = arith.constant 0 : i32
    return %c0_i32, %c0_i32_0 : i32, i32
  }
  func.func @transform_6(%arg0: i32, %arg1: i32) -> (i32, i32) {
    %c0_i32 = arith.constant 0 : i32
    %c0_i32_0 = arith.constant 0 : i32
    %c0_i32_1 = arith.constant 0 : i32
    return %c0_i32, %c0_i32_0 : i32, i32
  }
  func.func @transform_7(%arg0: i32, %arg1: i32) -> (i32, i32) {
    %c0_i32 = arith.constant 0 : i32
    %c0_i32_0 = arith.constant 0 : i32
    %c0_i32_1 = arith.constant 0 : i32
    return %c0_i32, %c0_i32_0 : i32, i32
  }
  func.func @transform_8(%arg0: i32, %arg1: i32) -> (i32, i32) {
    %c0_i32 = arith.constant 0 : i32
    %c0_i32_0 = arith.constant 0 : i32
    %c0_i32_1 = arith.constant 0 : i32
    return %c0_i32, %c0_i32_0 : i32, i32
  }
  func.func @transform_9(%arg0: i32, %arg1: i32) -> (i32, i32) {
    %c0_i32 = arith.constant 0 : i32
    %c0_i32_0 = arith.constant 0 : i32
    %c0_i32_1 = arith.constant 0 : i32
    return %c0_i32, %c0_i32_0 : i32, i32
  }
  func.func @transform_10(%arg0: i32, %arg1: i32) -> (i32, i32) {
    %c0_i32 = arith.constant 0 : i32
    %c0_i32_0 = arith.constant 0 : i32
    %c0_i32_1 = arith.constant 0 : i32
    return %c0_i32, %c0_i32_0 : i32, i32
  }
  func.func @transform_11(%arg0: i32, %arg1: i32) -> (i32, i32) {
    %c0_i32 = arith.constant 0 : i32
    %c0_i32_0 = arith.constant 0 : i32
    %c0_i32_1 = arith.constant 0 : i32
    return %c0_i32, %c0_i32_0 : i32, i32
  }
  func.func @transform_12(%arg0: i32, %arg1: i32) -> (i32, i32) {
    %c0_i32 = arith.constant 0 : i32
    %c0_i32_0 = arith.constant 0 : i32
    %c0_i32_1 = arith.constant 0 : i32
    return %c0_i32, %c0_i32_0 : i32, i32
  }
  func.func @transform_13(%arg0: i32, %arg1: i32) -> (i32, i32) {
    %c0_i32 = arith.constant 0 : i32
    %c0_i32_0 = arith.constant 0 : i32
    %c0_i32_1 = arith.constant 0 : i32
    return %c0_i32, %c0_i32_0 : i32, i32
  }
  func.func @transform_14(%arg0: i32, %arg1: i32) -> (i32, i32) {
    %c0_i32 = arith.constant 0 : i32
    %c0_i32_0 = arith.constant 0 : i32
    %c0_i32_1 = arith.constant 0 : i32
    return %c0_i32, %c0_i32_0 : i32, i32
  }
  func.func @transform_15(%arg0: i32, %arg1: i32) -> (i32, i32) {
    %c0_i32 = arith.constant 0 : i32
    %c0_i32_0 = arith.constant 0 : i32
    %c0_i32_1 = arith.constant 0 : i32
    return %c0_i32, %c0_i32_0 : i32, i32
  }
  func.func @transform_16(%arg0: i32, %arg1: i32) -> (i32, i32) {
    %c0_i32 = arith.constant 0 : i32
    %c0_i32_0 = arith.constant 0 : i32
    %c0_i32_1 = arith.constant 0 : i32
    return %c0_i32, %c0_i32_0 : i32, i32
  }
  func.func @transform_17(%arg0: i32, %arg1: i32) -> (i32, i32) {
    %c0_i32 = arith.constant 0 : i32
    %c0_i32_0 = arith.constant 0 : i32
    %c0_i32_1 = arith.constant 0 : i32
    return %c0_i32, %c0_i32_0 : i32, i32
  }
  func.func @transform_18(%arg0: i32, %arg1: i32) -> (i32, i32) {
    %c0_i32 = arith.constant 0 : i32
    %c0_i32_0 = arith.constant 0 : i32
    %c0_i32_1 = arith.constant 0 : i32
    return %c0_i32, %c0_i32_0 : i32, i32
  }
  func.func @transform_19(%arg0: i32, %arg1: i32) -> (i32, i32) {
    %c0_i32 = arith.constant 0 : i32
    %c0_i32_0 = arith.constant 0 : i32
    %c0_i32_1 = arith.constant 0 : i32
    return %c0_i32, %c0_i32_0 : i32, i32
  }
  func.func @transform_20(%arg0: i32, %arg1: i32) -> (i32, i32) {
    %c0_i32 = arith.constant 0 : i32
    %c0_i32_0 = arith.constant 0 : i32
    %c0_i32_1 = arith.constant 0 : i32
    return %c0_i32, %c0_i32_0 : i32, i32
  }
  func.func @transform_21(%arg0: i32, %arg1: i32) -> (i32, i32, i32) {
    %c0_i32 = arith.constant 0 : i32
    %c0_i32_0 = arith.constant 0 : i32
    return %arg0, %arg1, %c0_i32 : i32, i32, i32
  }
}

</mosaic_0001>

<llo_original>
// kernel: tpu_custom_call.1
$region0: #{tpu_custom_call.1}
  #allocation0 [shape = 'u32[]', space=smem, size = 0x4, offset = 0x4, fixed_abs, tag = 'smem constant byte address 0x4 - core index']
  #allocation1 [shape = 'u32[144,128]{1,0:T(1,128)}', space=vmem, size = 0x12000, scoped, tag = 'internal scratch']
  #allocation2 [shape = 'f32[8,32]{1,0:T(8,128)}', space=vmem, size = 0x1000, scoped, tag = 'scratch operand']
  #allocation3 [shape = 'f32[8,32]{1,0:T(8,128)}', space=vmem, size = 0x1000, scoped, tag = 'scratch operand']
  %s0 = inlined_call_operand.hbm [shape: f32[2,8,32], index: 0, kind: input, shape index: {}]
  %s1 = inlined_call_operand.hbm [shape: f32[2,8,32], index: 1, kind: input, shape index: {}]
  %s2 = inlined_call_operand.hbm [shape: s8[2,8,8], index: 2, kind: input, shape index: {}]
  %s3 = inlined_call_operand.hbm [shape: f32[8,5], index: 3, kind: input, shape index: {}]
  %s4 = inlined_call_operand.hbm [shape: f32[5,8], index: 4, kind: input, shape index: {}]
  %s5 = inlined_call_operand.vmem [shape: f32[32,32], index: 5, kind: input, shape index: {}]
  %s6 = inlined_call_operand.vmem [shape: f32[1,32], index: 6, kind: input, shape index: {}]
  %s7 = inlined_call_operand.vmem [shape: f32[32,32], index: 7, kind: input, shape index: {}]
  %s8 = inlined_call_operand.vmem [shape: f32[1,32], index: 8, kind: input, shape index: {}]
  %s9 = inlined_call_operand.vmem [shape: f32[32,32], index: 9, kind: input, shape index: {}]
  %s10 = inlined_call_operand.vmem [shape: f32[1,32], index: 10, kind: input, shape index: {}]
  %s11 = inlined_call_operand.hbm [shape: f32[32,32], index: 11, kind: input, shape index: {}]
  %s12 = inlined_call_operand.vmem [shape: f32[1,32], index: 12, kind: input, shape index: {}]
  %s13 = inlined_call_operand.vmem [shape: f32[1,32], index: 13, kind: input, shape index: {}]
  %s14 = inlined_call_operand.vmem [shape: f32[1,32], index: 14, kind: input, shape index: {}]
  %s15 = inlined_call_operand.hbm [shape: f32[32,64], index: 15, kind: input, shape index: {}]
  %s16 = inlined_call_operand.vmem [shape: f32[1,64], index: 16, kind: input, shape index: {}]
  %s17 = inlined_call_operand.vmem [shape: f32[64,32], index: 17, kind: input, shape index: {}]
  %s18 = inlined_call_operand.vmem [shape: f32[1,32], index: 18, kind: input, shape index: {}]
  %s19 = inlined_call_operand.vmem [shape: f32[1,32], index: 19, kind: input, shape index: {}]
  %s20 = inlined_call_operand.vmem [shape: f32[1,32], index: 20, kind: input, shape index: {}]
  %s21 = inlined_call_operand.hbm [shape: f32[2,8,32], index: 21, kind: output, shape index: {}]
  %s22 = sld [smem:[#allocation0]]
  $region149: #{tpu_custom_call.1} parent=0
    _
  %s24 = ssub.s32 1, %s22
  %s25 = scalar_select 0, %s24, %s22
  $region1: #{tpu_custom_call.1} parent=0
    #allocation4 [shape = 'u8[8192]{0}', space=vmem, size = 0x2000, scoped, tag = 'input window, operand 0']
    #allocation5 [shape = 's32[2]{0}', space=sflag, size = 0x8, scoped, tag = 'scoped memory for tpu_custom_call.1']
    #allocation6 [shape = 's32[2]{0}', space=sflag, size = 0x8, scoped, tag = 'scoped memory for tpu_custom_call.1']
    #allocation7 [shape = 'u8[8192]{0}', space=vmem, size = 0x2000, scoped, tag = 'input window, operand 1']
    #allocation8 [shape = 's32[2]{0}', space=sflag, size = 0x8, scoped, tag = 'scoped memory for tpu_custom_call.1']
    #allocation9 [shape = 'u8[2048]{0}', space=vmem, size = 0x800, scoped, tag = 'input window, operand 2']
    #allocation10 [shape = 'u8[4096]{0}', space=vmem, size = 0x1000, scoped, tag = 'input window, operand 3, single buffered']
    #allocation11 [shape = 's32[1]{0}', space=sflag, size = 0x4, scoped, tag = 'scoped memory for tpu_custom_call.1']
    #allocation12 [shape = 'u8[4096]{0}', space=vmem, size = 0x1000, scoped, tag = 'input window, operand 4, single buffered']
    #allocation13 [shape = 'u8[16384]{0}', space=vmem, size = 0x4000, scoped, tag = 'input window, operand 11, single buffered']
    #allocation14 [shape = 's32[1]{0}', space=sflag, size = 0x4, scoped, tag = 'scoped memory for tpu_custom_call.1']
    #allocation15 [shape = 'u8[16384]{0}', space=vmem, size = 0x4000, scoped, tag = 'input window, operand 15, single buffered']
    #allocation16 [shape = 'u8[8192]{0}', space=vmem, size = 0x2000, scoped, tag = 'output window, operand 0']
    %26 = vsyncpa [#allocation5], 0
    %s27 = scalar_lea.sflag [#allocation5], 1
    %28 = vsyncpa %s27, 0
    %29 = vsyncpa [#allocation8], 0
    %s30 = scalar_lea.sflag [#allocation8], 1
    %31 = vsyncpa %s30, 0
    %32 = vsyncpa [#allocation11], 0
    %33 = vsyncpa [#allocation14], 0
    %34 = vsyncpa [#allocation6], 0
    %s35 = scalar_lea.sflag [#allocation6], 1
    %36 = vsyncpa %s35, 0
    loop: start=0, step=1, limit=4
    $region2: #{tpu_custom_call.1} parent=1 // loop_pre_header
      _
    $region3: #{tpu_custom_call.1} parent=1 // loop_header
      %s38 = sphi 0, %s42
      %p39 = scmp.ge.s32.totalorder %s38, 4
      %s45 = sphi 0, %s57
      %s46 = sphi 0, %s53
      %s47 = sphi 0, %s45
      %s48 = sphi 0, %s46
      %s49 = sphi 0, %s47
      %s50 = sphi 0, %s48
      %s62 = sphi 0, %s64
      %s65 = sphi 0, %s62
      %s66 = sphi 0, %s65
      %s82 = sphi 0, %s66
      %s88 = sphi 0, %s90
      %s91 = sphi 0, %s88
      %s92 = sphi 0, %s91
      %s108 = sphi 0, %s92
      %s116 = sphi 0, %s118
      %s119 = sphi 0, %s116
      %s120 = sphi 0, %s119
      %s136 = sphi 0, %s120
      %s140 = sphi 0, %s140
      %s142 = sphi 0, %s140
      %s143 = sphi 0, %s142
      %s157 = sphi 0, %s143
      %s161 = sphi 0, %s161
      %s163 = sphi 0, %s161
      %s164 = sphi 0, %s163
      %s178 = sphi 0, %s164
      %s182 = sphi 0, %s182
      %s184 = sphi 0, %s182
      %s185 = sphi 0, %s184
      %s199 = sphi 0, %s185
      %s203 = sphi 0, %s203
      %s205 = sphi 0, %s203
      %s206 = sphi 0, %s205
      %s220 = sphi 0, %s206
      %s224 = sphi 0, %s224
      %s226 = sphi 0, %s224
      %s227 = sphi 0, %s226
      %s241 = sphi 0, %s227
      %s245 = sphi 0, %s245
      %s247 = sphi 0, %s245
      %s248 = sphi 0, %s247
      %s262 = sphi 0, %s248
      %s266 = sphi 0, %s266
      %s268 = sphi 0, %s266
      %s269 = sphi 0, %s268
      %s283 = sphi 0, %s269
      %s287 = sphi 0, %s287
      %s289 = sphi 0, %s287
      %s290 = sphi 0, %s289
      %s304 = sphi 0, %s290
      %s308 = sphi 0, %s308
      %s310 = sphi 0, %s308
      %s311 = sphi 0, %s310
      %s325 = sphi 0, %s311
      %s329 = sphi 0, %s329
      %s331 = sphi 0, %s329
      %s332 = sphi 0, %s331
      %s346 = sphi 0, %s332
      %s350 = sphi 0, %s350
      %s352 = sphi 0, %s350
      %s353 = sphi 0, %s352
      %s367 = sphi 0, %s353
      %s371 = sphi 0, %s371
      %s373 = sphi 0, %s371
      %s374 = sphi 0, %s373
      %s388 = sphi 0, %s374
      %s392 = sphi 0, %s392
      %s394 = sphi 0, %s392
      %s395 = sphi 0, %s394
      %s409 = sphi 0, %s395
      %s413 = sphi 0, %s413
      %s415 = sphi 0, %s413
      %s416 = sphi 0, %s415
      %s430 = sphi 0, %s416
      %s434 = sphi 0, %s434
      %s436 = sphi 0, %s434
      %s437 = sphi 0, %s436
      %s451 = sphi 0, %s437
      %s455 = sphi 0, %s455
      %s457 = sphi 0, %s455
      %s458 = sphi 0, %s457
      %s472 = sphi 0, %s458
      %s476 = sphi 0, %s476
      %s478 = sphi 0, %s476
      %s479 = sphi 0, %s478
      %s493 = sphi 0, %s479
      %s497 = sphi 0, %s497
      %s499 = sphi 0, %s497
      %s500 = sphi 0, %s499
      %s514 = sphi 0, %s500
      %s522 = sphi 0, %s524
      %s525 = sphi 0, %s522
      %s526 = sphi 0, %s525
      %s542 = sphi 0, %s526
    $region4: #{tpu_custom_call.1} parent=1 // loop_header_branch
      %41 = sbr.rel (%p39) target = $region8
    $region5: #{tpu_custom_call.1} parent=1 // loop_body
      %s43 = ssub.s32 %s38, 1
      %s44 = ssub.s32 %s38, 2
      %s51 = sadd.s32 1, %s46
      %p52 = scmp.ge.s32.totalorder %s51, 1
      %s53 = scalar_select %p52, 0, %s51
      %s54 = sadd.s32 1, %s45
      %s55 = scalar_select %p52, %s54, %s45
      %p56 = scmp.ge.s32.totalorder %s55, 2
      %s57 = scalar_select %p56, 0, %s55
      %s58 = ssub.s32 %s45, %s57
      %s59 = ssub.s32 %s46, %s53
      %s60 = sor.u32 %s58, %s59
      %p61 = scmp.eq.s32.totalorder %s60, 0
      %s63 = sadd.s32 %s62, 1
      %s64 = scalar_select %p61, %s62, %s63
      %p67 = pneg %p61
      %p68 = scmp.eq.s32.totalorder %s38, 1
      %p69 = por %p67, %p68
      %p70 = scmp.ne.s32.totalorder %s62, %s65
      %p71 = scmp.eq.s32.totalorder %s38, 0
      %p72 = por %p70, %p71
      %p73 = scmp.ne.s32.totalorder %s62, %s65
      %p74 = scmp.eq.s32.totalorder %s43, 1
      %p75 = por %p73, %p74
      %p76 = scmp.ne.s32.totalorder %s65, %s66
      %p77 = scmp.eq.s32.totalorder %s43, 0
      %p78 = por %p76, %p77
      %p79 = scmp.ne.s32.totalorder %s65, %s66
      %p80 = scmp.eq.s32.totalorder %s44, 1
      %p81 = por %p79, %p80
      %p83 = scmp.ne.s32.totalorder %s66, %s82
      %p84 = scmp.eq.s32.totalorder %s44, 0
      %p85 = por %p83, %p84
      %s86 = ssub.s32 %s45, %s57
      %p87 = scmp.eq.s32.totalorder %s86, 0
      %s89 = sadd.s32 %s88, 1
      %s90 = scalar_select %p87, %s88, %s89
      %p93 = pneg %p87
      %p94 = scmp.eq.s32.totalorder %s38, 1
      %p95 = por %p93, %p94
      %p96 = scmp.ne.s32.totalorder %s88, %s91
      %p97 = scmp.eq.s32.totalorder %s38, 0
      %p98 = por %p96, %p97
      %p99 = scmp.ne.s32.totalorder %s88, %s91
      %p100 = scmp.eq.s32.totalorder %s43, 1
      %p101 = por %p99, %p100
      %p102 = scmp.ne.s32.totalorder %s91, %s92
      %p103 = scmp.eq.s32.totalorder %s43, 0
      %p104 = por %p102, %p103
      %p105 = scmp.ne.s32.totalorder %s91, %s92
      %p106 = scmp.eq.s32.totalorder %s44, 1
      %p107 = por %p105, %p106
      %p109 = scmp.ne.s32.totalorder %s92, %s108
      %p110 = scmp.eq.s32.totalorder %s44, 0
      %p111 = por %p109, %p110
      %s112 = ssub.s32 %s45, %s57
      %s113 = ssub.s32 %s46, %s53
      %s114 = sor.u32 %s112, %s113
      %p115 = scmp.eq.s32.totalorder %s114, 0
      %s117 = sadd.s32 %s116, 1
      %s118 = scalar_select %p115, %s116, %s117
      %p121 = pneg %p115
      %p122 = scmp.eq.s32.totalorder %s38, 1
      %p123 = por %p121, %p122
      %p124 = scmp.ne.s32.totalorder %s116, %s119
      %p125 = scmp.eq.s32.totalorder %s38, 0
      %p126 = por %p124, %p125
      %p127 = scmp.ne.s32.totalorder %s116, %s119
      %p128 = scmp.eq.s32.totalorder %s43, 1
      %p129 = por %p127, %p128
      %p130 = scmp.ne.s32.totalorder %s119, %s120
      %p131 = scmp.eq.s32.totalorder %s43, 0
      %p132 = por %p130, %p131
      %p133 = scmp.ne.s32.totalorder %s119, %s120
      %p134 = scmp.eq.s32.totalorder %s44, 1
      %p135 = por %p133, %p134
      %p137 = scmp.ne.s32.totalorder %s120, %s136
      %p138 = scmp.eq.s32.totalorder %s44, 0
      %p139 = por %p137, %p138
      %s141 = sadd.s32 %s140, 1
      %p144 = scmp.eq.s32.totalorder %s38, 1
      %p145 = scmp.ne.s32.totalorder %s140, %s142
      %p146 = scmp.eq.s32.totalorder %s38, 0
      %p147 = por %p145, %p146
      %p148 = scmp.ne.s32.totalorder %s140, %s142
      %p149 = scmp.eq.s32.totalorder %s43, 1
      %p150 = por %p148, %p149
      %p151 = scmp.ne.s32.totalorder %s142, %s143
      %p152 = scmp.eq.s32.totalorder %s43, 0
      %p153 = por %p151, %p152
      %p154 = scmp.ne.s32.totalorder %s142, %s143
      %p155 = scmp.eq.s32.totalorder %s44, 1
      %p156 = por %p154, %p155
      %p158 = scmp.ne.s32.totalorder %s143, %s157
      %p159 = scmp.eq.s32.totalorder %s44, 0
      %p160 = por %p158, %p159
      %s162 = sadd.s32 %s161, 1
      %p165 = scmp.eq.s32.totalorder %s38, 1
      %p166 = scmp.ne.s32.totalorder %s161, %s163
      %p167 = scmp.eq.s32.totalorder %s38, 0
      %p168 = por %p166, %p167
      %p169 = scmp.ne.s32.totalorder %s161, %s163
      %p170 = scmp.eq.s32.totalorder %s43, 1
      %p171 = por %p169, %p170
      %p172 = scmp.ne.s32.totalorder %s163, %s164
      %p173 = scmp.eq.s32.totalorder %s43, 0
      %p174 = por %p172, %p173
      %p175 = scmp.ne.s32.totalorder %s163, %s164
      %p176 = scmp.eq.s32.totalorder %s44, 1
      %p177 = por %p175, %p176
      %p179 = scmp.ne.s32.totalorder %s164, %s178
      %p180 = scmp.eq.s32.totalorder %s44, 0
      %p181 = por %p179, %p180
      %s183 = sadd.s32 %s182, 1
      %p186 = scmp.eq.s32.totalorder %s38, 1
      %p187 = scmp.ne.s32.totalorder %s182, %s184
      %p188 = scmp.eq.s32.totalorder %s38, 0
      %p189 = por %p187, %p188
      %p190 = scmp.ne.s32.totalorder %s182, %s184
      %p191 = scmp.eq.s32.totalorder %s43, 1
      %p192 = por %p190, %p191
      %p193 = scmp.ne.s32.totalorder %s184, %s185
      %p194 = scmp.eq.s32.totalorder %s43, 0
      %p195 = por %p193, %p194
      %p196 = scmp.ne.s32.totalorder %s184, %s185
      %p197 = scmp.eq.s32.totalorder %s44, 1
      %p198 = por %p196, %p197
      %p200 = scmp.ne.s32.totalorder %s185, %s199
      %p201 = scmp.eq.s32.totalorder %s44, 0
      %p202 = por %p200, %p201
      %s204 = sadd.s32 %s203, 1
      %p207 = scmp.eq.s32.totalorder %s38, 1
      %p208 = scmp.ne.s32.totalorder %s203, %s205
      %p209 = scmp.eq.s32.totalorder %s38, 0
      %p210 = por %p208, %p209
      %p211 = scmp.ne.s32.totalorder %s203, %s205
      %p212 = scmp.eq.s32.totalorder %s43, 1
      %p213 = por %p211, %p212
      %p214 = scmp.ne.s32.totalorder %s205, %s206
      %p215 = scmp.eq.s32.totalorder %s43, 0
      %p216 = por %p214, %p215
      %p217 = scmp.ne.s32.totalorder %s205, %s206
      %p218 = scmp.eq.s32.totalorder %s44, 1
      %p219 = por %p217, %p218
      %p221 = scmp.ne.s32.totalorder %s206, %s220
      %p222 = scmp.eq.s32.totalorder %s44, 0
      %p223 = por %p221, %p222
      %s225 = sadd.s32 %s224, 1
      %p228 = scmp.eq.s32.totalorder %s38, 1
      %p229 = scmp.ne.s32.totalorder %s224, %s226
      %p230 = scmp.eq.s32.totalorder %s38, 0
      %p231 = por %p229, %p230
      %p232 = scmp.ne.s32.totalorder %s224, %s226
      %p233 = scmp.eq.s32.totalorder %s43, 1
      %p234 = por %p232, %p233
      %p235 = scmp.ne.s32.totalorder %s226, %s227
      %p236 = scmp.eq.s32.totalorder %s43, 0
      %p237 = por %p235, %p236
      %p238 = scmp.ne.s32.totalorder %s226, %s227
      %p239 = scmp.eq.s32.totalorder %s44, 1
      %p240 = por %p238, %p239
      %p242 = scmp.ne.s32.totalorder %s227, %s241
      %p243 = scmp.eq.s32.totalorder %s44, 0
      %p244 = por %p242, %p243
      %s246 = sadd.s32 %s245, 1
      %p249 = scmp.eq.s32.totalorder %s38, 1
      %p250 = scmp.ne.s32.totalorder %s245, %s247
      %p251 = scmp.eq.s32.totalorder %s38, 0
      %p252 = por %p250, %p251
      %p253 = scmp.ne.s32.totalorder %s245, %s247
      %p254 = scmp.eq.s32.totalorder %s43, 1
      %p255 = por %p253, %p254
      %p256 = scmp.ne.s32.totalorder %s247, %s248
      %p257 = scmp.eq.s32.totalorder %s43, 0
      %p258 = por %p256, %p257
      %p259 = scmp.ne.s32.totalorder %s247, %s248
      %p260 = scmp.eq.s32.totalorder %s44, 1
      %p261 = por %p259, %p260
      %p263 = scmp.ne.s32.totalorder %s248, %s262
      %p264 = scmp.eq.s32.totalorder %s44, 0
      %p265 = por %p263, %p264
      %s267 = sadd.s32 %s266, 1
      %p270 = scmp.eq.s32.totalorder %s38, 1
      %p271 = scmp.ne.s32.totalorder %s266, %s268
      %p272 = scmp.eq.s32.totalorder %s38, 0
      %p273 = por %p271, %p272
      %p274 = scmp.ne.s32.totalorder %s266, %s268
      %p275 = scmp.eq.s32.totalorder %s43, 1
      %p276 = por %p274, %p275
      %p277 = scmp.ne.s32.totalorder %s268, %s269
      %p278 = scmp.eq.s32.totalorder %s43, 0
      %p279 = por %p277, %p278
      %p280 = scmp.ne.s32.totalorder %s268, %s269
      %p281 = scmp.eq.s32.totalorder %s44, 1
      %p282 = por %p280, %p281
      %p284 = scmp.ne.s32.totalorder %s269, %s283
      %p285 = scmp.eq.s32.totalorder %s44, 0
      %p286 = por %p284, %p285
      %s288 = sadd.s32 %s287, 1
      %p291 = scmp.eq.s32.totalorder %s38, 1
      %p292 = scmp.ne.s32.totalorder %s287, %s289
      %p293 = scmp.eq.s32.totalorder %s38, 0
      %p294 = por %p292, %p293
      %p295 = scmp.ne.s32.totalorder %s287, %s289
      %p296 = scmp.eq.s32.totalorder %s43, 1
      %p297 = por %p295, %p296
      %p298 = scmp.ne.s32.totalorder %s289, %s290
      %p299 = scmp.eq.s32.totalorder %s43, 0
      %p300 = por %p298, %p299
      %p301 = scmp.ne.s32.totalorder %s289, %s290
      %p302 = scmp.eq.s32.totalorder %s44, 1
      %p303 = por %p301, %p302
      %p305 = scmp.ne.s32.totalorder %s290, %s304
      %p306 = scmp.eq.s32.totalorder %s44, 0
      %p307 = por %p305, %p306
      %s309 = sadd.s32 %s308, 1
      %p312 = scmp.eq.s32.totalorder %s38, 1
      %p313 = scmp.ne.s32.totalorder %s308, %s310
      %p314 = scmp.eq.s32.totalorder %s38, 0
      %p315 = por %p313, %p314
      %p316 = scmp.ne.s32.totalorder %s308, %s310
      %p317 = scmp.eq.s32.totalorder %s43, 1
      %p318 = por %p316, %p317
      %p319 = scmp.ne.s32.totalorder %s310, %s311
      %p320 = scmp.eq.s32.totalorder %s43, 0
      %p321 = por %p319, %p320
      %p322 = scmp.ne.s32.totalorder %s310, %s311
      %p323 = scmp.eq.s32.totalorder %s44, 1
      %p324 = por %p322, %p323
      %p326 = scmp.ne.s32.totalorder %s311, %s325
      %p327 = scmp.eq.s32.totalorder %s44, 0
      %p328 = por %p326, %p327
      %s330 = sadd.s32 %s329, 1
      %p333 = scmp.eq.s32.totalorder %s38, 1
      %p334 = scmp.ne.s32.totalorder %s329, %s331
      %p335 = scmp.eq.s32.totalorder %s38, 0
      %p336 = por %p334, %p335
      %p337 = scmp.ne.s32.totalorder %s329, %s331
      %p338 = scmp.eq.s32.totalorder %s43, 1
      %p339 = por %p337, %p338
      %p340 = scmp.ne.s32.totalorder %s331, %s332
      %p341 = scmp.eq.s32.totalorder %s43, 0
      %p342 = por %p340, %p341
      %p343 = scmp.ne.s32.totalorder %s331, %s332
      %p344 = scmp.eq.s32.totalorder %s44, 1
      %p345 = por %p343, %p344
      %p347 = scmp.ne.s32.totalorder %s332, %s346
      %p348 = scmp.eq.s32.totalorder %s44, 0
      %p349 = por %p347, %p348
      %s351 = sadd.s32 %s350, 1
      %p354 = scmp.eq.s32.totalorder %s38, 1
      %p355 = scmp.ne.s32.totalorder %s350, %s352
      %p356 = scmp.eq.s32.totalorder %s38, 0
      %p357 = por %p355, %p356
      %p358 = scmp.ne.s32.totalorder %s350, %s352
      %p359 = scmp.eq.s32.totalorder %s43, 1
      %p360 = por %p358, %p359
      %p361 = scmp.ne.s32.totalorder %s352, %s353
      %p362 = scmp.eq.s32.totalorder %s43, 0
      %p363 = por %p361, %p362
      %p364 = scmp.ne.s32.totalorder %s352, %s353
      %p365 = scmp.eq.s32.totalorder %s44, 1
      %p366 = por %p364, %p365
      %p368 = scmp.ne.s32.totalorder %s353, %s367
      %p369 = scmp.eq.s32.totalorder %s44, 0
      %p370 = por %p368, %p369
      %s372 = sadd.s32 %s371, 1
      %p375 = scmp.eq.s32.totalorder %s38, 1
      %p376 = scmp.ne.s32.totalorder %s371, %s373
      %p377 = scmp.eq.s32.totalorder %s38, 0
      %p378 = por %p376, %p377
      %p379 = scmp.ne.s32.totalorder %s371, %s373
      %p380 = scmp.eq.s32.totalorder %s43, 1
      %p381 = por %p379, %p380
      %p382 = scmp.ne.s32.totalorder %s373, %s374
      %p383 = scmp.eq.s32.totalorder %s43, 0
      %p384 = por %p382, %p383
      %p385 = scmp.ne.s32.totalorder %s373, %s374
      %p386 = scmp.eq.s32.totalorder %s44, 1
      %p387 = por %p385, %p386
      %p389 = scmp.ne.s32.totalorder %s374, %s388
      %p390 = scmp.eq.s32.totalorder %s44, 0
      %p391 = por %p389, %p390
      %s393 = sadd.s32 %s392, 1
      %p396 = scmp.eq.s32.totalorder %s38, 1
      %p397 = scmp.ne.s32.totalorder %s392, %s394
      %p398 = scmp.eq.s32.totalorder %s38, 0
      %p399 = por %p397, %p398
      %p400 = scmp.ne.s32.totalorder %s392, %s394
      %p401 = scmp.eq.s32.totalorder %s43, 1
      %p402 = por %p400, %p401
      %p403 = scmp.ne.s32.totalorder %s394, %s395
      %p404 = scmp.eq.s32.totalorder %s43, 0
      %p405 = por %p403, %p404
      %p406 = scmp.ne.s32.totalorder %s394, %s395
      %p407 = scmp.eq.s32.totalorder %s44, 1
      %p408 = por %p406, %p407
      %p410 = scmp.ne.s32.totalorder %s395, %s409
      %p411 = scmp.eq.s32.totalorder %s44, 0
      %p412 = por %p410, %p411
      %s414 = sadd.s32 %s413, 1
      %p417 = scmp.eq.s32.totalorder %s38, 1
      %p418 = scmp.ne.s32.totalorder %s413, %s415
      %p419 = scmp.eq.s32.totalorder %s38, 0
      %p420 = por %p418, %p419
      %p421 = scmp.ne.s32.totalorder %s413, %s415
      %p422 = scmp.eq.s32.totalorder %s43, 1
      %p423 = por %p421, %p422
      %p424 = scmp.ne.s32.totalorder %s415, %s416
      %p425 = scmp.eq.s32.totalorder %s43, 0
      %p426 = por %p424, %p425
      %p427 = scmp.ne.s32.totalorder %s415, %s416
      %p428 = scmp.eq.s32.totalorder %s44, 1
      %p429 = por %p427, %p428
      %p431 = scmp.ne.s32.totalorder %s416, %s430
      %p432 = scmp.eq.s32.totalorder %s44, 0
      %p433 = por %p431, %p432
      %s435 = sadd.s32 %s434, 1
      %p438 = scmp.eq.s32.totalorder %s38, 1
      %p439 = scmp.ne.s32.totalorder %s434, %s436
      %p440 = scmp.eq.s32.totalorder %s38, 0
      %p441 = por %p439, %p440
      %p442 = scmp.ne.s32.totalorder %s434, %s436
      %p443 = scmp.eq.s32.totalorder %s43, 1
      %p444 = por %p442, %p443
      %p445 = scmp.ne.s32.totalorder %s436, %s437
      %p446 = scmp.eq.s32.totalorder %s43, 0
      %p447 = por %p445, %p446
      %p448 = scmp.ne.s32.totalorder %s436, %s437
      %p449 = scmp.eq.s32.totalorder %s44, 1
      %p450 = por %p448, %p449
      %p452 = scmp.ne.s32.totalorder %s437, %s451
      %p453 = scmp.eq.s32.totalorder %s44, 0
      %p454 = por %p452, %p453
      %s456 = sadd.s32 %s455, 1
      %p459 = scmp.eq.s32.totalorder %s38, 1
      %p460 = scmp.ne.s32.totalorder %s455, %s457
      %p461 = scmp.eq.s32.totalorder %s38, 0
      %p462 = por %p460, %p461
      %p463 = scmp.ne.s32.totalorder %s455, %s457
      %p464 = scmp.eq.s32.totalorder %s43, 1
      %p465 = por %p463, %p464
      %p466 = scmp.ne.s32.totalorder %s457, %s458
      %p467 = scmp.eq.s32.totalorder %s43, 0
      %p468 = por %p466, %p467
      %p469 = scmp.ne.s32.totalorder %s457, %s458
      %p470 = scmp.eq.s32.totalorder %s44, 1
      %p471 = por %p469, %p470
      %p473 = scmp.ne.s32.totalorder %s458, %s472
      %p474 = scmp.eq.s32.totalorder %s44, 0
      %p475 = por %p473, %p474
      %s477 = sadd.s32 %s476, 1
      %p480 = scmp.eq.s32.totalorder %s38, 1
      %p481 = scmp.ne.s32.totalorder %s476, %s478
      %p482 = scmp.eq.s32.totalorder %s38, 0
      %p483 = por %p481, %p482
      %p484 = scmp.ne.s32.totalorder %s476, %s478
      %p485 = scmp.eq.s32.totalorder %s43, 1
      %p486 = por %p484, %p485
      %p487 = scmp.ne.s32.totalorder %s478, %s479
      %p488 = scmp.eq.s32.totalorder %s43, 0
      %p489 = por %p487, %p488
      %p490 = scmp.ne.s32.totalorder %s478, %s479
      %p491 = scmp.eq.s32.totalorder %s44, 1
      %p492 = por %p490, %p491
      %p494 = scmp.ne.s32.totalorder %s479, %s493
      %p495 = scmp.eq.s32.totalorder %s44, 0
      %p496 = por %p494, %p495
      %s498 = sadd.s32 %s497, 1
      %p501 = scmp.eq.s32.totalorder %s38, 1
      %p502 = scmp.ne.s32.totalorder %s497, %s499
      %p503 = scmp.eq.s32.totalorder %s38, 0
      %p504 = por %p502, %p503
      %p505 = scmp.ne.s32.totalorder %s497, %s499
      %p506 = scmp.eq.s32.totalorder %s43, 1
      %p507 = por %p505, %p506
      %p508 = scmp.ne.s32.totalorder %s499, %s500
      %p509 = scmp.eq.s32.totalorder %s43, 0
      %p510 = por %p508, %p509
      %p511 = scmp.ne.s32.totalorder %s499, %s500
      %p512 = scmp.eq.s32.totalorder %s44, 1
      %p513 = por %p511, %p512
      %p515 = scmp.ne.s32.totalorder %s500, %s514
      %p516 = scmp.eq.s32.totalorder %s44, 0
      %p517 = por %p515, %p516
      %s518 = ssub.s32 %s45, %s57
      %s519 = ssub.s32 %s46, %s53
      %s520 = sor.u32 %s518, %s519
      %p521 = scmp.eq.s32.totalorder %s520, 0
      %s523 = sadd.s32 %s522, 1
      %s524 = scalar_select %p521, %s522, %s523
      %p527 = pneg %p521
      %p528 = scmp.eq.s32.totalorder %s38, 1
      %p529 = por %p527, %p528
      %p530 = scmp.ne.s32.totalorder %s522, %s525
      %p531 = scmp.eq.s32.totalorder %s38, 0
      %p532 = por %p530, %p531
      %p533 = scmp.ne.s32.totalorder %s522, %s525
      %p534 = scmp.eq.s32.totalorder %s43, 1
      %p535 = por %p533, %p534
      %p536 = scmp.ne.s32.totalorder %s525, %s526
      %p537 = scmp.eq.s32.totalorder %s43, 0
      %p538 = por %p536, %p537
      %p539 = scmp.ne.s32.totalorder %s525, %s526
      %p540 = scmp.eq.s32.totalorder %s44, 1
      %p541 = por %p539, %p540
      %p543 = scmp.ne.s32.totalorder %s526, %s542
      %p544 = scmp.eq.s32.totalorder %s44, 0
      %p545 = por %p543, %p544
      %p546 = scmp.le.s32.totalorder 1, %s38
      %p547 = scmp.lt.s32.totalorder %s38, 3
      %p548 = pnand %p546, %p547
      %p549 = pneg %p548
      // Predicated region
      $region9: #{tpu_custom_call.1} parent=5 // pred_check
        _
      $region10: #{tpu_custom_call.1} parent=5 // pred_check_branch
        %551 = sbr.rel (%p548) target = $region12
      $region11: #{tpu_custom_call.1} parent=5 // pred_region
        %s552 = ssub.s32 %s38, 1
        // Predicated region
        $region13: #{tpu_custom_call.1} parent=11 // pred_check
          %p553 = pneg %p153
        $region14: #{tpu_custom_call.1} parent=11 // pred_check_branch
          %555 = sbr.rel (%p553) target = $region16
        $region15: #{tpu_custom_call.1} parent=11 // pred_region
          %s557 = ssub.s32 128, 128
          %558 = vsyncadd [#allocation11], %s557
          %s560 = sshll.u32 [#allocation10], 4
          %s561 = int_to_ptr.vmem [resolvable:$true] %s560
          %563 = dma.hbm_to_vmem [thread:$0]  %s3, 128, %s561, [#allocation11]
        $region16: #{tpu_custom_call.1} parent=11 // pred_fallthru
          _
        // Predicated region
        $region17: #{tpu_custom_call.1} parent=11 // pred_check
          %p564 = pneg %p174
        $region18: #{tpu_custom_call.1} parent=11 // pred_check_branch
          %566 = sbr.rel (%p564) target = $region20
        $region19: #{tpu_custom_call.1} parent=11 // pred_region
          %s568 = ssub.s32 128, 128
          %569 = vsyncadd [#allocation11], %s568
          %s571 = sshll.u32 [#allocation12], 4
          %s572 = int_to_ptr.vmem [resolvable:$true] %s571
          %574 = dma.hbm_to_vmem [thread:$0]  %s4, 128, %s572, [#allocation11]
        $region20: #{tpu_custom_call.1} parent=11 // pred_fallthru
          _
        // Predicated region
        $region21: #{tpu_custom_call.1} parent=11 // pred_check
          %p575 = pneg %p195
        $region22: #{tpu_custom_call.1} parent=11 // pred_check_branch
          %577 = sbr.rel (%p575) target = $region24
        $region23: #{tpu_custom_call.1} parent=11 // pred_region
          _
        $region24: #{tpu_custom_call.1} parent=11 // pred_fallthru
          _
        // Predicated region
        $region25: #{tpu_custom_call.1} parent=11 // pred_check
          %p578 = pneg %p216
        $region26: #{tpu_custom_call.1} parent=11 // pred_check_branch
          %580 = sbr.rel (%p578) target = $region28
        $region27: #{tpu_custom_call.1} parent=11 // pred_region
          _
        $region28: #{tpu_custom_call.1} parent=11 // pred_fallthru
          _
        // Predicated region
        $region29: #{tpu_custom_call.1} parent=11 // pred_check
          %p581 = pneg %p237
        $region30: #{tpu_custom_call.1} parent=11 // pred_check_branch
          %583 = sbr.rel (%p581) target = $region32
        $region31: #{tpu_custom_call.1} parent=11 // pred_region
          _
        $region32: #{tpu_custom_call.1} parent=11 // pred_fallthru
          _
        // Predicated region
        $region33: #{tpu_custom_call.1} parent=11 // pred_check
          %p584 = pneg %p258
        $region34: #{tpu_custom_call.1} parent=11 // pred_check_branch
          %586 = sbr.rel (%p584) target = $region36
        $region35: #{tpu_custom_call.1} parent=11 // pred_region
          _
        $region36: #{tpu_custom_call.1} parent=11 // pred_fallthru
          _
        // Predicated region
        $region37: #{tpu_custom_call.1} parent=11 // pred_check
          %p587 = pneg %p279
        $region38: #{tpu_custom_call.1} parent=11 // pred_check_branch
          %589 = sbr.rel (%p587) target = $region40
        $region39: #{tpu_custom_call.1} parent=11 // pred_region
          _
        $region40: #{tpu_custom_call.1} parent=11 // pred_fallthru
          _
        // Predicated region
        $region41: #{tpu_custom_call.1} parent=11 // pred_check
          %p590 = pneg %p300
        $region42: #{tpu_custom_call.1} parent=11 // pred_check_branch
          %592 = sbr.rel (%p590) target = $region44
        $region43: #{tpu_custom_call.1} parent=11 // pred_region
          _
        $region44: #{tpu_custom_call.1} parent=11 // pred_fallthru
          _
        // Predicated region
        $region45: #{tpu_custom_call.1} parent=11 // pred_check
          %p593 = pneg %p321
        $region46: #{tpu_custom_call.1} parent=11 // pred_check_branch
          %595 = sbr.rel (%p593) target = $region48
        $region47: #{tpu_custom_call.1} parent=11 // pred_region
          %s597 = ssub.s32 512, 512
          %598 = vsyncadd [#allocation14], %s597
          %s599 = sshll.u32 [#allocation13], 4
          %s600 = int_to_ptr.vmem [resolvable:$true] %s599
          %605 = dma.hbm_to_vmem [thread:$0]  %s11, 512, %s600, [#allocation14], 128, 128, 8
        $region48: #{tpu_custom_call.1} parent=11 // pred_fallthru
          _
        // Predicated region
        $region49: #{tpu_custom_call.1} parent=11 // pred_check
          %p606 = pneg %p342
        $region50: #{tpu_custom_call.1} parent=11 // pred_check_branch
          %608 = sbr.rel (%p606) target = $region52
        $region51: #{tpu_custom_call.1} parent=11 // pred_region
          _
        $region52: #{tpu_custom_call.1} parent=11 // pred_fallthru
          _
        // Predicated region
        $region53: #{tpu_custom_call.1} parent=11 // pred_check
          %p609 = pneg %p363
        $region54: #{tpu_custom_call.1} parent=11 // pred_check_branch
          %611 = sbr.rel (%p609) target = $region56
        $region55: #{tpu_custom_call.1} parent=11 // pred_region
          _
        $region56: #{tpu_custom_call.1} parent=11 // pred_fallthru
          _
        // Predicated region
        $region57: #{tpu_custom_call.1} parent=11 // pred_check
          %p612 = pneg %p384
        $region58: #{tpu_custom_call.1} parent=11 // pred_check_branch
          %614 = sbr.rel (%p612) target = $region60
        $region59: #{tpu_custom_call.1} parent=11 // pred_region
          _
        $region60: #{tpu_custom_call.1} parent=11 // pred_fallthru
          _
        // Predicated region
        $region61: #{tpu_custom_call.1} parent=11 // pred_check
          %p615 = pneg %p405
        $region62: #{tpu_custom_call.1} parent=11 // pred_check_branch
          %617 = sbr.rel (%p615) target = $region64
        $region63: #{tpu_custom_call.1} parent=11 // pred_region
          %s619 = ssub.s32 512, 512
          %620 = vsyncadd [#allocation14], %s619
          %s621 = sshll.u32 [#allocation15], 4
          %s622 = int_to_ptr.vmem [resolvable:$true] %s621
          %627 = dma.hbm_to_vmem [thread:$0]  %s15, 512, %s622, [#allocation14], 128, 128, 8
        $region64: #{tpu_custom_call.1} parent=11 // pred_fallthru
          _
        // Predicated region
        $region65: #{tpu_custom_call.1} parent=11 // pred_check
          %p628 = pneg %p426
        $region66: #{tpu_custom_call.1} parent=11 // pred_check_branch
          %630 = sbr.rel (%p628) target = $region68
        $region67: #{tpu_custom_call.1} parent=11 // pred_region
          _
        $region68: #{tpu_custom_call.1} parent=11 // pred_fallthru
          _
        // Predicated region
        $region69: #{tpu_custom_call.1} parent=11 // pred_check
          %p631 = pneg %p447
        $region70: #{tpu_custom_call.1} parent=11 // pred_check_branch
          %633 = sbr.rel (%p631) target = $region72
        $region71: #{tpu_custom_call.1} parent=11 // pred_region
          _
        $region72: #{tpu_custom_call.1} parent=11 // pred_fallthru
          _
        // Predicated region
        $region73: #{tpu_custom_call.1} parent=11 // pred_check
          %p634 = pneg %p468
        $region74: #{tpu_custom_call.1} parent=11 // pred_check_branch
          %636 = sbr.rel (%p634) target = $region76
        $region75: #{tpu_custom_call.1} parent=11 // pred_region
          _
        $region76: #{tpu_custom_call.1} parent=11 // pred_fallthru
          _
        // Predicated region
        $region77: #{tpu_custom_call.1} parent=11 // pred_check
          %p637 = pneg %p489
        $region78: #{tpu_custom_call.1} parent=11 // pred_check_branch
          %639 = sbr.rel (%p637) target = $region80
        $region79: #{tpu_custom_call.1} parent=11 // pred_region
          _
        $region80: #{tpu_custom_call.1} parent=11 // pred_fallthru
          _
        // Predicated region
        $region81: #{tpu_custom_call.1} parent=11 // pred_check
          %p640 = pneg %p510
        $region82: #{tpu_custom_call.1} parent=11 // pred_check_branch
          %642 = sbr.rel (%p640) target = $region84
        $region83: #{tpu_custom_call.1} parent=11 // pred_region
          _
        $region84: #{tpu_custom_call.1} parent=11 // pred_fallthru
          _
      $region12: #{tpu_custom_call.1} parent=5 // pred_fallthru
        _
      %p643 = scmp.lt.s32.totalorder %s38, 2
      // Predicated region
      $region85: #{tpu_custom_call.1} parent=5 // pred_check
        %p644 = pneg %p643
      $region86: #{tpu_custom_call.1} parent=5 // pred_check_branch
        %646 = sbr.rel (%p644) target = $region88
      $region87: #{tpu_custom_call.1} parent=5 // pred_region
        // Predicated region
        $region89: #{tpu_custom_call.1} parent=87 // pred_check
          %p647 = pneg %p72
        $region90: #{tpu_custom_call.1} parent=87 // pred_check_branch
          %649 = sbr.rel (%p647) target = $region92
        $region91: #{tpu_custom_call.1} parent=87 // pred_region
          %s650 = sand.u32 %s62, 1
          %s651 = scalar_lea.sflag [#allocation5], %s650
          %s652 = sand.u32 %s62, 1
          %s653 = smul.addr %s652, 8
          %s654 = scalar_lea.vmem [#allocation4], %s653
          %s656 = ssub.s32 128, 128
          %657 = vsyncadd %s651, %s656
          %s658 = sadd.s32 %s46, %s45
          %s659 = smul.addr %s658, 128
          %s660 = scalar_lea.hbm %s0, %s659
          %s662 = sshll.u32 %s654, 4
          %s663 = int_to_ptr.vmem [resolvable:$true] %s662
          %665 = dma.hbm_to_vmem [thread:$0]  %s660, 128, %s663, %s651
        $region92: #{tpu_custom_call.1} parent=87 // pred_fallthru
          _
        // Predicated region
        $region93: #{tpu_custom_call.1} parent=87 // pred_check
          %p666 = pneg %p98
        $region94: #{tpu_custom_call.1} parent=87 // pred_check_branch
          %668 = sbr.rel (%p666) target = $region96
        $region95: #{tpu_custom_call.1} parent=87 // pred_region
          %s669 = sand.u32 %s38, 1
          %s670 = scalar_lea.sflag [#allocation8], %s669
          %s671 = sand.u32 %s88, 1
          %s672 = smul.addr %s671, 8
          %s673 = scalar_lea.vmem [#allocation7], %s672
          %s675 = ssub.s32 128, 128
          %676 = vsyncadd %s670, %s675
          %s677 = smul.addr %s45, 128
          %s678 = scalar_lea.hbm %s1, %s677
          %s680 = sshll.u32 %s673, 4
          %s681 = int_to_ptr.vmem [resolvable:$true] %s680
          %683 = dma.hbm_to_vmem [thread:$0]  %s678, 128, %s681, %s670
        $region96: #{tpu_custom_call.1} parent=87 // pred_fallthru
          _
        // Predicated region
        $region97: #{tpu_custom_call.1} parent=87 // pred_check
          %p684 = pneg %p126
        $region98: #{tpu_custom_call.1} parent=87 // pred_check_branch
          %686 = sbr.rel (%p684) target = $region100
        $region99: #{tpu_custom_call.1} parent=87 // pred_region
          %s687 = sand.u32 %s38, 1
          %s688 = scalar_lea.sflag [#allocation8], %s687
          %s689 = sand.u32 %s116, 1
          %s690 = smul.addr %s689, 2
          %s691 = scalar_lea.vmem [#allocation9], %s690
          %s693 = ssub.s32 32, 32
          %694 = vsyncadd %s688, %s693
          %s695 = sadd.s32 %s46, %s45
          %s696 = smul.addr %s695, 32
          %s697 = scalar_lea.hbm %s2, %s696
          %s699 = sshll.u32 %s691, 4
          %s700 = int_to_ptr.vmem [resolvable:$true] %s699
          %702 = dma.hbm_to_vmem [thread:$0]  %s697, 32, %s700, %s688
        $region100: #{tpu_custom_call.1} parent=87 // pred_fallthru
          _
      $region88: #{tpu_custom_call.1} parent=5 // pred_fallthru
        _
      %p703 = scmp.le.s32.totalorder 1, %s38
      %p704 = scmp.lt.s32.totalorder %s38, 3
      %p705 = pnand %p703, %p704
      %p706 = pneg %p705
      // Predicated region
      $region101: #{tpu_custom_call.1} parent=5 // pred_check
        _
      $region102: #{tpu_custom_call.1} parent=5 // pred_check_branch
        %708 = sbr.rel (%p705) target = $region104
      $region103: #{tpu_custom_call.1} parent=5 // pred_region
        %s709 = ssub.s32 %s38, 1
        %s710 = sand.u32 %s65, 1
        %s711 = scalar_lea.sflag [#allocation5], %s710
        %s712 = sand.u32 %s65, 1
        %s713 = smul.addr %s712, 8
        %s714 = scalar_lea.vmem [#allocation4], %s713
        // Predicated region
        $region105: #{tpu_custom_call.1} parent=103 // pred_check
          %p715 = pneg %p78
        $region106: #{tpu_custom_call.1} parent=103 // pred_check_branch
          %717 = sbr.rel (%p715) target = $region108
        $region107: #{tpu_custom_call.1} parent=103 // pred_region
          %718 = dma.done %s711, 128
        $region108: #{tpu_custom_call.1} parent=103 // pred_fallthru
          _
        %s719 = sand.u32 %s43, 1
        %s720 = scalar_lea.sflag [#allocation8], %s719
        %s721 = sand.u32 %s91, 1
        %s722 = smul.addr %s721, 8
        %s723 = scalar_lea.vmem [#allocation7], %s722
        // Predicated region
        $region109: #{tpu_custom_call.1} parent=103 // pred_check
          %p724 = pneg %p104
        $region110: #{tpu_custom_call.1} parent=103 // pred_check_branch
          %726 = sbr.rel (%p724) target = $region112
        $region111: #{tpu_custom_call.1} parent=103 // pred_region
          %727 = dma.done %s720, 128
        $region112: #{tpu_custom_call.1} parent=103 // pred_fallthru
          _
        %s728 = sand.u32 %s43, 1
        %s729 = scalar_lea.sflag [#allocation8], %s728
        %s730 = sand.u32 %s119, 1
        %s731 = smul.addr %s730, 2
        %s732 = scalar_lea.vmem [#allocation9], %s731
        // Predicated region
        $region113: #{tpu_custom_call.1} parent=103 // pred_check
          %p733 = pneg %p132
        $region114: #{tpu_custom_call.1} parent=103 // pred_check_branch
          %735 = sbr.rel (%p733) target = $region116
        $region115: #{tpu_custom_call.1} parent=103 // pred_region
          %736 = dma.done %s729, 32
        $region116: #{tpu_custom_call.1} parent=103 // pred_fallthru
          _
        // Predicated region
        $region117: #{tpu_custom_call.1} parent=103 // pred_check
          %p737 = pneg %p153
        $region118: #{tpu_custom_call.1} parent=103 // pred_check_branch
          %739 = sbr.rel (%p737) target = $region120
        $region119: #{tpu_custom_call.1} parent=103 // pred_region
          %740 = dma.done [#allocation11], 128
        $region120: #{tpu_custom_call.1} parent=103 // pred_fallthru
          _
        // Predicated region
        $region121: #{tpu_custom_call.1} parent=103 // pred_check
          %p741 = pneg %p174
        $region122: #{tpu_custom_call.1} parent=103 // pred_check_branch
          %743 = sbr.rel (%p741) target = $region124
        $region123: #{tpu_custom_call.1} parent=103 // pred_region
          %744 = dma.done [#allocation11], 128
        $region124: #{tpu_custom_call.1} parent=103 // pred_fallthru
          _
        // Predicated region
        $region125: #{tpu_custom_call.1} parent=103 // pred_check
          %p745 = pneg %p321
        $region126: #{tpu_custom_call.1} parent=103 // pred_check_branch
          %747 = sbr.rel (%p745) target = $region128
        $region127: #{tpu_custom_call.1} parent=103 // pred_region
          %748 = dma.done [#allocation14], 512
        $region128: #{tpu_custom_call.1} parent=103 // pred_fallthru
          _
        // Predicated region
        $region129: #{tpu_custom_call.1} parent=103 // pred_check
          %p749 = pneg %p405
        $region130: #{tpu_custom_call.1} parent=103 // pred_check_branch
          %751 = sbr.rel (%p749) target = $region132
        $region131: #{tpu_custom_call.1} parent=103 // pred_region
          %752 = dma.done [#allocation14], 512
        $region132: #{tpu_custom_call.1} parent=103 // pred_fallthru
          _
        %s753 = sand.u32 %s65, 1
        %s754 = scalar_lea.sflag [#allocation5], %s753
        %s755 = sand.u32 %s65, 1
        %s756 = smul.addr %s755, 8
        %s757 = scalar_lea.vmem [#allocation4], %s756
        %p758 = pneg %p78
        %p759 = pneg %p75
        %s760 = sand.u32 %s43, 1
        %s761 = scalar_lea.sflag [#allocation8], %s760
        %s762 = sand.u32 %s91, 1
        %s763 = smul.addr %s762, 8
        %s764 = scalar_lea.vmem [#allocation7], %s763
        %p765 = pneg %p104
        %p766 = pneg %p101
        %s767 = sand.u32 %s43, 1
        %s768 = scalar_lea.sflag [#allocation8], %s767
        %s769 = sand.u32 %s119, 1
        %s770 = smul.addr %s769, 2
        %s771 = scalar_lea.vmem [#allocation9], %s770
        %p772 = pneg %p132
        %p773 = pneg %p129
        %p774 = pneg %p153
        %p775 = pneg %p150
        %p776 = pneg %p174
        %p777 = pneg %p171
        %p778 = pneg %p195
        %p779 = pneg %p192
        %p780 = pneg %p216
        %p781 = pneg %p213
        %p782 = pneg %p237
        %p783 = pneg %p234
        %p784 = pneg %p258
        %p785 = pneg %p255
        %p786 = pneg %p279
        %p787 = pneg %p276
        %p788 = pneg %p300
        %p789 = pneg %p297
        %p790 = pneg %p321
        %p791 = pneg %p318
        %p792 = pneg %p342
        %p793 = pneg %p339
        %p794 = pneg %p363
        %p795 = pneg %p360
        %p796 = pneg %p384
        %p797 = pneg %p381
        %p798 = pneg %p405
        %p799 = pneg %p402
        %p800 = pneg %p426
        %p801 = pneg %p423
        %p802 = pneg %p447
        %p803 = pneg %p444
        %p804 = pneg %p468
        %p805 = pneg %p465
        %p806 = pneg %p489
        %p807 = pneg %p486
        %p808 = pneg %p510
        %p809 = pneg %p507
        %p810 = pneg %p538
        %p811 = pneg %p535
        %s812 = sand.u32 %s525, 1
        %s813 = scalar_lea.sflag [#allocation6], %s812
        %s814 = sand.u32 %s525, 1
        %s815 = smul.addr %s814, 8
        %s816 = scalar_lea.vmem [#allocation16], %s815
        %p817 = scmp.eq.s32.totalorder %s48, 0
        // Predicated region
        $region133: #{tpu_custom_call.1} parent=103 // pred_check
          %p818 = pneg %p817
        $region134: #{tpu_custom_call.1} parent=103 // pred_check_branch
          %820 = sbr.rel (%p818) target = $region136
        $region135: #{tpu_custom_call.1} parent=103 // pred_region
          %v821 = vld [vmem:[%s723] sm:$0xff]
          %v822 = vld [vmem:[%s7] sm:$0xff]
          %v823 = vld [vmem:[%s7 + $0x8] sm:$0xff]
          %v824 = vld [vmem:[%s7 + $0x10] sm:$0xff]
          %v825 = vld [vmem:[%s7 + $0x18] sm:$0xff]
          %v826 = vld [vmem:[%s8] sm:$0x1]
          %v828 = vlaneseq
          %v829 = vshrl.u32 %v828, 7
          %v830 = vsub.s32 0, %v829
          %v831 = vrot.slane %v826, %v830
          %vm833 = vcmask 261120
          %v835 = vsel %vm833, %v821, 0
          %837 = vmatprep.subr.mxu0 0.0
          %838 = vmatpush1.msra.mxu0 0.0
          %839 = vmatprep.subr.mxu0 0.0
          %840 = vmatpush1.msra.mxu0 0.0
          %841 = vmatprep.subr.mxu0 0.0
          %842 = vmatpush1.msra.mxu0 0.0
          %843 = vmatprep.subr.mxu0 0.0
          %844 = vmatpush1.msra.mxu0 0.0
          %845 = vmatprep.subr.mxu0 0.0
          %846 = vmatpush1.msra.mxu0 0.0
          %847 = vmatprep.subr.mxu0 0.0
          %848 = vmatpush1.msra.mxu0 0.0
          %849 = vmatprep.subr.mxu0 0.0
          %850 = vmatpush1.msra.mxu0 0.0
          %851 = vmatprep.subr.mxu0 0.0
          %852 = vmatpush1.msra.mxu0 0.0
          %853 = vmatprep.subr.mxu0 0.0
          %854 = vmatpush1.msra.mxu0 0.0
          %855 = vmatprep.subr.mxu0 0.0
          %856 = vmatpush1.msra.mxu0 0.0
          %857 = vmatprep.subr.mxu0 0.0
          %858 = vmatpush1.msra.mxu0 0.0
          %859 = vmatprep.subr.mxu0 0.0
          %860 = vmatpush1.msra.mxu0 0.0
          %861 = vmatprep.subr.mxu0 0.0
          %862 = vmatpush1.msra.mxu0 %v825
          %863 = vmatprep.subr.mxu0 0.0
          %864 = vmatpush1.msra.mxu0 %v824
          %865 = vmatprep.subr.mxu0 0.0
          %866 = vmatpush1.msra.mxu0 %v823
          %867 = vmatprep.subr.mxu0 0.0
          %868 = vmatpush1.msra.mxu0 %v822
          %869 = vmatprep.subr.mxu0 0.0
          %870 = vmatpush2.msra.mxu0 0.0
          %871 = vmatprep.subr.mxu0 0.0
          %872 = vmatpush2.msra.mxu0 0.0
          %873 = vmatprep.subr.mxu0 0.0
          %874 = vmatpush2.msra.mxu0 0.0
          %875 = vmatprep.subr.mxu0 0.0
          %876 = vmatpush2.msra.mxu0 0.0
          %877 = vmatprep.subr.mxu0 0.0
          %878 = vmatpush2.msra.mxu0 0.0
          %879 = vmatprep.subr.mxu0 0.0
          %880 = vmatpush2.msra.mxu0 0.0
          %881 = vmatprep.subr.mxu0 0.0
          %882 = vmatpush2.msra.mxu0 0.0
          %883 = vmatprep.subr.mxu0 0.0
          %884 = vmatpush2.msra.mxu0 0.0
          %885 = vmatprep.subr.mxu0 0.0
          %886 = vmatpush2.msra.mxu0 0.0
          %887 = vmatprep.subr.mxu0 0.0
          %888 = vmatpush2.msra.mxu0 0.0
          %889 = vmatprep.subr.mxu0 0.0
          %890 = vmatpush2.msra.mxu0 0.0
          %891 = vmatprep.subr.mxu0 0.0
          %892 = vmatpush2.msra.mxu0 0.0
          %893 = vmatprep.subr.mxu0 0.0
          %894 = vmatpush2.msra.mxu0 0.0
          %895 = vmatprep.subr.mxu0 0.0
          %896 = vmatpush2.msra.mxu0 0.0
          %897 = vmatprep.subr.mxu0 0.0
          %898 = vmatpush2.msra.mxu0 0.0
          %899 = vmatprep.subr.mxu0 0.0
          %900 = vmatpush2.msra.mxu0 0.0
          %901 = vmatprep.mubr.f32.mxu0 0.0
          %902 = vmatmul.mubr.f32.gmra.mxu0 %v835
          %v903 = vpop.f32.mrf.mxu0
          %v904 = vadd.f32 %v831, %v903
          %v905 = vpop.f32.mrf.mxu0
          %906 = vdwg.mxu0
          %907 = vst.msk [vmem:[#allocation2] sm:$0xff] %vm833, %v904
          %v908 = vld [vmem:[%s9] sm:$0xff]
          %v909 = vld [vmem:[%s9 + $0x8] sm:$0xff]
          %v910 = vld [vmem:[%s9 + $0x10] sm:$0xff]
          %v911 = vld [vmem:[%s9 + $0x18] sm:$0xff]
          %v912 = vld [vmem:[%s10] sm:$0x1]
          %v914 = vlaneseq
          %v915 = vshrl.u32 %v914, 7
          %v916 = vsub.s32 0, %v915
          %v917 = vrot.slane %v912, %v916
          %919 = vmatprep.subr.mxu0 0.0
          %920 = vmatpush1.msra.mxu0 0.0
          %921 = vmatprep.subr.mxu0 0.0
          %922 = vmatpush1.msra.mxu0 0.0
          %923 = vmatprep.subr.mxu0 0.0
          %924 = vmatpush1.msra.mxu0 0.0
          %925 = vmatprep.subr.mxu0 0.0
          %926 = vmatpush1.msra.mxu0 0.0
          %927 = vmatprep.subr.mxu0 0.0
          %928 = vmatpush1.msra.mxu0 0.0
          %929 = vmatprep.subr.mxu0 0.0
          %930 = vmatpush1.msra.mxu0 0.0
          %931 = vmatprep.subr.mxu0 0.0
          %932 = vmatpush1.msra.mxu0 0.0
          %933 = vmatprep.subr.mxu0 0.0
          %934 = vmatpush1.msra.mxu0 0.0
          %935 = vmatprep.subr.mxu0 0.0
          %936 = vmatpush1.msra.mxu0 0.0
          %937 = vmatprep.subr.mxu0 0.0
          %938 = vmatpush1.msra.mxu0 0.0
          %939 = vmatprep.subr.mxu0 0.0
          %940 = vmatpush1.msra.mxu0 0.0
          %941 = vmatprep.subr.mxu0 0.0
          %942 = vmatpush1.msra.mxu0 0.0
          %943 = vmatprep.subr.mxu0 0.0
          %944 = vmatpush1.msra.mxu0 %v911
          %945 = vmatprep.subr.mxu0 0.0
          %946 = vmatpush1.msra.mxu0 %v910
          %947 = vmatprep.subr.mxu0 0.0
          %948 = vmatpush1.msra.mxu0 %v909
          %949 = vmatprep.subr.mxu0 0.0
          %950 = vmatpush1.msra.mxu0 %v908
          %951 = vmatprep.subr.mxu0 0.0
          %952 = vmatpush2.msra.mxu0 0.0
          %953 = vmatprep.subr.mxu0 0.0
          %954 = vmatpush2.msra.mxu0 0.0
          %955 = vmatprep.subr.mxu0 0.0
          %956 = vmatpush2.msra.mxu0 0.0
          %957 = vmatprep.subr.mxu0 0.0
          %958 = vmatpush2.msra.mxu0 0.0
          %959 = vmatprep.subr.mxu0 0.0
          %960 = vmatpush2.msra.mxu0 0.0
          %961 = vmatprep.subr.mxu0 0.0
          %962 = vmatpush2.msra.mxu0 0.0
          %963 = vmatprep.subr.mxu0 0.0
          %964 = vmatpush2.msra.mxu0 0.0
          %965 = vmatprep.subr.mxu0 0.0
          %966 = vmatpush2.msra.mxu0 0.0
          %967 = vmatprep.subr.mxu0 0.0
          %968 = vmatpush2.msra.mxu0 0.0
          %969 = vmatprep.subr.mxu0 0.0
          %970 = vmatpush2.msra.mxu0 0.0
          %971 = vmatprep.subr.mxu0 0.0
          %972 = vmatpush2.msra.mxu0 0.0
          %973 = vmatprep.subr.mxu0 0.0
          %974 = vmatpush2.msra.mxu0 0.0
          %975 = vmatprep.subr.mxu0 0.0
          %976 = vmatpush2.msra.mxu0 0.0
          %977 = vmatprep.subr.mxu0 0.0
          %978 = vmatpush2.msra.mxu0 0.0
          %979 = vmatprep.subr.mxu0 0.0
          %980 = vmatpush2.msra.mxu0 0.0
          %981 = vmatprep.subr.mxu0 0.0
          %982 = vmatpush2.msra.mxu0 0.0
          %983 = vmatprep.mubr.f32.mxu0 0.0
          %984 = vmatmul.mubr.f32.gmra.mxu0 %v835
          %v985 = vpop.f32.mrf.mxu0
          %v986 = vadd.f32 %v917, %v985
          %v987 = vpop.f32.mrf.mxu0
          %988 = vdwg.mxu0
          %989 = vst.msk [vmem:[#allocation3] sm:$0xff] %vm833, %v986
        $region136: #{tpu_custom_call.1} parent=103 // pred_fallthru
          _
        %v990 = vld [vmem:[%s714] sm:$0xff]
        %v991 = vld [vmem:[%s732] sm:$0x3]
        %v992 = vunpack.c.0.s8 %v991
        %vm993 = vcmp.lt.s32.totalorder %v992, 0
        %v994 = vsel %vm993, -1e+09, 0.0
        %vm995 = vcmp.eq.s32.totalorder %v992, 0
        %vm996 = vcmp.eq.s32.totalorder %v992, 1
        %vm997 = vcmp.eq.s32.totalorder %v992, 2
        %vm998 = vcmp.eq.s32.totalorder %v992, 3
        %vm999 = vcmp.eq.s32.totalorder %v992, 4
        %v1000 = vld [vmem:[%s5] sm:$0xff]
        %v1001 = vld [vmem:[%s5 + $0x8] sm:$0xff]
        %v1002 = vld [vmem:[%s5 + $0x10] sm:$0xff]
        %v1003 = vld [vmem:[%s5 + $0x18] sm:$0xff]
        %v1004 = vld [vmem:[%s6] sm:$0x1]
        %v1006 = vlaneseq
        %v1007 = vshrl.u32 %v1006, 7
        %v1008 = vsub.s32 0, %v1007
        %v1009 = vrot.slane %v1004, %v1008
        %vm1011 = vcmask 261120
        %v1013 = vsel %vm1011, %v990, 0
        %1015 = vmatprep.subr.mxu0 0.0
        %1016 = vmatpush1.msra.mxu0 0.0
        %1017 = vmatprep.subr.mxu0 0.0
        %1018 = vmatpush1.msra.mxu0 0.0
        %1019 = vmatprep.subr.mxu0 0.0
        %1020 = vmatpush1.msra.mxu0 0.0
        %1021 = vmatprep.subr.mxu0 0.0
        %1022 = vmatpush1.msra.mxu0 0.0
        %1023 = vmatprep.subr.mxu0 0.0
        %1024 = vmatpush1.msra.mxu0 0.0
        %1025 = vmatprep.subr.mxu0 0.0
        %1026 = vmatpush1.msra.mxu0 0.0
        %1027 = vmatprep.subr.mxu0 0.0
        %1028 = vmatpush1.msra.mxu0 0.0
        %1029 = vmatprep.subr.mxu0 0.0
        %1030 = vmatpush1.msra.mxu0 0.0
        %1031 = vmatprep.subr.mxu0 0.0
        %1032 = vmatpush1.msra.mxu0 0.0
        %1033 = vmatprep.subr.mxu0 0.0
        %1034 = vmatpush1.msra.mxu0 0.0
        %1035 = vmatprep.subr.mxu0 0.0
        %1036 = vmatpush1.msra.mxu0 0.0
        %1037 = vmatprep.subr.mxu0 0.0
        %1038 = vmatpush1.msra.mxu0 0.0
        %1039 = vmatprep.subr.mxu0 0.0
        %1040 = vmatpush1.msra.mxu0 %v1003
        %1041 = vmatprep.subr.mxu0 0.0
        %1042 = vmatpush1.msra.mxu0 %v1002
        %1043 = vmatprep.subr.mxu0 0.0
        %1044 = vmatpush1.msra.mxu0 %v1001
        %1045 = vmatprep.subr.mxu0 0.0
        %1046 = vmatpush1.msra.mxu0 %v1000
        %1047 = vmatprep.subr.mxu0 0.0
        %1048 = vmatpush2.msra.mxu0 0.0
        %1049 = vmatprep.subr.mxu0 0.0
        %1050 = vmatpush2.msra.mxu0 0.0
        %1051 = vmatprep.subr.mxu0 0.0
        %1052 = vmatpush2.msra.mxu0 0.0
        %1053 = vmatprep.subr.mxu0 0.0
        %1054 = vmatpush2.msra.mxu0 0.0
        %1055 = vmatprep.subr.mxu0 0.0
        %1056 = vmatpush2.msra.mxu0 0.0
        %1057 = vmatprep.subr.mxu0 0.0
        %1058 = vmatpush2.msra.mxu0 0.0
        %1059 = vmatprep.subr.mxu0 0.0
        %1060 = vmatpush2.msra.mxu0 0.0
        %1061 = vmatprep.subr.mxu0 0.0
        %1062 = vmatpush2.msra.mxu0 0.0
        %1063 = vmatprep.subr.mxu0 0.0
        %1064 = vmatpush2.msra.mxu0 0.0
        %1065 = vmatprep.subr.mxu0 0.0
        %1066 = vmatpush2.msra.mxu0 0.0
        %1067 = vmatprep.subr.mxu0 0.0
        %1068 = vmatpush2.msra.mxu0 0.0
        %1069 = vmatprep.subr.mxu0 0.0
        %1070 = vmatpush2.msra.mxu0 0.0
        %1071 = vmatprep.subr.mxu0 0.0
        %1072 = vmatpush2.msra.mxu0 0.0
        %1073 = vmatprep.subr.mxu0 0.0
        %1074 = vmatpush2.msra.mxu0 0.0
        %1075 = vmatprep.subr.mxu0 0.0
        %1076 = vmatpush2.msra.mxu0 0.0
        %1077 = vmatprep.subr.mxu0 0.0
        %1078 = vmatpush2.msra.mxu0 0.0
        %1079 = vmatprep.mubr.f32.mxu0 0.0
        %1080 = vmatmul.mubr.f32.gmra.mxu0 %v1013
        %v1081 = vpop.f32.mrf.mxu0
        %v1082 = vadd.f32 %v1009, %v1081
        %v1083 = vpop.f32.mrf.mxu0
        %1084 = vdwg.mxu0
        %v1085 = vmul.f32 %v1082, 0.35355338
        %v1086 = vld [vmem:[#allocation12] sm:$0x1f]
        %v1087 = vld [vmem:[#allocation2] sm:$0xff]
        %v1088 = vld [vmem:[#allocation3] sm:$0xff]
        %v1089 = vld [vmem:[#allocation10] sm:$0xff]
        %vm1090 = vcmask 64512
        %v1092 = vsel %vm1090, %v1085, 0
        %1094 = vmatprep.subr.mxu0 0.0
        %1095 = vmatpush1.msra.mxu0 0.0
        %1096 = vmatprep.subr.mxu0 0.0
        %1097 = vmatpush1.msra.mxu0 0.0
        %1098 = vmatprep.subr.mxu0 0.0
        %1099 = vmatpush1.msra.mxu0 0.0
        %1100 = vmatprep.subr.mxu0 0.0
        %1101 = vmatpush1.msra.mxu0 0.0
        %1102 = vmatprep.subr.mxu0 0.0
        %1103 = vmatpush1.msra.mxu0 0.0
        %1104 = vmatprep.subr.mxu0 0.0
        %1105 = vmatpush1.msra.mxu0 0.0
        %1106 = vmatprep.subr.mxu0 0.0
        %1107 = vmatpush1.msra.mxu0 0.0
        %1108 = vmatprep.subr.mxu0 0.0
        %1109 = vmatpush1.msra.mxu0 0.0
        %1110 = vmatprep.subr.mxu0 0.0
        %1111 = vmatpush1.msra.mxu0 0.0
        %1112 = vmatprep.subr.mxu0 0.0
        %1113 = vmatpush1.msra.mxu0 0.0
        %1114 = vmatprep.subr.mxu0 0.0
        %1115 = vmatpush1.msra.mxu0 0.0
        %1116 = vmatprep.subr.mxu0 0.0
        %1117 = vmatpush1.msra.mxu0 0.0
        %1118 = vmatprep.subr.mxu0 0.0
        %1119 = vmatpush1.msra.mxu0 0.0
        %1120 = vmatprep.subr.mxu0 0.0
        %1121 = vmatpush1.msra.mxu0 0.0
        %1122 = vmatprep.subr.mxu0 0.0
        %1123 = vmatpush1.msra.mxu0 0.0
        %1124 = vmatprep.subr.mxu0 0.0
        %1125 = vmatpush1.msra.mxu0 %v1089
        %1126 = vmatprep.subr.mxu0 0.0
        %1127 = vmatpush2.msra.mxu0 0.0
        %1128 = vmatprep.subr.mxu0 0.0
        %1129 = vmatpush2.msra.mxu0 0.0
        %1130 = vmatprep.subr.mxu0 0.0
        %1131 = vmatpush2.msra.mxu0 0.0
        %1132 = vmatprep.subr.mxu0 0.0
        %1133 = vmatpush2.msra.mxu0 0.0
        %1134 = vmatprep.subr.mxu0 0.0
        %1135 = vmatpush2.msra.mxu0 0.0
        %1136 = vmatprep.subr.mxu0 0.0
        %1137 = vmatpush2.msra.mxu0 0.0
        %1138 = vmatprep.subr.mxu0 0.0
        %1139 = vmatpush2.msra.mxu0 0.0
        %1140 = vmatprep.subr.mxu0 0.0
        %1141 = vmatpush2.msra.mxu0 0.0
        %1142 = vmatprep.subr.mxu0 0.0
        %1143 = vmatpush2.msra.mxu0 0.0
        %1144 = vmatprep.subr.mxu0 0.0
        %1145 = vmatpush2.msra.mxu0 0.0
        %1146 = vmatprep.subr.mxu0 0.0
        %1147 = vmatpush2.msra.mxu0 0.0
        %1148 = vmatprep.subr.mxu0 0.0
        %1149 = vmatpush2.msra.mxu0 0.0
        %1150 = vmatprep.subr.mxu0 0.0
        %1151 = vmatpush2.msra.mxu0 0.0
        %1152 = vmatprep.subr.mxu0 0.0
        %1153 = vmatpush2.msra.mxu0 0.0
        %1154 = vmatprep.subr.mxu0 0.0
        %1155 = vmatpush2.msra.mxu0 0.0
        %1156 = vmatprep.subr.mxu0 0.0
        %1157 = vmatpush2.msra.mxu0 0.0
        %1158 = vmatprep.mubr.f32.mxu0 0.0
        %1159 = vmatmul.mubr.f32.gmra.mxu0 %v1092
        %v1160 = vpop.f32.mrf.mxu0
        %v1161 = vadd.f32 0.0, %v1160
        %v1162 = vpop.f32.mrf.mxu0
        %1163 = vdwg.mxu0
        %1165 = vset.pattern.permute.xlu0 1
        %1166 = vperm.xlu0 %1165, %v1161
        %v1167 = vpop.permute.xlu0 %1166
        %1169 = vset.pattern.permute.xlu0 0
        %1170 = vperm.xlu0 %1169, %v1161
        %v1171 = vpop.permute.xlu0 %1170
        %v1173 = vsel %vm996, %v1167, %v1171
        %1174 = vset.pattern.permute.xlu0 2
        %1175 = vperm.xlu0 %1174, %v1161
        %v1176 = vpop.permute.xlu0 %1175
        %v1178 = vsel %vm997, %v1176, %v1173
        %1179 = vset.pattern.permute.xlu0 3
        %1180 = vperm.xlu0 %1179, %v1161
        %v1181 = vpop.permute.xlu0 %1180
        %v1183 = vsel %vm998, %v1181, %v1178
        %1184 = vset.pattern.permute.xlu0 4
        %1185 = vperm.xlu0 %1184, %v1161
        %v1186 = vpop.permute.xlu0 %1185
        %v1188 = vsel %vm999, %v1186, %v1183
        %v1190 = vsel %vm1090, %v1087, 0
        %1192 = vmatprep.subr.mxu0 0.0
        %1193 = vmatpush1.xpose.msra.mxu0 0.0
        %1194 = vmatprep.subr.mxu0 0.0
        %1195 = vmatpush1.xpose.msra.mxu0 0.0
        %1196 = vmatprep.subr.mxu0 0.0
        %1197 = vmatpush1.xpose.msra.mxu0 0.0
        %1198 = vmatprep.subr.mxu0 0.0
        %1199 = vmatpush1.xpose.msra.mxu0 0.0
        %1200 = vmatprep.subr.mxu0 0.0
        %1201 = vmatpush1.xpose.msra.mxu0 0.0
        %1202 = vmatprep.subr.mxu0 0.0
        %1203 = vmatpush1.xpose.msra.mxu0 0.0
        %1204 = vmatprep.subr.mxu0 0.0
        %1205 = vmatpush1.xpose.msra.mxu0 0.0
        %1206 = vmatprep.subr.mxu0 0.0
        %1207 = vmatpush1.xpose.msra.mxu0 0.0
        %1208 = vmatprep.subr.mxu0 0.0
        %1209 = vmatpush1.xpose.msra.mxu0 0.0
        %1210 = vmatprep.subr.mxu0 0.0
        %1211 = vmatpush1.xpose.msra.mxu0 0.0
        %1212 = vmatprep.subr.mxu0 0.0
        %1213 = vmatpush1.xpose.msra.mxu0 0.0
        %1214 = vmatprep.subr.mxu0 0.0
        %1215 = vmatpush1.xpose.msra.mxu0 0.0
        %1216 = vmatprep.subr.mxu0 0.0
        %1217 = vmatpush1.xpose.msra.mxu0 0.0
        %1218 = vmatprep.subr.mxu0 0.0
        %1219 = vmatpush1.xpose.msra.mxu0 0.0
        %1220 = vmatprep.subr.mxu0 0.0
        %1221 = vmatpush1.xpose.msra.mxu0 0.0
        %1222 = vmatprep.subr.mxu0 0.0
        %1223 = vmatpush1.xpose.msra.mxu0 %v1190
        %1224 = vmatprep.subr.mxu0 0.0
        %1225 = vmatpush2.xpose.msra.mxu0 0.0
        %1226 = vmatprep.subr.mxu0 0.0
        %1227 = vmatpush2.xpose.msra.mxu0 0.0
        %1228 = vmatprep.subr.mxu0 0.0
        %1229 = vmatpush2.xpose.msra.mxu0 0.0
        %1230 = vmatprep.subr.mxu0 0.0
        %1231 = vmatpush2.xpose.msra.mxu0 0.0
        %1232 = vmatprep.subr.mxu0 0.0
        %1233 = vmatpush2.xpose.msra.mxu0 0.0
        %1234 = vmatprep.subr.mxu0 0.0
        %1235 = vmatpush2.xpose.msra.mxu0 0.0
        %1236 = vmatprep.subr.mxu0 0.0
        %1237 = vmatpush2.xpose.msra.mxu0 0.0
        %1238 = vmatprep.subr.mxu0 0.0
        %1239 = vmatpush2.xpose.msra.mxu0 0.0
        %1240 = vmatprep.subr.mxu0 0.0
        %1241 = vmatpush2.xpose.msra.mxu0 0.0
        %1242 = vmatprep.subr.mxu0 0.0
        %1243 = vmatpush2.xpose.msra.mxu0 0.0
        %1244 = vmatprep.subr.mxu0 0.0
        %1245 = vmatpush2.xpose.msra.mxu0 0.0
        %1246 = vmatprep.subr.mxu0 0.0
        %1247 = vmatpush2.xpose.msra.mxu0 0.0
        %1248 = vmatprep.subr.mxu0 0.0
        %1249 = vmatpush2.xpose.msra.mxu0 0.0
        %1250 = vmatprep.subr.mxu0 0.0
        %1251 = vmatpush2.xpose.msra.mxu0 0.0
        %1252 = vmatprep.subr.mxu0 0.0
        %1253 = vmatpush2.xpose.msra.mxu0 0.0
        %1254 = vmatprep.subr.mxu0 0.0
        %1255 = vmatpush2.xpose.msra.mxu0 0.0
        %1256 = vmatprep.mubr.f32.mxu0 0.0
        %1257 = vmatmul.mubr.f32.gmra.mxu0 %v1092
        %v1258 = vpop.f32.mrf.mxu0
        %v1259 = vadd.f32 %v1188, %v1258
        %v1260 = vpop.f32.mrf.mxu0
        %1261 = vdwg.mxu0
        %v1262 = vadd.f32 %v1259, %v994
        %v1263 = vsel %vm1090, %v1262, -inf
        %1264 = vmax.xlane.f32.xlu0 %v1263
        %v1265 = vpop.xlane.xlu0 %1264
        %v1266 = vsub.f32 %v1262, %v1265
        %v1267 = vmul.f32 %v1266, 1.442695
        %v1268 = vpow.pop %v1267
        %v1269 = vsel %vm1090, %v1268, 0.0
        %1270 = vadd.xlane.f32.xlu0 %v1269
        %v1271 = vpop.xlane.xlu0 %1270
        %v1272 = vsel %vm995, %v1268, 0.0
        %v1273 = vsel %vm1090, %v1272, 0.0
        %1274 = vadd.xlane.f32.xlu0 %v1273
        %v1275 = vpop.xlane.xlu0 %1274
        %v1276 = vlaneseq
        %v1277 = vshrl.u32 %v1276, 7
        %v1278 = vsub.s32 0, %v1277
        %v1279 = vrot.slane %v1086, %v1278
        %v1280 = vmul.f32 %v1275, %v1279
        %v1282 = vsel %vm1090, %v1268, 0
        %1284 = vmatprep.subr.mxu0 0.0
        %1285 = vmatpush1.msra.mxu0 0.0
        %1286 = vmatprep.subr.mxu0 0.0
        %1287 = vmatpush1.msra.mxu0 0.0
        %1288 = vmatprep.subr.mxu0 0.0
        %1289 = vmatpush1.msra.mxu0 0.0
        %1290 = vmatprep.subr.mxu0 0.0
        %1291 = vmatpush1.msra.mxu0 0.0
        %1292 = vmatprep.subr.mxu0 0.0
        %1293 = vmatpush1.msra.mxu0 0.0
        %1294 = vmatprep.subr.mxu0 0.0
        %1295 = vmatpush1.msra.mxu0 0.0
        %1296 = vmatprep.subr.mxu0 0.0
        %1297 = vmatpush1.msra.mxu0 0.0
        %1298 = vmatprep.subr.mxu0 0.0
        %1299 = vmatpush1.msra.mxu0 0.0
        %1300 = vmatprep.subr.mxu0 0.0
        %1301 = vmatpush1.msra.mxu0 0.0
        %1302 = vmatprep.subr.mxu0 0.0
        %1303 = vmatpush1.msra.mxu0 0.0
        %1304 = vmatprep.subr.mxu0 0.0
        %1305 = vmatpush1.msra.mxu0 0.0
        %1306 = vmatprep.subr.mxu0 0.0
        %1307 = vmatpush1.msra.mxu0 0.0
        %1308 = vmatprep.subr.mxu0 0.0
        %1309 = vmatpush1.msra.mxu0 0.0
        %1310 = vmatprep.subr.mxu0 0.0
        %1311 = vmatpush1.msra.mxu0 0.0
        %1312 = vmatprep.subr.mxu0 0.0
        %1313 = vmatpush1.msra.mxu0 0.0
        %1314 = vmatprep.subr.mxu0 0.0
        %1315 = vmatpush1.msra.mxu0 %v1088
        %1316 = vmatprep.subr.mxu0 0.0
        %1317 = vmatpush2.msra.mxu0 0.0
        %1318 = vmatprep.subr.mxu0 0.0
        %1319 = vmatpush2.msra.mxu0 0.0
        %1320 = vmatprep.subr.mxu0 0.0
        %1321 = vmatpush2.msra.mxu0 0.0
        %1322 = vmatprep.subr.mxu0 0.0
        %1323 = vmatpush2.msra.mxu0 0.0
        %1324 = vmatprep.subr.mxu0 0.0
        %1325 = vmatpush2.msra.mxu0 0.0
        %1326 = vmatprep.subr.mxu0 0.0
        %1327 = vmatpush2.msra.mxu0 0.0
        %1328 = vmatprep.subr.mxu0 0.0
        %1329 = vmatpush2.msra.mxu0 0.0
        %1330 = vmatprep.subr.mxu0 0.0
        %1331 = vmatpush2.msra.mxu0 0.0
        %1332 = vmatprep.subr.mxu0 0.0
        %1333 = vmatpush2.msra.mxu0 0.0
        %1334 = vmatprep.subr.mxu0 0.0
        %1335 = vmatpush2.msra.mxu0 0.0
        %1336 = vmatprep.subr.mxu0 0.0
        %1337 = vmatpush2.msra.mxu0 0.0
        %1338 = vmatprep.subr.mxu0 0.0
        %1339 = vmatpush2.msra.mxu0 0.0
        %1340 = vmatprep.subr.mxu0 0.0
        %1341 = vmatpush2.msra.mxu0 0.0
        %1342 = vmatprep.subr.mxu0 0.0
        %1343 = vmatpush2.msra.mxu0 0.0
        %1344 = vmatprep.subr.mxu0 0.0
        %1345 = vmatpush2.msra.mxu0 0.0
        %1346 = vmatprep.subr.mxu0 0.0
        %1347 = vmatpush2.msra.mxu0 0.0
        %1348 = vmatprep.mubr.f32.mxu0 0.0
        %1349 = vmatmul.mubr.f32.gmra.mxu0 %v1282
        %v1350 = vpop.f32.mrf.mxu0
        %v1351 = vadd.f32 %v1280, %v1350
        %v1352 = vpop.f32.mrf.mxu0
        %1353 = vdwg.mxu0
        %v1354 = vsel %vm996, %v1268, 0.0
        %v1355 = vsel %vm1090, %v1354, 0.0
        %1356 = vadd.xlane.f32.xlu0 %v1355
        %v1357 = vpop.xlane.xlu0 %1356
        %v1358 = vlaneseq
        %v1359 = vshrl.u32 %v1358, 7
        %v1360 = vsub.s32 1, %v1359
        %v1361 = vrot.slane %v1086, %v1360
        %v1362 = vmul.f32 %v1357, %v1361
        %v1363 = vadd.f32 %v1351, %v1362
        %v1364 = vsel %vm997, %v1268, 0.0
        %v1365 = vsel %vm1090, %v1364, 0.0
        %1366 = vadd.xlane.f32.xlu0 %v1365
        %v1367 = vpop.xlane.xlu0 %1366
        %v1368 = vlaneseq
        %v1369 = vshrl.u32 %v1368, 7
        %v1370 = vsub.s32 2, %v1369
        %v1371 = vrot.slane %v1086, %v1370
        %v1372 = vmul.f32 %v1367, %v1371
        %v1373 = vadd.f32 %v1363, %v1372
        %v1374 = vsel %vm998, %v1268, 0.0
        %v1375 = vsel %vm1090, %v1374, 0.0
        %1376 = vadd.xlane.f32.xlu0 %v1375
        %v1377 = vpop.xlane.xlu0 %1376
        %v1378 = vlaneseq
        %v1379 = vshrl.u32 %v1378, 7
        %v1380 = vsub.s32 3, %v1379
        %v1381 = vrot.slane %v1086, %v1380
        %v1382 = vmul.f32 %v1377, %v1381
        %v1383 = vadd.f32 %v1373, %v1382
        %v1384 = vsel %vm999, %v1268, 0.0
        %v1385 = vsel %vm1090, %v1384, 0.0
        %1386 = vadd.xlane.f32.xlu0 %v1385
        %v1387 = vpop.xlane.xlu0 %1386
        %v1388 = vlaneseq
        %v1389 = vshrl.u32 %v1388, 7
        %v1390 = vsub.s32 4, %v1389
        %v1391 = vrot.slane %v1086, %v1390
        %v1392 = vmul.f32 %v1387, %v1391
        %v1393 = vadd.f32 %v1383, %v1392
        %v1394 = vrcp.pop %v1271
        %v1395 = vmul.f32 %v1393, %v1394
        %v1396 = vld [vmem:[#allocation13] sm:$0xff]
        %1397 = vrot.lane.b32.xlu0 %v1085, 120
        %v1398 = vpop.permute.xlu0 %1397
        %v1399 = vsel %vm1090, %v1398, 0
        %1401 = vmatprep.subr.mxu0 0.0
        %1402 = vmatpush1.msra.mxu0 0.0
        %1403 = vmatprep.subr.mxu0 0.0
        %1404 = vmatpush1.msra.mxu0 0.0
        %1405 = vmatprep.subr.mxu0 0.0
        %1406 = vmatpush1.msra.mxu0 0.0
        %1407 = vmatprep.subr.mxu0 0.0
        %1408 = vmatpush1.msra.mxu0 0.0
        %1409 = vmatprep.subr.mxu0 0.0
        %1410 = vmatpush1.msra.mxu0 0.0
        %1411 = vmatprep.subr.mxu0 0.0
        %1412 = vmatpush1.msra.mxu0 0.0
        %1413 = vmatprep.subr.mxu0 0.0
        %1414 = vmatpush1.msra.mxu0 0.0
        %1415 = vmatprep.subr.mxu0 0.0
        %1416 = vmatpush1.msra.mxu0 0.0
        %1417 = vmatprep.subr.mxu0 0.0
        %1418 = vmatpush1.msra.mxu0 0.0
        %1419 = vmatprep.subr.mxu0 0.0
        %1420 = vmatpush1.msra.mxu0 0.0
        %1421 = vmatprep.subr.mxu0 0.0
        %1422 = vmatpush1.msra.mxu0 0.0
        %1423 = vmatprep.subr.mxu0 0.0
        %1424 = vmatpush1.msra.mxu0 0.0
        %1425 = vmatprep.subr.mxu0 0.0
        %1426 = vmatpush1.msra.mxu0 0.0
        %1427 = vmatprep.subr.mxu0 0.0
        %1428 = vmatpush1.msra.mxu0 0.0
        %1429 = vmatprep.subr.mxu0 0.0
        %1430 = vmatpush1.msra.mxu0 0.0
        %1431 = vmatprep.subr.mxu0 0.0
        %1432 = vmatpush1.msra.mxu0 %v1089
        %1433 = vmatprep.subr.mxu0 0.0
        %1434 = vmatpush2.msra.mxu0 0.0
        %1435 = vmatprep.subr.mxu0 0.0
        %1436 = vmatpush2.msra.mxu0 0.0
        %1437 = vmatprep.subr.mxu0 0.0
        %1438 = vmatpush2.msra.mxu0 0.0
        %1439 = vmatprep.subr.mxu0 0.0
        %1440 = vmatpush2.msra.mxu0 0.0
        %1441 = vmatprep.subr.mxu0 0.0
        %1442 = vmatpush2.msra.mxu0 0.0
        %1443 = vmatprep.subr.mxu0 0.0
        %1444 = vmatpush2.msra.mxu0 0.0
        %1445 = vmatprep.subr.mxu0 0.0
        %1446 = vmatpush2.msra.mxu0 0.0
        %1447 = vmatprep.subr.mxu0 0.0
        %1448 = vmatpush2.msra.mxu0 0.0
        %1449 = vmatprep.subr.mxu0 0.0
        %1450 = vmatpush2.msra.mxu0 0.0
        %1451 = vmatprep.subr.mxu0 0.0
        %1452 = vmatpush2.msra.mxu0 0.0
        %1453 = vmatprep.subr.mxu0 0.0
        %1454 = vmatpush2.msra.mxu0 0.0
        %1455 = vmatprep.subr.mxu0 0.0
        %1456 = vmatpush2.msra.mxu0 0.0
        %1457 = vmatprep.subr.mxu0 0.0
        %1458 = vmatpush2.msra.mxu0 0.0
        %1459 = vmatprep.subr.mxu0 0.0
        %1460 = vmatpush2.msra.mxu0 0.0
        %1461 = vmatprep.subr.mxu0 0.0
        %1462 = vmatpush2.msra.mxu0 0.0
        %1463 = vmatprep.subr.mxu0 0.0
        %1464 = vmatpush2.msra.mxu0 0.0
        %1465 = vmatprep.mubr.f32.mxu0 0.0
        %1466 = vmatmul.mubr.f32.gmra.mxu0 %v1399
        %v1467 = vpop.f32.mrf.mxu0
        %v1468 = vadd.f32 0.0, %v1467
        %v1469 = vpop.f32.mrf.mxu0
        %1470 = vdwg.mxu0
        %1472 = vset.pattern.permute.xlu0 1
        %1473 = vperm.xlu0 %1472, %v1468
        %v1474 = vpop.permute.xlu0 %1473
        %1476 = vset.pattern.permute.xlu0 0
        %1477 = vperm.xlu0 %1476, %v1468
        %v1478 = vpop.permute.xlu0 %1477
        %v1480 = vsel %vm996, %v1474, %v1478
        %1481 = vset.pattern.permute.xlu0 2
        %1482 = vperm.xlu0 %1481, %v1468
        %v1483 = vpop.permute.xlu0 %1482
        %v1485 = vsel %vm997, %v1483, %v1480
        %1486 = vset.pattern.permute.xlu0 3
        %1487 = vperm.xlu0 %1486, %v1468
        %v1488 = vpop.permute.xlu0 %1487
        %v1490 = vsel %vm998, %v1488, %v1485
        %1491 = vset.pattern.permute.xlu0 4
        %1492 = vperm.xlu0 %1491, %v1468
        %v1493 = vpop.permute.xlu0 %1492
        %v1495 = vsel %vm999, %v1493, %v1490
        %1496 = vrot.lane.b32.xlu0 %v1087, 120
        %v1497 = vpop.permute.xlu0 %1496
        %v1498 = vsel %vm1090, %v1497, 0
        %1500 = vmatprep.subr.mxu0 0.0
        %1501 = vmatpush1.xpose.msra.mxu0 0.0
        %1502 = vmatprep.subr.mxu0 0.0
        %1503 = vmatpush1.xpose.msra.mxu0 0.0
        %1504 = vmatprep.subr.mxu0 0.0
        %1505 = vmatpush1.xpose.msra.mxu0 0.0
        %1506 = vmatprep.subr.mxu0 0.0
        %1507 = vmatpush1.xpose.msra.mxu0 0.0
        %1508 = vmatprep.subr.mxu0 0.0
        %1509 = vmatpush1.xpose.msra.mxu0 0.0
        %1510 = vmatprep.subr.mxu0 0.0
        %1511 = vmatpush1.xpose.msra.mxu0 0.0
        %1512 = vmatprep.subr.mxu0 0.0
        %1513 = vmatpush1.xpose.msra.mxu0 0.0
        %1514 = vmatprep.subr.mxu0 0.0
        %1515 = vmatpush1.xpose.msra.mxu0 0.0
        %1516 = vmatprep.subr.mxu0 0.0
        %1517 = vmatpush1.xpose.msra.mxu0 0.0
        %1518 = vmatprep.subr.mxu0 0.0
        %1519 = vmatpush1.xpose.msra.mxu0 0.0
        %1520 = vmatprep.subr.mxu0 0.0
        %1521 = vmatpush1.xpose.msra.mxu0 0.0
        %1522 = vmatprep.subr.mxu0 0.0
        %1523 = vmatpush1.xpose.msra.mxu0 0.0
        %1524 = vmatprep.subr.mxu0 0.0
        %1525 = vmatpush1.xpose.msra.mxu0 0.0
        %1526 = vmatprep.subr.mxu0 0.0
        %1527 = vmatpush1.xpose.msra.mxu0 0.0
        %1528 = vmatprep.subr.mxu0 0.0
        %1529 = vmatpush1.xpose.msra.mxu0 0.0
        %1530 = vmatprep.subr.mxu0 0.0
        %1531 = vmatpush1.xpose.msra.mxu0 %v1498
        %1532 = vmatprep.subr.mxu0 0.0
        %1533 = vmatpush2.xpose.msra.mxu0 0.0
        %1534 = vmatprep.subr.mxu0 0.0
        %1535 = vmatpush2.xpose.msra.mxu0 0.0
        %1536 = vmatprep.subr.mxu0 0.0
        %1537 = vmatpush2.xpose.msra.mxu0 0.0
        %1538 = vmatprep.subr.mxu0 0.0
        %1539 = vmatpush2.xpose.msra.mxu0 0.0
        %1540 = vmatprep.subr.mxu0 0.0
        %1541 = vmatpush2.xpose.msra.mxu0 0.0
        %1542 = vmatprep.subr.mxu0 0.0
        %1543 = vmatpush2.xpose.msra.mxu0 0.0
        %1544 = vmatprep.subr.mxu0 0.0
        %1545 = vmatpush2.xpose.msra.mxu0 0.0
        %1546 = vmatprep.subr.mxu0 0.0
        %1547 = vmatpush2.xpose.msra.mxu0 0.0
        %1548 = vmatprep.subr.mxu0 0.0
        %1549 = vmatpush2.xpose.msra.mxu0 0.0
        %1550 = vmatprep.subr.mxu0 0.0
        %1551 = vmatpush2.xpose.msra.mxu0 0.0
        %1552 = vmatprep.subr.mxu0 0.0
        %1553 = vmatpush2.xpose.msra.mxu0 0.0
        %1554 = vmatprep.subr.mxu0 0.0
        %1555 = vmatpush2.xpose.msra.mxu0 0.0
        %1556 = vmatprep.subr.mxu0 0.0
        %1557 = vmatpush2.xpose.msra.mxu0 0.0
        %1558 = vmatprep.subr.mxu0 0.0
        %1559 = vmatpush2.xpose.msra.mxu0 0.0
        %1560 = vmatprep.subr.mxu0 0.0
        %1561 = vmatpush2.xpose.msra.mxu0 0.0
        %1562 = vmatprep.subr.mxu0 0.0
        %1563 = vmatpush2.xpose.msra.mxu0 0.0
        %1564 = vmatprep.mubr.f32.mxu0 0.0
        %1565 = vmatmul.mubr.f32.gmra.mxu0 %v1399
        %v1566 = vpop.f32.mrf.mxu0
        %v1567 = vadd.f32 %v1495, %v1566
        %v1568 = vpop.f32.mrf.mxu0
        %1569 = vdwg.mxu0
        %v1570 = vadd.f32 %v1567, %v994
        %v1571 = vsel %vm1090, %v1570, -inf
        %1572 = vmax.xlane.f32.xlu0 %v1571
        %v1573 = vpop.xlane.xlu0 %1572
        %v1574 = vsub.f32 %v1570, %v1573
        %v1575 = vmul.f32 %v1574, 1.442695
        %v1576 = vpow.pop %v1575
        %v1577 = vsel %vm1090, %v1576, 0.0
        %1578 = vadd.xlane.f32.xlu0 %v1577
        %v1579 = vpop.xlane.xlu0 %1578
        %v1580 = vsel %vm995, %v1576, 0.0
        %v1581 = vsel %vm1090, %v1580, 0.0
        %1582 = vadd.xlane.f32.xlu0 %v1581
        %v1583 = vpop.xlane.xlu0 %1582
        %v1584 = vmul.f32 %v1583, %v1279
        %1586 = vrot.lane.b32.xlu0 %v1088, 120
        %v1587 = vpop.permute.xlu0 %1586
        %v1590 = vsel %vm1090, %v1576, 0
        %1592 = vmatprep.subr.mxu0 0.0
        %1593 = vmatpush1.msra.mxu0 0.0
        %1594 = vmatprep.subr.mxu0 0.0
        %1595 = vmatpush1.msra.mxu0 0.0
        %1596 = vmatprep.subr.mxu0 0.0
        %1597 = vmatpush1.msra.mxu0 0.0
        %1598 = vmatprep.subr.mxu0 0.0
        %1599 = vmatpush1.msra.mxu0 0.0
        %1600 = vmatprep.subr.mxu0 0.0
        %1601 = vmatpush1.msra.mxu0 0.0
        %1602 = vmatprep.subr.mxu0 0.0
        %1603 = vmatpush1.msra.mxu0 0.0
        %1604 = vmatprep.subr.mxu0 0.0
        %1605 = vmatpush1.msra.mxu0 0.0
        %1606 = vmatprep.subr.mxu0 0.0
        %1607 = vmatpush1.msra.mxu0 0.0
        %1608 = vmatprep.subr.mxu0 0.0
        %1609 = vmatpush1.msra.mxu0 0.0
        %1610 = vmatprep.subr.mxu0 0.0
        %1611 = vmatpush1.msra.mxu0 0.0
        %1612 = vmatprep.subr.mxu0 0.0
        %1613 = vmatpush1.msra.mxu0 0.0
        %1614 = vmatprep.subr.mxu0 0.0
        %1615 = vmatpush1.msra.mxu0 0.0
        %1616 = vmatprep.subr.mxu0 0.0
        %1617 = vmatpush1.msra.mxu0 0.0
        %1618 = vmatprep.subr.mxu0 0.0
        %1619 = vmatpush1.msra.mxu0 0.0
        %1620 = vmatprep.subr.mxu0 0.0
        %1621 = vmatpush1.msra.mxu0 0.0
        %1622 = vmatprep.subr.mxu0 0.0
        %1623 = vmatpush1.msra.mxu0 %v1587
        %1624 = vmatprep.subr.mxu0 0.0
        %1625 = vmatpush2.msra.mxu0 0.0
        %1626 = vmatprep.subr.mxu0 0.0
        %1627 = vmatpush2.msra.mxu0 0.0
        %1628 = vmatprep.subr.mxu0 0.0
        %1629 = vmatpush2.msra.mxu0 0.0
        %1630 = vmatprep.subr.mxu0 0.0
        %1631 = vmatpush2.msra.mxu0 0.0
        %1632 = vmatprep.subr.mxu0 0.0
        %1633 = vmatpush2.msra.mxu0 0.0
        %1634 = vmatprep.subr.mxu0 0.0
        %1635 = vmatpush2.msra.mxu0 0.0
        %1636 = vmatprep.subr.mxu0 0.0
        %1637 = vmatpush2.msra.mxu0 0.0
        %1638 = vmatprep.subr.mxu0 0.0
        %1639 = vmatpush2.msra.mxu0 0.0
        %1640 = vmatprep.subr.mxu0 0.0
        %1641 = vmatpush2.msra.mxu0 0.0
        %1642 = vmatprep.subr.mxu0 0.0
        %1643 = vmatpush2.msra.mxu0 0.0
        %1644 = vmatprep.subr.mxu0 0.0
        %1645 = vmatpush2.msra.mxu0 0.0
        %1646 = vmatprep.subr.mxu0 0.0
        %1647 = vmatpush2.msra.mxu0 0.0
        %1648 = vmatprep.subr.mxu0 0.0
        %1649 = vmatpush2.msra.mxu0 0.0
        %1650 = vmatprep.subr.mxu0 0.0
        %1651 = vmatpush2.msra.mxu0 0.0
        %1652 = vmatprep.subr.mxu0 0.0
        %1653 = vmatpush2.msra.mxu0 0.0
        %1654 = vmatprep.subr.mxu0 0.0
        %1655 = vmatpush2.msra.mxu0 0.0
        %1656 = vmatprep.mubr.f32.mxu0 0.0
        %1657 = vmatmul.mubr.f32.gmra.mxu0 %v1590
        %v1658 = vpop.f32.mrf.mxu0
        %v1659 = vadd.f32 %v1584, %v1658
        %v1660 = vpop.f32.mrf.mxu0
        %1661 = vdwg.mxu0
        %v1662 = vsel %vm996, %v1576, 0.0
        %v1663 = vsel %vm1090, %v1662, 0.0
        %1664 = vadd.xlane.f32.xlu0 %v1663
        %v1665 = vpop.xlane.xlu0 %1664
        %v1666 = vmul.f32 %v1665, %v1361
        %v1667 = vadd.f32 %v1659, %v1666
        %v1668 = vsel %vm997, %v1576, 0.0
        %v1669 = vsel %vm1090, %v1668, 0.0
        %1670 = vadd.xlane.f32.xlu0 %v1669
        %v1671 = vpop.xlane.xlu0 %1670
        %v1672 = vmul.f32 %v1671, %v1371
        %v1673 = vadd.f32 %v1667, %v1672
        %v1674 = vsel %vm998, %v1576, 0.0
        %v1675 = vsel %vm1090, %v1674, 0.0
        %1676 = vadd.xlane.f32.xlu0 %v1675
        %v1677 = vpop.xlane.xlu0 %1676
        %v1678 = vmul.f32 %v1677, %v1381
        %v1679 = vadd.f32 %v1673, %v1678
        %v1680 = vsel %vm999, %v1576, 0.0
        %v1681 = vsel %vm1090, %v1680, 0.0
        %1682 = vadd.xlane.f32.xlu0 %v1681
        %v1683 = vpop.xlane.xlu0 %1682
        %v1684 = vmul.f32 %v1683, %v1391
        %v1685 = vadd.f32 %v1679, %v1684
        %v1686 = vrcp.pop %v1579
        %v1687 = vmul.f32 %v1685, %v1686
        %v1688 = vld [vmem:[#allocation13 + $0x8] sm:$0xff]
        %v1690 = vsel %vm1090, %v1687, 0
        %1692 = vmatprep.subr.mxu0 0.0
        %1693 = vmatpush1.msra.mxu0 0.0
        %1694 = vmatprep.subr.mxu0 0.0
        %1695 = vmatpush1.msra.mxu0 0.0
        %1696 = vmatprep.subr.mxu0 0.0
        %1697 = vmatpush1.msra.mxu0 0.0
        %1698 = vmatprep.subr.mxu0 0.0
        %1699 = vmatpush1.msra.mxu0 0.0
        %1700 = vmatprep.subr.mxu0 0.0
        %1701 = vmatpush1.msra.mxu0 0.0
        %1702 = vmatprep.subr.mxu0 0.0
        %1703 = vmatpush1.msra.mxu0 0.0
        %1704 = vmatprep.subr.mxu0 0.0
        %1705 = vmatpush1.msra.mxu0 0.0
        %1706 = vmatprep.subr.mxu0 0.0
        %1707 = vmatpush1.msra.mxu0 0.0
        %1708 = vmatprep.subr.mxu0 0.0
        %1709 = vmatpush1.msra.mxu0 0.0
        %1710 = vmatprep.subr.mxu0 0.0
        %1711 = vmatpush1.msra.mxu0 0.0
        %1712 = vmatprep.subr.mxu0 0.0
        %1713 = vmatpush1.msra.mxu0 0.0
        %1714 = vmatprep.subr.mxu0 0.0
        %1715 = vmatpush1.msra.mxu0 0.0
        %1716 = vmatprep.subr.mxu0 0.0
        %1717 = vmatpush1.msra.mxu0 0.0
        %1718 = vmatprep.subr.mxu0 0.0
        %1719 = vmatpush1.msra.mxu0 0.0
        %1720 = vmatprep.subr.mxu0 0.0
        %1721 = vmatpush1.msra.mxu0 0.0
        %1722 = vmatprep.subr.mxu0 0.0
        %1723 = vmatpush1.msra.mxu0 %v1688
        %1724 = vmatprep.subr.mxu0 0.0
        %1725 = vmatpush2.msra.mxu0 0.0
        %1726 = vmatprep.subr.mxu0 0.0
        %1727 = vmatpush2.msra.mxu0 0.0
        %1728 = vmatprep.subr.mxu0 0.0
        %1729 = vmatpush2.msra.mxu0 0.0
        %1730 = vmatprep.subr.mxu0 0.0
        %1731 = vmatpush2.msra.mxu0 0.0
        %1732 = vmatprep.subr.mxu0 0.0
        %1733 = vmatpush2.msra.mxu0 0.0
        %1734 = vmatprep.subr.mxu0 0.0
        %1735 = vmatpush2.msra.mxu0 0.0
        %1736 = vmatprep.subr.mxu0 0.0
        %1737 = vmatpush2.msra.mxu0 0.0
        %1738 = vmatprep.subr.mxu0 0.0
        %1739 = vmatpush2.msra.mxu0 0.0
        %1740 = vmatprep.subr.mxu0 0.0
        %1741 = vmatpush2.msra.mxu0 0.0
        %1742 = vmatprep.subr.mxu0 0.0
        %1743 = vmatpush2.msra.mxu0 0.0
        %1744 = vmatprep.subr.mxu0 0.0
        %1745 = vmatpush2.msra.mxu0 0.0
        %1746 = vmatprep.subr.mxu0 0.0
        %1747 = vmatpush2.msra.mxu0 0.0
        %1748 = vmatprep.subr.mxu0 0.0
        %1749 = vmatpush2.msra.mxu0 0.0
        %1750 = vmatprep.subr.mxu0 0.0
        %1751 = vmatpush2.msra.mxu0 0.0
        %1752 = vmatprep.subr.mxu0 0.0
        %1753 = vmatpush2.msra.mxu0 0.0
        %1754 = vmatprep.subr.mxu0 0.0
        %1755 = vmatpush2.msra.mxu0 0.0
        %1756 = vmatprep.mubr.f32.mxu0 0.0
        %1757 = vmatmul.mubr.f32.gmra.mxu0 %v1690
        %v1758 = vpop.f32.mrf.mxu0
        %v1759 = vadd.f32 0.0, %v1758
        %v1760 = vpop.f32.mrf.mxu0
        %1761 = vdwg.mxu0
        %v1763 = vsel %vm1090, %v1395, 0
        %1765 = vmatprep.subr.mxu0 0.0
        %1766 = vmatpush1.msra.mxu0 0.0
        %1767 = vmatprep.subr.mxu0 0.0
        %1768 = vmatpush1.msra.mxu0 0.0
        %1769 = vmatprep.subr.mxu0 0.0
        %1770 = vmatpush1.msra.mxu0 0.0
        %1771 = vmatprep.subr.mxu0 0.0
        %1772 = vmatpush1.msra.mxu0 0.0
        %1773 = vmatprep.subr.mxu0 0.0
        %1774 = vmatpush1.msra.mxu0 0.0
        %1775 = vmatprep.subr.mxu0 0.0
        %1776 = vmatpush1.msra.mxu0 0.0
        %1777 = vmatprep.subr.mxu0 0.0
        %1778 = vmatpush1.msra.mxu0 0.0
        %1779 = vmatprep.subr.mxu0 0.0
        %1780 = vmatpush1.msra.mxu0 0.0
        %1781 = vmatprep.subr.mxu0 0.0
        %1782 = vmatpush1.msra.mxu0 0.0
        %1783 = vmatprep.subr.mxu0 0.0
        %1784 = vmatpush1.msra.mxu0 0.0
        %1785 = vmatprep.subr.mxu0 0.0
        %1786 = vmatpush1.msra.mxu0 0.0
        %1787 = vmatprep.subr.mxu0 0.0
        %1788 = vmatpush1.msra.mxu0 0.0
        %1789 = vmatprep.subr.mxu0 0.0
        %1790 = vmatpush1.msra.mxu0 0.0
        %1791 = vmatprep.subr.mxu0 0.0
        %1792 = vmatpush1.msra.mxu0 0.0
        %1793 = vmatprep.subr.mxu0 0.0
        %1794 = vmatpush1.msra.mxu0 0.0
        %1795 = vmatprep.subr.mxu0 0.0
        %1796 = vmatpush1.msra.mxu0 %v1396
        %1797 = vmatprep.subr.mxu0 0.0
        %1798 = vmatpush2.msra.mxu0 0.0
        %1799 = vmatprep.subr.mxu0 0.0
        %1800 = vmatpush2.msra.mxu0 0.0
        %1801 = vmatprep.subr.mxu0 0.0
        %1802 = vmatpush2.msra.mxu0 0.0
        %1803 = vmatprep.subr.mxu0 0.0
        %1804 = vmatpush2.msra.mxu0 0.0
        %1805 = vmatprep.subr.mxu0 0.0
        %1806 = vmatpush2.msra.mxu0 0.0
        %1807 = vmatprep.subr.mxu0 0.0
        %1808 = vmatpush2.msra.mxu0 0.0
        %1809 = vmatprep.subr.mxu0 0.0
        %1810 = vmatpush2.msra.mxu0 0.0
        %1811 = vmatprep.subr.mxu0 0.0
        %1812 = vmatpush2.msra.mxu0 0.0
        %1813 = vmatprep.subr.mxu0 0.0
        %1814 = vmatpush2.msra.mxu0 0.0
        %1815 = vmatprep.subr.mxu0 0.0
        %1816 = vmatpush2.msra.mxu0 0.0
        %1817 = vmatprep.subr.mxu0 0.0
        %1818 = vmatpush2.msra.mxu0 0.0
        %1819 = vmatprep.subr.mxu0 0.0
        %1820 = vmatpush2.msra.mxu0 0.0
        %1821 = vmatprep.subr.mxu0 0.0
        %1822 = vmatpush2.msra.mxu0 0.0
        %1823 = vmatprep.subr.mxu0 0.0
        %1824 = vmatpush2.msra.mxu0 0.0
        %1825 = vmatprep.subr.mxu0 0.0
        %1826 = vmatpush2.msra.mxu0 0.0
        %1827 = vmatprep.subr.mxu0 0.0
        %1828 = vmatpush2.msra.mxu0 0.0
        %1829 = vmatprep.mubr.f32.mxu0 0.0
        %1830 = vmatmul.mubr.f32.gmra.mxu0 %v1763
        %v1831 = vpop.f32.mrf.mxu0
        %v1832 = vadd.f32 %v1759, %v1831
        %v1833 = vpop.f32.mrf.mxu0
        %1834 = vdwg.mxu0
        %1835 = vrot.lane.b32.xlu0 %v1085, 112
        %v1836 = vpop.permute.xlu0 %1835
        %v1837 = vsel %vm1090, %v1836, 0
        %1839 = vmatprep.subr.mxu0 0.0
        %1840 = vmatpush1.msra.mxu0 0.0
        %1841 = vmatprep.subr.mxu0 0.0
        %1842 = vmatpush1.msra.mxu0 0.0
        %1843 = vmatprep.subr.mxu0 0.0
        %1844 = vmatpush1.msra.mxu0 0.0
        %1845 = vmatprep.subr.mxu0 0.0
        %1846 = vmatpush1.msra.mxu0 0.0
        %1847 = vmatprep.subr.mxu0 0.0
        %1848 = vmatpush1.msra.mxu0 0.0
        %1849 = vmatprep.subr.mxu0 0.0
        %1850 = vmatpush1.msra.mxu0 0.0
        %1851 = vmatprep.subr.mxu0 0.0
        %1852 = vmatpush1.msra.mxu0 0.0
        %1853 = vmatprep.subr.mxu0 0.0
        %1854 = vmatpush1.msra.mxu0 0.0
        %1855 = vmatprep.subr.mxu0 0.0
        %1856 = vmatpush1.msra.mxu0 0.0
        %1857 = vmatprep.subr.mxu0 0.0
        %1858 = vmatpush1.msra.mxu0 0.0
        %1859 = vmatprep.subr.mxu0 0.0
        %1860 = vmatpush1.msra.mxu0 0.0
        %1861 = vmatprep.subr.mxu0 0.0
        %1862 = vmatpush1.msra.mxu0 0.0
        %1863 = vmatprep.subr.mxu0 0.0
        %1864 = vmatpush1.msra.mxu0 0.0
        %1865 = vmatprep.subr.mxu0 0.0
        %1866 = vmatpush1.msra.mxu0 0.0
        %1867 = vmatprep.subr.mxu0 0.0
        %1868 = vmatpush1.msra.mxu0 0.0
        %1869 = vmatprep.subr.mxu0 0.0
        %1870 = vmatpush1.msra.mxu0 %v1089
        %1871 = vmatprep.subr.mxu0 0.0
        %1872 = vmatpush2.msra.mxu0 0.0
        %1873 = vmatprep.subr.mxu0 0.0
        %1874 = vmatpush2.msra.mxu0 0.0
        %1875 = vmatprep.subr.mxu0 0.0
        %1876 = vmatpush2.msra.mxu0 0.0
        %1877 = vmatprep.subr.mxu0 0.0
        %1878 = vmatpush2.msra.mxu0 0.0
        %1879 = vmatprep.subr.mxu0 0.0
        %1880 = vmatpush2.msra.mxu0 0.0
        %1881 = vmatprep.subr.mxu0 0.0
        %1882 = vmatpush2.msra.mxu0 0.0
        %1883 = vmatprep.subr.mxu0 0.0
        %1884 = vmatpush2.msra.mxu0 0.0
        %1885 = vmatprep.subr.mxu0 0.0
        %1886 = vmatpush2.msra.mxu0 0.0
        %1887 = vmatprep.subr.mxu0 0.0
        %1888 = vmatpush2.msra.mxu0 0.0
        %1889 = vmatprep.subr.mxu0 0.0
        %1890 = vmatpush2.msra.mxu0 0.0
        %1891 = vmatprep.subr.mxu0 0.0
        %1892 = vmatpush2.msra.mxu0 0.0
        %1893 = vmatprep.subr.mxu0 0.0
        %1894 = vmatpush2.msra.mxu0 0.0
        %1895 = vmatprep.subr.mxu0 0.0
        %1896 = vmatpush2.msra.mxu0 0.0
        %1897 = vmatprep.subr.mxu0 0.0
        %1898 = vmatpush2.msra.mxu0 0.0
        %1899 = vmatprep.subr.mxu0 0.0
        %1900 = vmatpush2.msra.mxu0 0.0
        %1901 = vmatprep.subr.mxu0 0.0
        %1902 = vmatpush2.msra.mxu0 0.0
        %1903 = vmatprep.mubr.f32.mxu0 0.0
        %1904 = vmatmul.mubr.f32.gmra.mxu0 %v1837
        %v1905 = vpop.f32.mrf.mxu0
        %v1906 = vadd.f32 0.0, %v1905
        %v1907 = vpop.f32.mrf.mxu0
        %1908 = vdwg.mxu0
        %1910 = vset.pattern.permute.xlu0 1
        %1911 = vperm.xlu0 %1910, %v1906
        %v1912 = vpop.permute.xlu0 %1911
        %1914 = vset.pattern.permute.xlu0 0
        %1915 = vperm.xlu0 %1914, %v1906
        %v1916 = vpop.permute.xlu0 %1915
        %v1918 = vsel %vm996, %v1912, %v1916
        %1919 = vset.pattern.permute.xlu0 2
        %1920 = vperm.xlu0 %1919, %v1906
        %v1921 = vpop.permute.xlu0 %1920
        %v1923 = vsel %vm997, %v1921, %v1918
        %1924 = vset.pattern.permute.xlu0 3
        %1925 = vperm.xlu0 %1924, %v1906
        %v1926 = vpop.permute.xlu0 %1925
        %v1928 = vsel %vm998, %v1926, %v1923
        %1929 = vset.pattern.permute.xlu0 4
        %1930 = vperm.xlu0 %1929, %v1906
        %v1931 = vpop.permute.xlu0 %1930
        %v1933 = vsel %vm999, %v1931, %v1928
        %1934 = vrot.lane.b32.xlu0 %v1087, 112
        %v1935 = vpop.permute.xlu0 %1934
        %v1936 = vsel %vm1090, %v1935, 0
        %1938 = vmatprep.subr.mxu0 0.0
        %1939 = vmatpush1.xpose.msra.mxu0 0.0
        %1940 = vmatprep.subr.mxu0 0.0
        %1941 = vmatpush1.xpose.msra.mxu0 0.0
        %1942 = vmatprep.subr.mxu0 0.0
        %1943 = vmatpush1.xpose.msra.mxu0 0.0
        %1944 = vmatprep.subr.mxu0 0.0
        %1945 = vmatpush1.xpose.msra.mxu0 0.0
        %1946 = vmatprep.subr.mxu0 0.0
        %1947 = vmatpush1.xpose.msra.mxu0 0.0
        %1948 = vmatprep.subr.mxu0 0.0
        %1949 = vmatpush1.xpose.msra.mxu0 0.0
        %1950 = vmatprep.subr.mxu0 0.0
        %1951 = vmatpush1.xpose.msra.mxu0 0.0
        %1952 = vmatprep.subr.mxu0 0.0
        %1953 = vmatpush1.xpose.msra.mxu0 0.0
        %1954 = vmatprep.subr.mxu0 0.0
        %1955 = vmatpush1.xpose.msra.mxu0 0.0
        %1956 = vmatprep.subr.mxu0 0.0
        %1957 = vmatpush1.xpose.msra.mxu0 0.0
        %1958 = vmatprep.subr.mxu0 0.0
        %1959 = vmatpush1.xpose.msra.mxu0 0.0
        %1960 = vmatprep.subr.mxu0 0.0
        %1961 = vmatpush1.xpose.msra.mxu0 0.0
        %1962 = vmatprep.subr.mxu0 0.0
        %1963 = vmatpush1.xpose.msra.mxu0 0.0
        %1964 = vmatprep.subr.mxu0 0.0
        %1965 = vmatpush1.xpose.msra.mxu0 0.0
        %1966 = vmatprep.subr.mxu0 0.0
        %1967 = vmatpush1.xpose.msra.mxu0 0.0
        %1968 = vmatprep.subr.mxu0 0.0
        %1969 = vmatpush1.xpose.msra.mxu0 %v1936
        %1970 = vmatprep.subr.mxu0 0.0
        %1971 = vmatpush2.xpose.msra.mxu0 0.0
        %1972 = vmatprep.subr.mxu0 0.0
        %1973 = vmatpush2.xpose.msra.mxu0 0.0
        %1974 = vmatprep.subr.mxu0 0.0
        %1975 = vmatpush2.xpose.msra.mxu0 0.0
        %1976 = vmatprep.subr.mxu0 0.0
        %1977 = vmatpush2.xpose.msra.mxu0 0.0
        %1978 = vmatprep.subr.mxu0 0.0
        %1979 = vmatpush2.xpose.msra.mxu0 0.0
        %1980 = vmatprep.subr.mxu0 0.0
        %1981 = vmatpush2.xpose.msra.mxu0 0.0
        %1982 = vmatprep.subr.mxu0 0.0
        %1983 = vmatpush2.xpose.msra.mxu0 0.0
        %1984 = vmatprep.subr.mxu0 0.0
        %1985 = vmatpush2.xpose.msra.mxu0 0.0
        %1986 = vmatprep.subr.mxu0 0.0
        %1987 = vmatpush2.xpose.msra.mxu0 0.0
        %1988 = vmatprep.subr.mxu0 0.0
        %1989 = vmatpush2.xpose.msra.mxu0 0.0
        %1990 = vmatprep.subr.mxu0 0.0
        %1991 = vmatpush2.xpose.msra.mxu0 0.0
        %1992 = vmatprep.subr.mxu0 0.0
        %1993 = vmatpush2.xpose.msra.mxu0 0.0
        %1994 = vmatprep.subr.mxu0 0.0
        %1995 = vmatpush2.xpose.msra.mxu0 0.0
        %1996 = vmatprep.subr.mxu0 0.0
        %1997 = vmatpush2.xpose.msra.mxu0 0.0
        %1998 = vmatprep.subr.mxu0 0.0
        %1999 = vmatpush2.xpose.msra.mxu0 0.0
        %2000 = vmatprep.subr.mxu0 0.0
        %2001 = vmatpush2.xpose.msra.mxu0 0.0
        %2002 = vmatprep.mubr.f32.mxu0 0.0
        %2003 = vmatmul.mubr.f32.gmra.mxu0 %v1837
        %v2004 = vpop.f32.mrf.mxu0
        %v2005 = vadd.f32 %v1933, %v2004
        %v2006 = vpop.f32.mrf.mxu0
        %2007 = vdwg.mxu0
        %v2008 = vadd.f32 %v2005, %v994
        %v2009 = vsel %vm1090, %v2008, -inf
        %2010 = vmax.xlane.f32.xlu0 %v2009
        %v2011 = vpop.xlane.xlu0 %2010
        %v2012 = vsub.f32 %v2008, %v2011
        %v2013 = vmul.f32 %v2012, 1.442695
        %v2014 = vpow.pop %v2013
        %v2015 = vsel %vm1090, %v2014, 0.0
        %2016 = vadd.xlane.f32.xlu0 %v2015
        %v2017 = vpop.xlane.xlu0 %2016
        %v2018 = vsel %vm995, %v2014, 0.0
        %v2019 = vsel %vm1090, %v2018, 0.0
        %2020 = vadd.xlane.f32.xlu0 %v2019
        %v2021 = vpop.xlane.xlu0 %2020
        %v2022 = vmul.f32 %v2021, %v1279
        %2023 = vrot.lane.b32.xlu0 %v1088, 112
        %v2024 = vpop.permute.xlu0 %2023
        %v2027 = vsel %vm1090, %v2014, 0
        %2029 = vmatprep.subr.mxu0 0.0
        %2030 = vmatpush1.msra.mxu0 0.0
        %2031 = vmatprep.subr.mxu0 0.0
        %2032 = vmatpush1.msra.mxu0 0.0
        %2033 = vmatprep.subr.mxu0 0.0
        %2034 = vmatpush1.msra.mxu0 0.0
        %2035 = vmatprep.subr.mxu0 0.0
        %2036 = vmatpush1.msra.mxu0 0.0
        %2037 = vmatprep.subr.mxu0 0.0
        %2038 = vmatpush1.msra.mxu0 0.0
        %2039 = vmatprep.subr.mxu0 0.0
        %2040 = vmatpush1.msra.mxu0 0.0
        %2041 = vmatprep.subr.mxu0 0.0
        %2042 = vmatpush1.msra.mxu0 0.0
        %2043 = vmatprep.subr.mxu0 0.0
        %2044 = vmatpush1.msra.mxu0 0.0
        %2045 = vmatprep.subr.mxu0 0.0
        %2046 = vmatpush1.msra.mxu0 0.0
        %2047 = vmatprep.subr.mxu0 0.0
        %2048 = vmatpush1.msra.mxu0 0.0
        %2049 = vmatprep.subr.mxu0 0.0
        %2050 = vmatpush1.msra.mxu0 0.0
        %2051 = vmatprep.subr.mxu0 0.0
        %2052 = vmatpush1.msra.mxu0 0.0
        %2053 = vmatprep.subr.mxu0 0.0
        %2054 = vmatpush1.msra.mxu0 0.0
        %2055 = vmatprep.subr.mxu0 0.0
        %2056 = vmatpush1.msra.mxu0 0.0
        %2057 = vmatprep.subr.mxu0 0.0
        %2058 = vmatpush1.msra.mxu0 0.0
        %2059 = vmatprep.subr.mxu0 0.0
        %2060 = vmatpush1.msra.mxu0 %v2024
        %2061 = vmatprep.subr.mxu0 0.0
        %2062 = vmatpush2.msra.mxu0 0.0
        %2063 = vmatprep.subr.mxu0 0.0
        %2064 = vmatpush2.msra.mxu0 0.0
        %2065 = vmatprep.subr.mxu0 0.0
        %2066 = vmatpush2.msra.mxu0 0.0
        %2067 = vmatprep.subr.mxu0 0.0
        %2068 = vmatpush2.msra.mxu0 0.0
        %2069 = vmatprep.subr.mxu0 0.0
        %2070 = vmatpush2.msra.mxu0 0.0
        %2071 = vmatprep.subr.mxu0 0.0
        %2072 = vmatpush2.msra.mxu0 0.0
        %2073 = vmatprep.subr.mxu0 0.0
        %2074 = vmatpush2.msra.mxu0 0.0
        %2075 = vmatprep.subr.mxu0 0.0
        %2076 = vmatpush2.msra.mxu0 0.0
        %2077 = vmatprep.subr.mxu0 0.0
        %2078 = vmatpush2.msra.mxu0 0.0
        %2079 = vmatprep.subr.mxu0 0.0
        %2080 = vmatpush2.msra.mxu0 0.0
        %2081 = vmatprep.subr.mxu0 0.0
        %2082 = vmatpush2.msra.mxu0 0.0
        %2083 = vmatprep.subr.mxu0 0.0
        %2084 = vmatpush2.msra.mxu0 0.0
        %2085 = vmatprep.subr.mxu0 0.0
        %2086 = vmatpush2.msra.mxu0 0.0
        %2087 = vmatprep.subr.mxu0 0.0
        %2088 = vmatpush2.msra.mxu0 0.0
        %2089 = vmatprep.subr.mxu0 0.0
        %2090 = vmatpush2.msra.mxu0 0.0
        %2091 = vmatprep.subr.mxu0 0.0
        %2092 = vmatpush2.msra.mxu0 0.0
        %2093 = vmatprep.mubr.f32.mxu0 0.0
        %2094 = vmatmul.mubr.f32.gmra.mxu0 %v2027
        %v2095 = vpop.f32.mrf.mxu0
        %v2096 = vadd.f32 %v2022, %v2095
        %v2097 = vpop.f32.mrf.mxu0
        %2098 = vdwg.mxu0
        %v2099 = vsel %vm996, %v2014, 0.0
        %v2100 = vsel %vm1090, %v2099, 0.0
        %2101 = vadd.xlane.f32.xlu0 %v2100
        %v2102 = vpop.xlane.xlu0 %2101
        %v2103 = vmul.f32 %v2102, %v1361
        %v2104 = vadd.f32 %v2096, %v2103
        %v2105 = vsel %vm997, %v2014, 0.0
        %v2106 = vsel %vm1090, %v2105, 0.0
        %2107 = vadd.xlane.f32.xlu0 %v2106
        %v2108 = vpop.xlane.xlu0 %2107
        %v2109 = vmul.f32 %v2108, %v1371
        %v2110 = vadd.f32 %v2104, %v2109
        %v2111 = vsel %vm998, %v2014, 0.0
        %v2112 = vsel %vm1090, %v2111, 0.0
        %2113 = vadd.xlane.f32.xlu0 %v2112
        %v2114 = vpop.xlane.xlu0 %2113
        %v2115 = vmul.f32 %v2114, %v1381
        %v2116 = vadd.f32 %v2110, %v2115
        %v2117 = vsel %vm999, %v2014, 0.0
        %v2118 = vsel %vm1090, %v2117, 0.0
        %2119 = vadd.xlane.f32.xlu0 %v2118
        %v2120 = vpop.xlane.xlu0 %2119
        %v2121 = vmul.f32 %v2120, %v1391
        %v2122 = vadd.f32 %v2116, %v2121
        %v2123 = vrcp.pop %v2017
        %v2124 = vmul.f32 %v2122, %v2123
        %v2125 = vld [vmem:[#allocation13 + $0x10] sm:$0xff]
        %v2127 = vsel %vm1090, %v2124, 0
        %2129 = vmatprep.subr.mxu0 0.0
        %2130 = vmatpush1.msra.mxu0 0.0
        %2131 = vmatprep.subr.mxu0 0.0
        %2132 = vmatpush1.msra.mxu0 0.0
        %2133 = vmatprep.subr.mxu0 0.0
        %2134 = vmatpush1.msra.mxu0 0.0
        %2135 = vmatprep.subr.mxu0 0.0
        %2136 = vmatpush1.msra.mxu0 0.0
        %2137 = vmatprep.subr.mxu0 0.0
        %2138 = vmatpush1.msra.mxu0 0.0
        %2139 = vmatprep.subr.mxu0 0.0
        %2140 = vmatpush1.msra.mxu0 0.0
        %2141 = vmatprep.subr.mxu0 0.0
        %2142 = vmatpush1.msra.mxu0 0.0
        %2143 = vmatprep.subr.mxu0 0.0
        %2144 = vmatpush1.msra.mxu0 0.0
        %2145 = vmatprep.subr.mxu0 0.0
        %2146 = vmatpush1.msra.mxu0 0.0
        %2147 = vmatprep.subr.mxu0 0.0
        %2148 = vmatpush1.msra.mxu0 0.0
        %2149 = vmatprep.subr.mxu0 0.0
        %2150 = vmatpush1.msra.mxu0 0.0
        %2151 = vmatprep.subr.mxu0 0.0
        %2152 = vmatpush1.msra.mxu0 0.0
        %2153 = vmatprep.subr.mxu0 0.0
        %2154 = vmatpush1.msra.mxu0 0.0
        %2155 = vmatprep.subr.mxu0 0.0
        %2156 = vmatpush1.msra.mxu0 0.0
        %2157 = vmatprep.subr.mxu0 0.0
        %2158 = vmatpush1.msra.mxu0 0.0
        %2159 = vmatprep.subr.mxu0 0.0
        %2160 = vmatpush1.msra.mxu0 %v2125
        %2161 = vmatprep.subr.mxu0 0.0
        %2162 = vmatpush2.msra.mxu0 0.0
        %2163 = vmatprep.subr.mxu0 0.0
        %2164 = vmatpush2.msra.mxu0 0.0
        %2165 = vmatprep.subr.mxu0 0.0
        %2166 = vmatpush2.msra.mxu0 0.0
        %2167 = vmatprep.subr.mxu0 0.0
        %2168 = vmatpush2.msra.mxu0 0.0
        %2169 = vmatprep.subr.mxu0 0.0
        %2170 = vmatpush2.msra.mxu0 0.0
        %2171 = vmatprep.subr.mxu0 0.0
        %2172 = vmatpush2.msra.mxu0 0.0
        %2173 = vmatprep.subr.mxu0 0.0
        %2174 = vmatpush2.msra.mxu0 0.0
        %2175 = vmatprep.subr.mxu0 0.0
        %2176 = vmatpush2.msra.mxu0 0.0
        %2177 = vmatprep.subr.mxu0 0.0
        %2178 = vmatpush2.msra.mxu0 0.0
        %2179 = vmatprep.subr.mxu0 0.0
        %2180 = vmatpush2.msra.mxu0 0.0
        %2181 = vmatprep.subr.mxu0 0.0
        %2182 = vmatpush2.msra.mxu0 0.0
        %2183 = vmatprep.subr.mxu0 0.0
        %2184 = vmatpush2.msra.mxu0 0.0
        %2185 = vmatprep.subr.mxu0 0.0
        %2186 = vmatpush2.msra.mxu0 0.0
        %2187 = vmatprep.subr.mxu0 0.0
        %2188 = vmatpush2.msra.mxu0 0.0
        %2189 = vmatprep.subr.mxu0 0.0
        %2190 = vmatpush2.msra.mxu0 0.0
        %2191 = vmatprep.subr.mxu0 0.0
        %2192 = vmatpush2.msra.mxu0 0.0
        %2193 = vmatprep.mubr.f32.mxu0 0.0
        %2194 = vmatmul.mubr.f32.gmra.mxu0 %v2127
        %v2195 = vpop.f32.mrf.mxu0
        %v2196 = vadd.f32 0.0, %v2195
        %v2197 = vpop.f32.mrf.mxu0
        %2198 = vdwg.mxu0
        %v2199 = vadd.f32 %v1832, %v2196
        %2200 = vrot.lane.b32.xlu0 %v1085, 104
        %v2201 = vpop.permute.xlu0 %2200
        %v2202 = vsel %vm1090, %v2201, 0
        %2204 = vmatprep.subr.mxu0 0.0
        %2205 = vmatpush1.msra.mxu0 0.0
        %2206 = vmatprep.subr.mxu0 0.0
        %2207 = vmatpush1.msra.mxu0 0.0
        %2208 = vmatprep.subr.mxu0 0.0
        %2209 = vmatpush1.msra.mxu0 0.0
        %2210 = vmatprep.subr.mxu0 0.0
        %2211 = vmatpush1.msra.mxu0 0.0
        %2212 = vmatprep.subr.mxu0 0.0
        %2213 = vmatpush1.msra.mxu0 0.0
        %2214 = vmatprep.subr.mxu0 0.0
        %2215 = vmatpush1.msra.mxu0 0.0
        %2216 = vmatprep.subr.mxu0 0.0
        %2217 = vmatpush1.msra.mxu0 0.0
        %2218 = vmatprep.subr.mxu0 0.0
        %2219 = vmatpush1.msra.mxu0 0.0
        %2220 = vmatprep.subr.mxu0 0.0
        %2221 = vmatpush1.msra.mxu0 0.0
        %2222 = vmatprep.subr.mxu0 0.0
        %2223 = vmatpush1.msra.mxu0 0.0
        %2224 = vmatprep.subr.mxu0 0.0
        %2225 = vmatpush1.msra.mxu0 0.0
        %2226 = vmatprep.subr.mxu0 0.0
        %2227 = vmatpush1.msra.mxu0 0.0
        %2228 = vmatprep.subr.mxu0 0.0
        %2229 = vmatpush1.msra.mxu0 0.0
        %2230 = vmatprep.subr.mxu0 0.0
        %2231 = vmatpush1.msra.mxu0 0.0
        %2232 = vmatprep.subr.mxu0 0.0
        %2233 = vmatpush1.msra.mxu0 0.0
        %2234 = vmatprep.subr.mxu0 0.0
        %2235 = vmatpush1.msra.mxu0 %v1089
        %2236 = vmatprep.subr.mxu0 0.0
        %2237 = vmatpush2.msra.mxu0 0.0
        %2238 = vmatprep.subr.mxu0 0.0
        %2239 = vmatpush2.msra.mxu0 0.0
        %2240 = vmatprep.subr.mxu0 0.0
        %2241 = vmatpush2.msra.mxu0 0.0
        %2242 = vmatprep.subr.mxu0 0.0
        %2243 = vmatpush2.msra.mxu0 0.0
        %2244 = vmatprep.subr.mxu0 0.0
        %2245 = vmatpush2.msra.mxu0 0.0
        %2246 = vmatprep.subr.mxu0 0.0
        %2247 = vmatpush2.msra.mxu0 0.0
        %2248 = vmatprep.subr.mxu0 0.0
        %2249 = vmatpush2.msra.mxu0 0.0
        %2250 = vmatprep.subr.mxu0 0.0
        %2251 = vmatpush2.msra.mxu0 0.0
        %2252 = vmatprep.subr.mxu0 0.0
        %2253 = vmatpush2.msra.mxu0 0.0
        %2254 = vmatprep.subr.mxu0 0.0
        %2255 = vmatpush2.msra.mxu0 0.0
        %2256 = vmatprep.subr.mxu0 0.0
        %2257 = vmatpush2.msra.mxu0 0.0
        %2258 = vmatprep.subr.mxu0 0.0
        %2259 = vmatpush2.msra.mxu0 0.0
        %2260 = vmatprep.subr.mxu0 0.0
        %2261 = vmatpush2.msra.mxu0 0.0
        %2262 = vmatprep.subr.mxu0 0.0
        %2263 = vmatpush2.msra.mxu0 0.0
        %2264 = vmatprep.subr.mxu0 0.0
        %2265 = vmatpush2.msra.mxu0 0.0
        %2266 = vmatprep.subr.mxu0 0.0
        %2267 = vmatpush2.msra.mxu0 0.0
        %2268 = vmatprep.mubr.f32.mxu0 0.0
        %2269 = vmatmul.mubr.f32.gmra.mxu0 %v2202
        %v2270 = vpop.f32.mrf.mxu0
        %v2271 = vadd.f32 0.0, %v2270
        %v2272 = vpop.f32.mrf.mxu0
        %2273 = vdwg.mxu0
        %2275 = vset.pattern.permute.xlu0 1
        %2276 = vperm.xlu0 %2275, %v2271
        %v2277 = vpop.permute.xlu0 %2276
        %2279 = vset.pattern.permute.xlu0 0
        %2280 = vperm.xlu0 %2279, %v2271
        %v2281 = vpop.permute.xlu0 %2280
        %v2283 = vsel %vm996, %v2277, %v2281
        %2284 = vset.pattern.permute.xlu0 2
        %2285 = vperm.xlu0 %2284, %v2271
        %v2286 = vpop.permute.xlu0 %2285
        %v2288 = vsel %vm997, %v2286, %v2283
        %2289 = vset.pattern.permute.xlu0 3
        %2290 = vperm.xlu0 %2289, %v2271
        %v2291 = vpop.permute.xlu0 %2290
        %v2293 = vsel %vm998, %v2291, %v2288
        %2294 = vset.pattern.permute.xlu0 4
        %2295 = vperm.xlu0 %2294, %v2271
        %v2296 = vpop.permute.xlu0 %2295
        %v2298 = vsel %vm999, %v2296, %v2293
        %2299 = vrot.lane.b32.xlu0 %v1087, 104
        %v2300 = vpop.permute.xlu0 %2299
        %v2301 = vsel %vm1090, %v2300, 0
        %2303 = vmatprep.subr.mxu0 0.0
        %2304 = vmatpush1.xpose.msra.mxu0 0.0
        %2305 = vmatprep.subr.mxu0 0.0
        %2306 = vmatpush1.xpose.msra.mxu0 0.0
        %2307 = vmatprep.subr.mxu0 0.0
        %2308 = vmatpush1.xpose.msra.mxu0 0.0
        %2309 = vmatprep.subr.mxu0 0.0
        %2310 = vmatpush1.xpose.msra.mxu0 0.0
        %2311 = vmatprep.subr.mxu0 0.0
        %2312 = vmatpush1.xpose.msra.mxu0 0.0
        %2313 = vmatprep.subr.mxu0 0.0
        %2314 = vmatpush1.xpose.msra.mxu0 0.0
        %2315 = vmatprep.subr.mxu0 0.0
        %2316 = vmatpush1.xpose.msra.mxu0 0.0
        %2317 = vmatprep.subr.mxu0 0.0
        %2318 = vmatpush1.xpose.msra.mxu0 0.0
        %2319 = vmatprep.subr.mxu0 0.0
        %2320 = vmatpush1.xpose.msra.mxu0 0.0
        %2321 = vmatprep.subr.mxu0 0.0
        %2322 = vmatpush1.xpose.msra.mxu0 0.0
        %2323 = vmatprep.subr.mxu0 0.0
        %2324 = vmatpush1.xpose.msra.mxu0 0.0
        %2325 = vmatprep.subr.mxu0 0.0
        %2326 = vmatpush1.xpose.msra.mxu0 0.0
        %2327 = vmatprep.subr.mxu0 0.0
        %2328 = vmatpush1.xpose.msra.mxu0 0.0
        %2329 = vmatprep.subr.mxu0 0.0
        %2330 = vmatpush1.xpose.msra.mxu0 0.0
        %2331 = vmatprep.subr.mxu0 0.0
        %2332 = vmatpush1.xpose.msra.mxu0 0.0
        %2333 = vmatprep.subr.mxu0 0.0
        %2334 = vmatpush1.xpose.msra.mxu0 %v2301
        %2335 = vmatprep.subr.mxu0 0.0
        %2336 = vmatpush2.xpose.msra.mxu0 0.0
        %2337 = vmatprep.subr.mxu0 0.0
        %2338 = vmatpush2.xpose.msra.mxu0 0.0
        %2339 = vmatprep.subr.mxu0 0.0
        %2340 = vmatpush2.xpose.msra.mxu0 0.0
        %2341 = vmatprep.subr.mxu0 0.0
        %2342 = vmatpush2.xpose.msra.mxu0 0.0
        %2343 = vmatprep.subr.mxu0 0.0
        %2344 = vmatpush2.xpose.msra.mxu0 0.0
        %2345 = vmatprep.subr.mxu0 0.0
        %2346 = vmatpush2.xpose.msra.mxu0 0.0
        %2347 = vmatprep.subr.mxu0 0.0
        %2348 = vmatpush2.xpose.msra.mxu0 0.0
        %2349 = vmatprep.subr.mxu0 0.0
        %2350 = vmatpush2.xpose.msra.mxu0 0.0
        %2351 = vmatprep.subr.mxu0 0.0
        %2352 = vmatpush2.xpose.msra.mxu0 0.0
        %2353 = vmatprep.subr.mxu0 0.0
        %2354 = vmatpush2.xpose.msra.mxu0 0.0
        %2355 = vmatprep.subr.mxu0 0.0
        %2356 = vmatpush2.xpose.msra.mxu0 0.0
        %2357 = vmatprep.subr.mxu0 0.0
        %2358 = vmatpush2.xpose.msra.mxu0 0.0
        %2359 = vmatprep.subr.mxu0 0.0
        %2360 = vmatpush2.xpose.msra.mxu0 0.0
        %2361 = vmatprep.subr.mxu0 0.0
        %2362 = vmatpush2.xpose.msra.mxu0 0.0
        %2363 = vmatprep.subr.mxu0 0.0
        %2364 = vmatpush2.xpose.msra.mxu0 0.0
        %2365 = vmatprep.subr.mxu0 0.0
        %2366 = vmatpush2.xpose.msra.mxu0 0.0
        %2367 = vmatprep.mubr.f32.mxu0 0.0
        %2368 = vmatmul.mubr.f32.gmra.mxu0 %v2202
        %v2369 = vpop.f32.mrf.mxu0
        %v2370 = vadd.f32 %v2298, %v2369
        %v2371 = vpop.f32.mrf.mxu0
        %2372 = vdwg.mxu0
        %v2373 = vadd.f32 %v2370, %v994
        %v2374 = vsel %vm1090, %v2373, -inf
        %2375 = vmax.xlane.f32.xlu0 %v2374
        %v2376 = vpop.xlane.xlu0 %2375
        %v2377 = vsub.f32 %v2373, %v2376
        %v2378 = vmul.f32 %v2377, 1.442695
        %v2379 = vpow.pop %v2378
        %v2380 = vsel %vm1090, %v2379, 0.0
        %2381 = vadd.xlane.f32.xlu0 %v2380
        %v2382 = vpop.xlane.xlu0 %2381
        %v2383 = vsel %vm995, %v2379, 0.0
        %v2384 = vsel %vm1090, %v2383, 0.0
        %2385 = vadd.xlane.f32.xlu0 %v2384
        %v2386 = vpop.xlane.xlu0 %2385
        %v2387 = vmul.f32 %v2386, %v1279
        %2388 = vrot.lane.b32.xlu0 %v1088, 104
        %v2389 = vpop.permute.xlu0 %2388
        %v2392 = vsel %vm1090, %v2379, 0
        %2394 = vmatprep.subr.mxu0 0.0
        %2395 = vmatpush1.msra.mxu0 0.0
        %2396 = vmatprep.subr.mxu0 0.0
        %2397 = vmatpush1.msra.mxu0 0.0
        %2398 = vmatprep.subr.mxu0 0.0
        %2399 = vmatpush1.msra.mxu0 0.0
        %2400 = vmatprep.subr.mxu0 0.0
        %2401 = vmatpush1.msra.mxu0 0.0
        %2402 = vmatprep.subr.mxu0 0.0
        %2403 = vmatpush1.msra.mxu0 0.0
        %2404 = vmatprep.subr.mxu0 0.0
        %2405 = vmatpush1.msra.mxu0 0.0
        %2406 = vmatprep.subr.mxu0 0.0
        %2407 = vmatpush1.msra.mxu0 0.0
        %2408 = vmatprep.subr.mxu0 0.0
        %2409 = vmatpush1.msra.mxu0 0.0
        %2410 = vmatprep.subr.mxu0 0.0
        %2411 = vmatpush1.msra.mxu0 0.0
        %2412 = vmatprep.subr.mxu0 0.0
        %2413 = vmatpush1.msra.mxu0 0.0
        %2414 = vmatprep.subr.mxu0 0.0
        %2415 = vmatpush1.msra.mxu0 0.0
        %2416 = vmatprep.subr.mxu0 0.0
        %2417 = vmatpush1.msra.mxu0 0.0
        %2418 = vmatprep.subr.mxu0 0.0
        %2419 = vmatpush1.msra.mxu0 0.0
        %2420 = vmatprep.subr.mxu0 0.0
        %2421 = vmatpush1.msra.mxu0 0.0
        %2422 = vmatprep.subr.mxu0 0.0
        %2423 = vmatpush1.msra.mxu0 0.0
        %2424 = vmatprep.subr.mxu0 0.0
        %2425 = vmatpush1.msra.mxu0 %v2389
        %2426 = vmatprep.subr.mxu0 0.0
        %2427 = vmatpush2.msra.mxu0 0.0
        %2428 = vmatprep.subr.mxu0 0.0
        %2429 = vmatpush2.msra.mxu0 0.0
        %2430 = vmatprep.subr.mxu0 0.0
        %2431 = vmatpush2.msra.mxu0 0.0
        %2432 = vmatprep.subr.mxu0 0.0
        %2433 = vmatpush2.msra.mxu0 0.0
        %2434 = vmatprep.subr.mxu0 0.0
        %2435 = vmatpush2.msra.mxu0 0.0
        %2436 = vmatprep.subr.mxu0 0.0
        %2437 = vmatpush2.msra.mxu0 0.0
        %2438 = vmatprep.subr.mxu0 0.0
        %2439 = vmatpush2.msra.mxu0 0.0
        %2440 = vmatprep.subr.mxu0 0.0
        %2441 = vmatpush2.msra.mxu0 0.0
        %2442 = vmatprep.subr.mxu0 0.0
        %2443 = vmatpush2.msra.mxu0 0.0
        %2444 = vmatprep.subr.mxu0 0.0
        %2445 = vmatpush2.msra.mxu0 0.0
        %2446 = vmatprep.subr.mxu0 0.0
        %2447 = vmatpush2.msra.mxu0 0.0
        %2448 = vmatprep.subr.mxu0 0.0
        %2449 = vmatpush2.msra.mxu0 0.0
        %2450 = vmatprep.subr.mxu0 0.0
        %2451 = vmatpush2.msra.mxu0 0.0
        %2452 = vmatprep.subr.mxu0 0.0
        %2453 = vmatpush2.msra.mxu0 0.0
        %2454 = vmatprep.subr.mxu0 0.0
        %2455 = vmatpush2.msra.mxu0 0.0
        %2456 = vmatprep.subr.mxu0 0.0
        %2457 = vmatpush2.msra.mxu0 0.0
        %2458 = vmatprep.mubr.f32.mxu0 0.0
        %2459 = vmatmul.mubr.f32.gmra.mxu0 %v2392
        %v2460 = vpop.f32.mrf.mxu0
        %v2461 = vadd.f32 %v2387, %v2460
        %v2462 = vpop.f32.mrf.mxu0
        %2463 = vdwg.mxu0
        %v2464 = vsel %vm996, %v2379, 0.0
        %v2465 = vsel %vm1090, %v2464, 0.0
        %2466 = vadd.xlane.f32.xlu0 %v2465
        %v2467 = vpop.xlane.xlu0 %2466
        %v2468 = vmul.f32 %v2467, %v1361
        %v2469 = vadd.f32 %v2461, %v2468
        %v2470 = vsel %vm997, %v2379, 0.0
        %v2471 = vsel %vm1090, %v2470, 0.0
        %2472 = vadd.xlane.f32.xlu0 %v2471
        %v2473 = vpop.xlane.xlu0 %2472
        %v2474 = vmul.f32 %v2473, %v1371
        %v2475 = vadd.f32 %v2469, %v2474
        %v2476 = vsel %vm998, %v2379, 0.0
        %v2477 = vsel %vm1090, %v2476, 0.0
        %2478 = vadd.xlane.f32.xlu0 %v2477
        %v2479 = vpop.xlane.xlu0 %2478
        %v2480 = vmul.f32 %v2479, %v1381
        %v2481 = vadd.f32 %v2475, %v2480
        %v2482 = vsel %vm999, %v2379, 0.0
        %v2483 = vsel %vm1090, %v2482, 0.0
        %2484 = vadd.xlane.f32.xlu0 %v2483
        %v2485 = vpop.xlane.xlu0 %2484
        %v2486 = vmul.f32 %v2485, %v1391
        %v2487 = vadd.f32 %v2481, %v2486
        %v2488 = vrcp.pop %v2382
        %v2489 = vmul.f32 %v2487, %v2488
        %v2490 = vld [vmem:[#allocation13 + $0x18] sm:$0xff]
        %v2492 = vsel %vm1090, %v2489, 0
        %2494 = vmatprep.subr.mxu0 0.0
        %2495 = vmatpush1.msra.mxu0 0.0
        %2496 = vmatprep.subr.mxu0 0.0
        %2497 = vmatpush1.msra.mxu0 0.0
        %2498 = vmatprep.subr.mxu0 0.0
        %2499 = vmatpush1.msra.mxu0 0.0
        %2500 = vmatprep.subr.mxu0 0.0
        %2501 = vmatpush1.msra.mxu0 0.0
        %2502 = vmatprep.subr.mxu0 0.0
        %2503 = vmatpush1.msra.mxu0 0.0
        %2504 = vmatprep.subr.mxu0 0.0
        %2505 = vmatpush1.msra.mxu0 0.0
        %2506 = vmatprep.subr.mxu0 0.0
        %2507 = vmatpush1.msra.mxu0 0.0
        %2508 = vmatprep.subr.mxu0 0.0
        %2509 = vmatpush1.msra.mxu0 0.0
        %2510 = vmatprep.subr.mxu0 0.0
        %2511 = vmatpush1.msra.mxu0 0.0
        %2512 = vmatprep.subr.mxu0 0.0
        %2513 = vmatpush1.msra.mxu0 0.0
        %2514 = vmatprep.subr.mxu0 0.0
        %2515 = vmatpush1.msra.mxu0 0.0
        %2516 = vmatprep.subr.mxu0 0.0
        %2517 = vmatpush1.msra.mxu0 0.0
        %2518 = vmatprep.subr.mxu0 0.0
        %2519 = vmatpush1.msra.mxu0 0.0
        %2520 = vmatprep.subr.mxu0 0.0
        %2521 = vmatpush1.msra.mxu0 0.0
        %2522 = vmatprep.subr.mxu0 0.0
        %2523 = vmatpush1.msra.mxu0 0.0
        %2524 = vmatprep.subr.mxu0 0.0
        %2525 = vmatpush1.msra.mxu0 %v2490
        %2526 = vmatprep.subr.mxu0 0.0
        %2527 = vmatpush2.msra.mxu0 0.0
        %2528 = vmatprep.subr.mxu0 0.0
        %2529 = vmatpush2.msra.mxu0 0.0
        %2530 = vmatprep.subr.mxu0 0.0
        %2531 = vmatpush2.msra.mxu0 0.0
        %2532 = vmatprep.subr.mxu0 0.0
        %2533 = vmatpush2.msra.mxu0 0.0
        %2534 = vmatprep.subr.mxu0 0.0
        %2535 = vmatpush2.msra.mxu0 0.0
        %2536 = vmatprep.subr.mxu0 0.0
        %2537 = vmatpush2.msra.mxu0 0.0
        %2538 = vmatprep.subr.mxu0 0.0
        %2539 = vmatpush2.msra.mxu0 0.0
        %2540 = vmatprep.subr.mxu0 0.0
        %2541 = vmatpush2.msra.mxu0 0.0
        %2542 = vmatprep.subr.mxu0 0.0
        %2543 = vmatpush2.msra.mxu0 0.0
        %2544 = vmatprep.subr.mxu0 0.0
        %2545 = vmatpush2.msra.mxu0 0.0
        %2546 = vmatprep.subr.mxu0 0.0
        %2547 = vmatpush2.msra.mxu0 0.0
        %2548 = vmatprep.subr.mxu0 0.0
        %2549 = vmatpush2.msra.mxu0 0.0
        %2550 = vmatprep.subr.mxu0 0.0
        %2551 = vmatpush2.msra.mxu0 0.0
        %2552 = vmatprep.subr.mxu0 0.0
        %2553 = vmatpush2.msra.mxu0 0.0
        %2554 = vmatprep.subr.mxu0 0.0
        %2555 = vmatpush2.msra.mxu0 0.0
        %2556 = vmatprep.subr.mxu0 0.0
        %2557 = vmatpush2.msra.mxu0 0.0
        %2558 = vmatprep.mubr.f32.mxu0 0.0
        %2559 = vmatmul.mubr.f32.gmra.mxu0 %v2492
        %v2560 = vpop.f32.mrf.mxu0
        %v2561 = vadd.f32 0.0, %v2560
        %v2562 = vpop.f32.mrf.mxu0
        %2563 = vdwg.mxu0
        %v2564 = vadd.f32 %v2199, %v2561
        %v2565 = vld [vmem:[%s12] sm:$0x1]
        %v2567 = vlaneseq
        %v2568 = vshrl.u32 %v2567, 7
        %v2569 = vsub.s32 0, %v2568
        %v2570 = vrot.slane %v2565, %v2569
        %v2572 = vadd.f32 %v2564, %v2570
        %v2573 = vadd.f32 %v2572, %v990
        %v2574 = vld [vmem:[%s13] sm:$0x1]
        %v2575 = vld [vmem:[%s14] sm:$0x1]
        %v2576 = vsel %vm1011, %v2573, 0.0
        %2577 = vadd.xlane.f32.xlu0 %v2576
        %v2578 = vpop.xlane.xlu0 %2577
        %v2579 = vrcp.pop 32.0
        %v2580 = vmul.f32 %v2578, %v2579
        %v2581 = vsub.f32 %v2573, %v2580
        %v2582 = vmul.f32 %v2581, %v2581
        %v2583 = vsel %vm1011, %v2582, 0.0
        %2584 = vadd.xlane.f32.xlu0 %v2583
        %v2585 = vpop.xlane.xlu0 %2584
        %v2586 = vmul.f32 %v2585, %v2579
        %v2587 = vadd.f32 %v2586, 1e-05
        %v2588 = vrsqrt.pop %v2587
        %v2589 = vmul.f32 %v2581, %v2588
        %v2591 = vlaneseq
        %v2592 = vshrl.u32 %v2591, 7
        %v2593 = vsub.s32 0, %v2592
        %v2594 = vrot.slane %v2574, %v2593
        %v2596 = vmul.f32 %v2589, %v2594
        %v2598 = vlaneseq
        %v2599 = vshrl.u32 %v2598, 7
        %v2600 = vsub.s32 0, %v2599
        %v2601 = vrot.slane %v2575, %v2600
        %v2603 = vadd.f32 %v2596, %v2601
        %v2604 = vld [vmem:[#allocation15] sm:$0xff]
        %v2605 = vld [vmem:[#allocation15 + $0x8] sm:$0xff]
        %v2606 = vld [vmem:[#allocation15 + $0x10] sm:$0xff]
        %v2607 = vld [vmem:[#allocation15 + $0x18] sm:$0xff]
        %v2608 = vld [vmem:[%s16] sm:$0x1]
        %v2610 = vlaneseq
        %v2611 = vshrl.u32 %v2610, 7
        %v2612 = vsub.s32 0, %v2611
        %v2613 = vrot.slane %v2608, %v2612
        %v2616 = vsel %vm1011, %v2603, 0
        %2618 = vmatprep.subr.mxu0 0.0
        %2619 = vmatpush1.msra.mxu0 0.0
        %2620 = vmatprep.subr.mxu0 0.0
        %2621 = vmatpush1.msra.mxu0 0.0
        %2622 = vmatprep.subr.mxu0 0.0
        %2623 = vmatpush1.msra.mxu0 0.0
        %2624 = vmatprep.subr.mxu0 0.0
        %2625 = vmatpush1.msra.mxu0 0.0
        %2626 = vmatprep.subr.mxu0 0.0
        %2627 = vmatpush1.msra.mxu0 0.0
        %2628 = vmatprep.subr.mxu0 0.0
        %2629 = vmatpush1.msra.mxu0 0.0
        %2630 = vmatprep.subr.mxu0 0.0
        %2631 = vmatpush1.msra.mxu0 0.0
        %2632 = vmatprep.subr.mxu0 0.0
        %2633 = vmatpush1.msra.mxu0 0.0
        %2634 = vmatprep.subr.mxu0 0.0
        %2635 = vmatpush1.msra.mxu0 0.0
        %2636 = vmatprep.subr.mxu0 0.0
        %2637 = vmatpush1.msra.mxu0 0.0
        %2638 = vmatprep.subr.mxu0 0.0
        %2639 = vmatpush1.msra.mxu0 0.0
        %2640 = vmatprep.subr.mxu0 0.0
        %2641 = vmatpush1.msra.mxu0 0.0
        %2642 = vmatprep.subr.mxu0 0.0
        %2643 = vmatpush1.msra.mxu0 %v2607
        %2644 = vmatprep.subr.mxu0 0.0
        %2645 = vmatpush1.msra.mxu0 %v2606
        %2646 = vmatprep.subr.mxu0 0.0
        %2647 = vmatpush1.msra.mxu0 %v2605
        %2648 = vmatprep.subr.mxu0 0.0
        %2649 = vmatpush1.msra.mxu0 %v2604
        %2650 = vmatprep.subr.mxu0 0.0
        %2651 = vmatpush2.msra.mxu0 0.0
        %2652 = vmatprep.subr.mxu0 0.0
        %2653 = vmatpush2.msra.mxu0 0.0
        %2654 = vmatprep.subr.mxu0 0.0
        %2655 = vmatpush2.msra.mxu0 0.0
        %2656 = vmatprep.subr.mxu0 0.0
        %2657 = vmatpush2.msra.mxu0 0.0
        %2658 = vmatprep.subr.mxu0 0.0
        %2659 = vmatpush2.msra.mxu0 0.0
        %2660 = vmatprep.subr.mxu0 0.0
        %2661 = vmatpush2.msra.mxu0 0.0
        %2662 = vmatprep.subr.mxu0 0.0
        %2663 = vmatpush2.msra.mxu0 0.0
        %2664 = vmatprep.subr.mxu0 0.0
        %2665 = vmatpush2.msra.mxu0 0.0
        %2666 = vmatprep.subr.mxu0 0.0
        %2667 = vmatpush2.msra.mxu0 0.0
        %2668 = vmatprep.subr.mxu0 0.0
        %2669 = vmatpush2.msra.mxu0 0.0
        %2670 = vmatprep.subr.mxu0 0.0
        %2671 = vmatpush2.msra.mxu0 0.0
        %2672 = vmatprep.subr.mxu0 0.0
        %2673 = vmatpush2.msra.mxu0 0.0
        %2674 = vmatprep.subr.mxu0 0.0
        %2675 = vmatpush2.msra.mxu0 0.0
        %2676 = vmatprep.subr.mxu0 0.0
        %2677 = vmatpush2.msra.mxu0 0.0
        %2678 = vmatprep.subr.mxu0 0.0
        %2679 = vmatpush2.msra.mxu0 0.0
        %2680 = vmatprep.subr.mxu0 0.0
        %2681 = vmatpush2.msra.mxu0 0.0
        %2682 = vmatprep.mubr.f32.mxu0 0.0
        %2683 = vmatmul.mubr.f32.gmra.mxu0 %v2616
        %v2684 = vpop.f32.mrf.mxu0
        %v2685 = vadd.f32 %v2613, %v2684
        %v2686 = vpop.f32.mrf.mxu0
        %2687 = vdwg.mxu0
        %v2688 = vmax.f32 %v2685, 0.0
        %v2689 = vld [vmem:[%s17] sm:$0xff]
        %v2690 = vld [vmem:[%s17 + $0x8] sm:$0xff]
        %v2691 = vld [vmem:[%s17 + $0x10] sm:$0xff]
        %v2692 = vld [vmem:[%s17 + $0x18] sm:$0xff]
        %v2693 = vld [vmem:[%s17 + $0x20] sm:$0xff]
        %v2694 = vld [vmem:[%s17 + $0x28] sm:$0xff]
        %v2695 = vld [vmem:[%s17 + $0x30] sm:$0xff]
        %v2696 = vld [vmem:[%s17 + $0x38] sm:$0xff]
        %v2697 = vld [vmem:[%s18] sm:$0x1]
        %v2699 = vlaneseq
        %v2700 = vshrl.u32 %v2699, 7
        %v2701 = vsub.s32 0, %v2700
        %v2702 = vrot.slane %v2697, %v2701
        %vm2704 = vcmask 523264
        %v2706 = vsel %vm2704, %v2688, 0
        %2708 = vmatprep.subr.mxu0 0.0
        %2709 = vmatpush1.msra.mxu0 0.0
        %2710 = vmatprep.subr.mxu0 0.0
        %2711 = vmatpush1.msra.mxu0 0.0
        %2712 = vmatprep.subr.mxu0 0.0
        %2713 = vmatpush1.msra.mxu0 0.0
        %2714 = vmatprep.subr.mxu0 0.0
        %2715 = vmatpush1.msra.mxu0 0.0
        %2716 = vmatprep.subr.mxu0 0.0
        %2717 = vmatpush1.msra.mxu0 0.0
        %2718 = vmatprep.subr.mxu0 0.0
        %2719 = vmatpush1.msra.mxu0 0.0
        %2720 = vmatprep.subr.mxu0 0.0
        %2721 = vmatpush1.msra.mxu0 0.0
        %2722 = vmatprep.subr.mxu0 0.0
        %2723 = vmatpush1.msra.mxu0 0.0
        %2724 = vmatprep.subr.mxu0 0.0
        %2725 = vmatpush1.msra.mxu0 %v2696
        %2726 = vmatprep.subr.mxu0 0.0
        %2727 = vmatpush1.msra.mxu0 %v2695
        %2728 = vmatprep.subr.mxu0 0.0
        %2729 = vmatpush1.msra.mxu0 %v2694
        %2730 = vmatprep.subr.mxu0 0.0
        %2731 = vmatpush1.msra.mxu0 %v2693
        %2732 = vmatprep.subr.mxu0 0.0
        %2733 = vmatpush1.msra.mxu0 %v2692
        %2734 = vmatprep.subr.mxu0 0.0
        %2735 = vmatpush1.msra.mxu0 %v2691
        %2736 = vmatprep.subr.mxu0 0.0
        %2737 = vmatpush1.msra.mxu0 %v2690
        %2738 = vmatprep.subr.mxu0 0.0
        %2739 = vmatpush1.msra.mxu0 %v2689
        %2740 = vmatprep.subr.mxu0 0.0
        %2741 = vmatpush2.msra.mxu0 0.0
        %2742 = vmatprep.subr.mxu0 0.0
        %2743 = vmatpush2.msra.mxu0 0.0
        %2744 = vmatprep.subr.mxu0 0.0
        %2745 = vmatpush2.msra.mxu0 0.0
        %2746 = vmatprep.subr.mxu0 0.0
        %2747 = vmatpush2.msra.mxu0 0.0
        %2748 = vmatprep.subr.mxu0 0.0
        %2749 = vmatpush2.msra.mxu0 0.0
        %2750 = vmatprep.subr.mxu0 0.0
        %2751 = vmatpush2.msra.mxu0 0.0
        %2752 = vmatprep.subr.mxu0 0.0
        %2753 = vmatpush2.msra.mxu0 0.0
        %2754 = vmatprep.subr.mxu0 0.0
        %2755 = vmatpush2.msra.mxu0 0.0
        %2756 = vmatprep.subr.mxu0 0.0
        %2757 = vmatpush2.msra.mxu0 0.0
        %2758 = vmatprep.subr.mxu0 0.0
        %2759 = vmatpush2.msra.mxu0 0.0
        %2760 = vmatprep.subr.mxu0 0.0
        %2761 = vmatpush2.msra.mxu0 0.0
        %2762 = vmatprep.subr.mxu0 0.0
        %2763 = vmatpush2.msra.mxu0 0.0
        %2764 = vmatprep.subr.mxu0 0.0
        %2765 = vmatpush2.msra.mxu0 0.0
        %2766 = vmatprep.subr.mxu0 0.0
        %2767 = vmatpush2.msra.mxu0 0.0
        %2768 = vmatprep.subr.mxu0 0.0
        %2769 = vmatpush2.msra.mxu0 0.0
        %2770 = vmatprep.subr.mxu0 0.0
        %2771 = vmatpush2.msra.mxu0 0.0
        %2772 = vmatprep.mubr.f32.mxu0 0.0
        %2773 = vmatmul.mubr.f32.gmra.mxu0 %v2706
        %v2774 = vpop.f32.mrf.mxu0
        %v2775 = vadd.f32 %v2702, %v2774
        %v2776 = vpop.f32.mrf.mxu0
        %2777 = vdwg.mxu0
        %v2778 = vadd.f32 %v2775, %v2603
        %v2779 = vld [vmem:[%s19] sm:$0x1]
        %v2780 = vld [vmem:[%s20] sm:$0x1]
        %v2781 = vsel %vm1011, %v2778, 0.0
        %2782 = vadd.xlane.f32.xlu0 %v2781
        %v2783 = vpop.xlane.xlu0 %2782
        %v2784 = vmul.f32 %v2783, %v2579
        %v2785 = vsub.f32 %v2778, %v2784
        %v2786 = vmul.f32 %v2785, %v2785
        %v2787 = vsel %vm1011, %v2786, 0.0
        %2788 = vadd.xlane.f32.xlu0 %v2787
        %v2789 = vpop.xlane.xlu0 %2788
        %v2790 = vmul.f32 %v2789, %v2579
        %v2791 = vadd.f32 %v2790, 1e-05
        %v2792 = vrsqrt.pop %v2791
        %v2793 = vmul.f32 %v2785, %v2792
        %v2795 = vlaneseq
        %v2796 = vshrl.u32 %v2795, 7
        %v2797 = vsub.s32 0, %v2796
        %v2798 = vrot.slane %v2779, %v2797
        %v2800 = vmul.f32 %v2793, %v2798
        %v2802 = vlaneseq
        %v2803 = vshrl.u32 %v2802, 7
        %v2804 = vsub.s32 0, %v2803
        %v2805 = vrot.slane %v2780, %v2804
        %v2807 = vadd.f32 %v2800, %v2805
        %2808 = vst.msk [vmem:[%s816] sm:$0xff] %vm1011, %v2807
        %s2809 = sand.u32 %s525, 1
        %s2810 = scalar_lea.sflag [#allocation6], %s2809
        %s2811 = sand.u32 %s525, 1
        %s2812 = smul.addr %s2811, 8
        %s2813 = scalar_lea.vmem [#allocation16], %s2812
        // Predicated region
        $region137: #{tpu_custom_call.1} parent=103 // pred_check
          %p2814 = pneg %p535
        $region138: #{tpu_custom_call.1} parent=103 // pred_check_branch
          %2816 = sbr.rel (%p2814) target = $region140
        $region139: #{tpu_custom_call.1} parent=103 // pred_region
          %s2818 = ssub.s32 128, 128
          %2819 = vsyncadd %s2810, %s2818
          %s2820 = sadd.s32 %s48, %s47
          %s2821 = smul.addr %s2820, 128
          %s2822 = scalar_lea.hbm %s21, %s2821
          %s2824 = sshll.u32 %s2813, 4
          %s2825 = int_to_ptr.vmem [resolvable:$true] %s2824
          %2827 = dma.vmem_to_hbm [thread:$0]  %s2825, 128, %s2822, %s2810
        $region140: #{tpu_custom_call.1} parent=103 // pred_fallthru
          _
      $region104: #{tpu_custom_call.1} parent=5 // pred_fallthru
        _
      %p2828 = scmp.le.s32.totalorder 2, %s38
      // Predicated region
      $region141: #{tpu_custom_call.1} parent=5 // pred_check
        %p2829 = pneg %p2828
      $region142: #{tpu_custom_call.1} parent=5 // pred_check_branch
        %2831 = sbr.rel (%p2829) target = $region144
      $region143: #{tpu_custom_call.1} parent=5 // pred_region
        %s2832 = ssub.s32 %s38, 2
        // Predicated region
        $region145: #{tpu_custom_call.1} parent=143 // pred_check
          %p2833 = pneg %p541
        $region146: #{tpu_custom_call.1} parent=143 // pred_check_branch
          %2835 = sbr.rel (%p2833) target = $region148
        $region147: #{tpu_custom_call.1} parent=143 // pred_region
          %s2836 = sand.u32 %s526, 1
          %s2837 = scalar_lea.sflag [#allocation6], %s2836
          %s2838 = sand.u32 %s526, 1
          %s2839 = smul.addr %s2838, 8
          %s2840 = scalar_lea.vmem [#allocation16], %s2839
          %2841 = dma.done %s2837, 128
        $region148: #{tpu_custom_call.1} parent=143 // pred_fallthru
          _
      $region144: #{tpu_custom_call.1} parent=5 // pred_fallthru
        _
    $region6: #{tpu_custom_call.1} parent=1 // loop_footer
      %s42 = sadd.s32 1, %s38
    $region7: #{tpu_custom_call.1} parent=1 // loop_footer_branch
      %37 = sbr.rel target = $region3
    $region8: #{tpu_custom_call.1} parent=1 // loop_exit
      _
    %2842 = vsyncpa [#allocation5], 1
    %s2843 = scalar_lea.sflag [#allocation5], 1
    %2844 = vsyncpa %s2843, 1
    %2845 = vsyncpa [#allocation8], 1
    %s2846 = scalar_lea.sflag [#allocation8], 1
    %2847 = vsyncpa %s2846, 1
    %2848 = vsyncpa [#allocation11], 1
    %2849 = vsyncpa [#allocation14], 1
    %2850 = vsyncpa [#allocation6], 1
    %s2851 = scalar_lea.sflag [#allocation6], 1
    %2852 = vsyncpa %s2851, 1

</llo_original>
